<compile_context>
chip_gen: v7x
topology: tpu7x:2x2x1
jax: 0.10.0
libtpu: 0.0.40
codegen_flags: <defaults>
</compile_context>

<pallas_src>
import functools

import jax
import jax.numpy as jnp
from jax.experimental import pallas as pl
from jax.experimental.pallas import tpu as pltpu

BN_EPS = 1e-5
LANE = 128
MATMUL_DTYPE = jnp.bfloat16          # MXU operand dtype (f32 accumulation)
VMEM_LIMIT_BYTES = 32 * 1024 * 1024  # explicit scoped-VMEM budget


# ---------------------------------------------------------------------------
# Kernels
# ---------------------------------------------------------------------------
def _conv3x3_stats_kernel(x0_ref, x1_ref, x2_ref, w_ref, y_ref, stats_ref,
                          *, tile_h, width):
    """3x3 'same' conv tile + per-tile BN partial statistics.

    x{0,1,2}_ref: (tile_h, width+2, Cin_pad)  -- row-shifted padded activations
    w_ref:        (9, Cin_pad, Cout_pad)      -- tap-major weight matrix
    y_ref:        (tile_h, width, Cout_pad)   -- raw conv output (f32)
    stats_ref:    (2, Cout_pad)               -- [sum(y), sum(y*y)] over tile rows
    """
    cout = y_ref.shape[-1]
    rows = (x0_ref[...], x1_ref[...], x2_ref[...])

    acc = jnp.zeros((tile_h * width, cout), jnp.float32)
    for ky in range(3):
        r = rows[ky]
        for kx in range(3):
            a = r[:, kx:kx + width, :].reshape(tile_h * width, r.shape[-1])
            acc = acc + jnp.dot(a, w_ref[ky * 3 + kx],
                                preferred_element_type=jnp.float32)

    y_ref[...] = acc.reshape(tile_h, width, cout)
    stats_ref[0:1, :] = jnp.sum(acc, axis=0, keepdims=True)
    stats_ref[1:2, :] = jnp.sum(acc * acc, axis=0, keepdims=True)


def _norm_relu_pool_kernel(y_ref, scale_ref, shift_ref, h_ref, p_ref,
                           *, tile_h, width):
    """Fused BN-affine + ReLU + 2x2/stride-2 max-pool epilogue.

    y_ref:  (tile_h, width, Cpad) raw conv2 output (f32)
    scale/shift: (1, Cpad) folded BN2 affine (gamma*inv_std, beta-mean*scale)
    h_ref:  (tile_h, width, Cpad)        normalized+ReLU activation
    p_ref:  (tile_h//2, width//2, Cpad)  2x2 max-pooled activation
    """
    scale = scale_ref[...]
    shift = shift_ref[...]

    h = jnp.maximum(y_ref[...] * scale + shift, 0.0)
    h_ref[...] = h

    w2 = width // 2
    # Pair the W columns with strided loads (even / odd columns).
    even = jnp.maximum(y_ref[:, pl.ds(0, w2, stride=2), :] * scale + shift, 0.0)
    odd = jnp.maximum(y_ref[:, pl.ds(1, w2, stride=2), :] * scale + shift, 0.0)
    hw = jnp.maximum(even, odd)                          # (tile_h, W//2, C)
    # Pair the rows via a leading-dim-only reshape (lane/sublane dims untouched).
    hw = hw.reshape(tile_h // 2, 2, w2, hw.shape[-1])
    p_ref[...] = jnp.max(hw, axis=1)


# ---------------------------------------------------------------------------
# pallas_call wrappers
# ---------------------------------------------------------------------------
def _round_up(x, m):
    return ((x + m - 1) // m) * m


def _pad_last(a, target):
    pad = target - a.shape[-1]
    if pad == 0:
        return a
    return jnp.pad(a, [(0, 0)] * (a.ndim - 1) + [(0, pad)])


def _prep_weight(w_oihw, cin_p, cout_p, dtype):
    """PyTorch OIHW (Cout,Cin,3,3) -> (9, Cin_pad, Cout_pad), tap order ky*3+kx."""
    w = jnp.transpose(w_oihw, (2, 3, 1, 0))              # (3, 3, Cin, Cout)
    w = jnp.pad(w, ((0, 0), (0, 0),
                    (0, cin_p - w.shape[2]), (0, cout_p - w.shape[3])))
    return w.reshape(9, cin_p, cout_p).astype(dtype)


def _shifted_rows(x_nhwc):
    """Zero-pad spatially by 1 and return the three 1-row-shifted halo views."""
    N, H, W, C = x_nhwc.shape
    xp = jnp.pad(x_nhwc, ((0, 0), (1, 1), (1, 1), (0, 0)))
    return [xp[:, k:k + H] for k in range(3)]            # each (N, H, W+2, C)


def _conv3x3_stats(x_shift, w_taps, cout_p, tile_h):
    x0, x1, x2 = x_shift
    N, H, wp2, cin_p = x0.shape
    W = wp2 - 2
    gh = H // tile_h

    x_spec = pl.BlockSpec((None, tile_h, wp2, cin_p), lambda n, i: (n, i, 0, 0))
    w_spec = pl.BlockSpec((9, cin_p, cout_p), lambda n, i: (0, 0, 0))
    y_spec = pl.BlockSpec((None, tile_h, W, cout_p), lambda n, i: (n, i, 0, 0))
    s_spec = pl.BlockSpec((None, None, 2, cout_p), lambda n, i: (n, i, 0, 0))

    kernel = functools.partial(_conv3x3_stats_kernel, tile_h=tile_h, width=W)
    y, stats = pl.pallas_call(
        kernel,
        grid=(N, gh),
        in_specs=[x_spec, x_spec, x_spec, w_spec],
        out_specs=[y_spec, s_spec],
        out_shape=[jax.ShapeDtypeStruct((N, H, W, cout_p), jnp.float32),
                   jax.ShapeDtypeStruct((N, gh, 2, cout_p), jnp.float32)],
        compiler_params=pltpu.CompilerParams(
            dimension_semantics=("parallel", "parallel"),
            vmem_limit_bytes=VMEM_LIMIT_BYTES),
    )(x0, x1, x2, w_taps)
    return y, stats


def _norm_relu_pool(y, scale, shift, tile_h):
    N, H, W, cp = y.shape
    gh = H // tile_h

    y_spec = pl.BlockSpec((None, tile_h, W, cp), lambda n, i: (n, i, 0, 0))
    v_spec = pl.BlockSpec((1, cp), lambda n, i: (0, 0))
    h_spec = pl.BlockSpec((None, tile_h, W, cp), lambda n, i: (n, i, 0, 0))
    p_spec = pl.BlockSpec((None, tile_h // 2, W // 2, cp),
                          lambda n, i: (n, i, 0, 0))

    kernel = functools.partial(_norm_relu_pool_kernel, tile_h=tile_h, width=W)
    h, p = pl.pallas_call(
        kernel,
        grid=(N, gh),
        in_specs=[y_spec, v_spec, v_spec],
        out_specs=[h_spec, p_spec],
        out_shape=[jax.ShapeDtypeStruct((N, H, W, cp), jnp.float32),
                   jax.ShapeDtypeStruct((N, H // 2, W // 2, cp), jnp.float32)],
        compiler_params=pltpu.CompilerParams(
            dimension_semantics=("parallel", "parallel"),
            vmem_limit_bytes=VMEM_LIMIT_BYTES),
    )(y, scale, shift)
    return h, p


def _fold_bn(stats, gamma_p, beta_p, m):
    """Partial (sum, sumsq) tiles -> folded (scale, shift) of shape (1, Cpad)."""
    s = jnp.sum(stats, axis=(0, 1))                      # (2, Cpad)
    mean = s[0] / m
    var = jnp.maximum(s[1] / m - mean * mean, 0.0)       # biased var, 1 sweep
    inv_std = jax.lax.rsqrt(var + BN_EPS)
    scale = gamma_p * inv_std
    shift = beta_p - mean * scale
    return scale.reshape(1, -1), shift.reshape(1, -1)


def _pick_tile_h(H, W):
    """Even divisor of H giving roughly 256-512 conv output rows per tile."""
    target = max(2, 512 // max(W, 1))
    best = None
    for th in range(2, H + 1, 2):
        if H % th == 0 and (best is None or
                            abs(th - target) < abs(best - target)):
            best = th
    if best is None:
        raise ValueError("H must be even (2x2 max-pool)")
    return best


# ---------------------------------------------------------------------------
# Forward
# ---------------------------------------------------------------------------
def contracting_block_forward(x_nchw, params, *, tile_h=None):
    """Returns (x, p) in NCHW, matching ContractingBlock.forward (task_id=0)."""
    N, Cin, H, W = x_nchw.shape
    Cout = params["w1"].shape[0]
    cin_p = _round_up(Cin, LANE)
    cout_p = _round_up(Cout, LANE)
    if tile_h is None:
        tile_h = _pick_tile_h(H, W)
    assert H % tile_h == 0 and tile_h % 2 == 0 and W % 2 == 0
    # TODO(synk): odd H/W (PyTorch floor-pooling) not supported by this tiling.

    m = N * H * W

    # Masked weights (task_id=0 masks are all ones; applied for fidelity).
    w1 = _prep_weight(params["w1"] * params["mask1"], cin_p, cout_p, MATMUL_DTYPE)
    w2 = _prep_weight(params["w2"] * params["mask2"], cout_p, cout_p, MATMUL_DTYPE)
    g1 = _pad_last(params["g1"].astype(jnp.float32), cout_p)
    b1 = _pad_last(params["b1"].astype(jnp.float32), cout_p)
    g2 = _pad_last(params["g2"].astype(jnp.float32), cout_p)
    b2 = _pad_last(params["b2"].astype(jnp.float32), cout_p)

    # NCHW -> NHWC, lane-pad channels, bf16 for the MXU operand stream.
    x = jnp.transpose(x_nchw, (0, 2, 3, 1)).astype(jnp.float32)
    x = _pad_last(x, cin_p).astype(MATMUL_DTYPE)

    # conv1 + BN1 partial statistics (fused Pallas kernel).
    y1, st1 = _conv3x3_stats(_shifted_rows(x), w1, cout_p, tile_h)
    scale1, shift1 = _fold_bn(st1, g1, b1, m)

    # BN1 normalize + ReLU; XLA fuses this into the halo-view copies feeding
    # conv2 (done here so conv2's zero 'same' padding pads the activated h1).
    h1 = jnp.maximum(y1 * scale1.reshape(1, 1, 1, -1)
                     + shift1.reshape(1, 1, 1, -1), 0.0).astype(MATMUL_DTYPE)

    # conv2 + BN2 partial statistics.
    y2, st2 = _conv3x3_stats(_shifted_rows(h1), w2, cout_p, tile_h)
    scale2, shift2 = _fold_bn(st2, g2, b2, m)

    # BN2 normalize + ReLU + 2x2/2 max-pool (fused epilogue kernel).
    h2, p = _norm_relu_pool(y2, scale2, shift2, tile_h)

    # Strip channel padding, back to NCHW.
    x_out = jnp.transpose(h2[..., :Cout], (0, 3, 1, 2))
    p_out = jnp.transpose(p[..., :Cout], (0, 3, 1, 2))
    return x_out, p_out


# ---------------------------------------------------------------------------
# Pure-JAX reference (arithmetic-matched: bf16 conv operands, f32 accumulation)
# ---------------------------------------------------------------------------
def _ref_forward(x, w1, w2):
    def conv(xx, w):
        return jax.lax.conv_general_dilated(
            xx.astype(MATMUL_DTYPE), w.astype(MATMUL_DTYPE), (1, 1), "SAME",
            dimension_numbers=("NCHW", "OIHW", "NCHW"),
            preferred_element_type=jnp.float32)

    def bn(xx):  # training-mode batch stats, biased var, gamma=1 beta=0
        mean = xx.mean(axis=(0, 2, 3), keepdims=True)
        var = ((xx - mean) ** 2).mean(axis=(0, 2, 3), keepdims=True)
        return (xx - mean) * jax.lax.rsqrt(var + BN_EPS)

    h1 = jax.nn.relu(bn(conv(x, w1)))
    h2 = jax.nn.relu(bn(conv(h1, w2)))
    p = jax.lax.reduce_window(h2, -jnp.inf, jax.lax.max,
                              (1, 1, 2, 2), (1, 1, 2, 2), "VALID")
    return h2, p


# ---------------------------------------------------------------------------
if __name__ == "__main__":
    N, Cin, Cout, H, W = 2, 4, 8, 16, 16

    key = jax.random.PRNGKey(0)
    kx, k1, k2 = jax.random.split(key, 3)

    x = jax.random.normal(kx, (N, Cin, H, W), dtype=jnp.float32)

    params = {
        "w1": 0.1 * jax.random.normal(k1, (Cout, Cin, 3, 3), dtype=jnp.float32),
        "w2": 0.1 * jax.random.normal(k2, (Cout, Cout, 3, 3), dtype=jnp.float32),
        # tasks_masks[0] — all ones, as constructed in __init__ / add_task(0)
        "mask1": jnp.ones((Cout, Cin, 3, 3), dtype=jnp.float32),
        "mask2": jnp.ones((Cout, Cout, 3, 3), dtype=jnp.float32),
        # AffineBN defaults: weight=1, bias=0
        "g1": jnp.ones((Cout,), dtype=jnp.float32),
        "b1": jnp.zeros((Cout,), dtype=jnp.float32),
        "g2": jnp.ones((Cout,), dtype=jnp.float32),
        "b2": jnp.zeros((Cout,), dtype=jnp.float32),
    }

    fwd = jax.jit(functools.partial(contracting_block_forward, tile_h=8))
    x_out, p_out = fwd(x, params)
    jax.block_until_ready((x_out, p_out))

    # Correctness check against an arithmetic-matched pure-JAX reference.
    x_ref, p_ref = _ref_forward(x, params["w1"] * params["mask1"],
                                params["w2"] * params["mask2"])
    assert x_out.shape == (N, Cout, H, W)
    assert p_out.shape == (N, Cout, H // 2, W // 2)
    assert jnp.allclose(x_out, x_ref, atol=1e-2, rtol=1e-2)
    assert jnp.allclose(p_out, p_ref, atol=1e-2, rtol=1e-2)

    print("KERNEL_OK")
</pallas_src>

<mosaic_0001>
module attributes {stable_mosaic.version = 11 : i64} {
  func.func @_conv3x3_stats_kernel(%arg0: i32, %arg1: i32, %arg2: memref<1x8x18x128xbf16, #tpu.memory_space<vmem>>, %arg3: memref<1x8x18x128xbf16, #tpu.memory_space<vmem>>, %arg4: memref<1x8x18x128xbf16, #tpu.memory_space<vmem>>, %arg5: memref<9x128x128xbf16, #tpu.memory_space<vmem>>, %arg6: memref<1x8x16x128xf32, #tpu.memory_space<vmem>>, %arg7: memref<1x1x2x128xf32, #tpu.memory_space<vmem>>) attributes {dimension_semantics = [#tpu.dimension_semantics<parallel>, #tpu.dimension_semantics<parallel>], iteration_bounds = array<i64: 2, 2>, scalar_prefetch = 0 : i64, scratch_operands = 0 : i64, tpu.core_type = #tpu.core_type<tc>, window_params = [{transform_indices = @transform_0, window_bounds = array<i64: 1, 8, 18, 128>}, {transform_indices = @transform_1, window_bounds = array<i64: 1, 8, 18, 128>}, {transform_indices = @transform_2, window_bounds = array<i64: 1, 8, 18, 128>}, {pipeline_mode = #tpu.pipeline_mode<synchronous>, transform_indices = @transform_3, window_bounds = array<i64: 9, 128, 128>}, {transform_indices = @transform_4, window_bounds = array<i64: 1, 8, 16, 128>}, {transform_indices = @transform_5, window_bounds = array<i64: 1, 1, 2, 128>}]} {
    %c0 = arith.constant 0 : index
    %c0_0 = arith.constant 0 : index
    %c0_1 = arith.constant 0 : index
    %c0_2 = arith.constant 0 : index
    %0 = vector.load %arg2[%c0, %c0_0, %c0_1, %c0_2] : memref<1x8x18x128xbf16, #tpu.memory_space<vmem>>, vector<1x8x18x128xbf16>
    %1 = vector.shape_cast %0 : vector<1x8x18x128xbf16> to vector<8x18x128xbf16>
    %c0_3 = arith.constant 0 : index
    %c0_4 = arith.constant 0 : index
    %c0_5 = arith.constant 0 : index
    %c0_6 = arith.constant 0 : index
    %2 = vector.load %arg3[%c0_3, %c0_4, %c0_5, %c0_6] : memref<1x8x18x128xbf16, #tpu.memory_space<vmem>>, vector<1x8x18x128xbf16>
    %3 = vector.shape_cast %2 : vector<1x8x18x128xbf16> to vector<8x18x128xbf16>
    %c0_7 = arith.constant 0 : index
    %c0_8 = arith.constant 0 : index
    %c0_9 = arith.constant 0 : index
    %c0_10 = arith.constant 0 : index
    %4 = vector.load %arg4[%c0_7, %c0_8, %c0_9, %c0_10] : memref<1x8x18x128xbf16, #tpu.memory_space<vmem>>, vector<1x8x18x128xbf16>
    %5 = vector.shape_cast %4 : vector<1x8x18x128xbf16> to vector<8x18x128xbf16>
    %cst = arith.constant 0.000000e+00 : f32
    %6 = vector.broadcast %cst : f32 to vector<128x128xf32>
    %7 = vector.extract_strided_slice %1 {offsets = [0, 0, 0], sizes = [8, 16, 128], strides = [1, 1, 1]} : vector<8x18x128xbf16> to vector<8x16x128xbf16>
    %8 = vector.shape_cast %7 : vector<8x16x128xbf16> to vector<128x128xbf16>
    %c0_11 = arith.constant 0 : index
    %c0_12 = arith.constant 0 : index
    %c0_13 = arith.constant 0 : index
    %9 = vector.load %arg5[%c0_11, %c0_12, %c0_13] : memref<9x128x128xbf16, #tpu.memory_space<vmem>>, vector<1x128x128xbf16>
    %10 = vector.shape_cast %9 : vector<1x128x128xbf16> to vector<128x128xbf16>
    %cst_14 = arith.constant dense<0.000000e+00> : vector<128x128xf32>
    %11 = tpu.matmul %8, %10, %cst_14 {dimension_numbers = #tpu.dot_dimension_numbers<[1], [0], [0], [1], [0, 0, 1, 1], [], []>} : vector<128x128xbf16>, vector<128x128xbf16>, vector<128x128xf32> -> vector<128x128xf32>
    %12 = arith.addf %6, %11 : vector<128x128xf32>
    %13 = vector.extract_strided_slice %1 {offsets = [0, 1, 0], sizes = [8, 16, 128], strides = [1, 1, 1]} : vector<8x18x128xbf16> to vector<8x16x128xbf16>
    %14 = vector.shape_cast %13 : vector<8x16x128xbf16> to vector<128x128xbf16>
    %c1 = arith.constant 1 : index
    %c0_15 = arith.constant 0 : index
    %c0_16 = arith.constant 0 : index
    %15 = vector.load %arg5[%c1, %c0_15, %c0_16] : memref<9x128x128xbf16, #tpu.memory_space<vmem>>, vector<1x128x128xbf16>
    %16 = vector.shape_cast %15 : vector<1x128x128xbf16> to vector<128x128xbf16>
    %cst_17 = arith.constant dense<0.000000e+00> : vector<128x128xf32>
    %17 = tpu.matmul %14, %16, %cst_17 {dimension_numbers = #tpu.dot_dimension_numbers<[1], [0], [0], [1], [0, 0, 1, 1], [], []>} : vector<128x128xbf16>, vector<128x128xbf16>, vector<128x128xf32> -> vector<128x128xf32>
    %18 = arith.addf %12, %17 : vector<128x128xf32>
    %19 = vector.extract_strided_slice %1 {offsets = [0, 2, 0], sizes = [8, 16, 128], strides = [1, 1, 1]} : vector<8x18x128xbf16> to vector<8x16x128xbf16>
    %20 = vector.shape_cast %19 : vector<8x16x128xbf16> to vector<128x128xbf16>
    %c2 = arith.constant 2 : index
    %c0_18 = arith.constant 0 : index
    %c0_19 = arith.constant 0 : index
    %21 = vector.load %arg5[%c2, %c0_18, %c0_19] : memref<9x128x128xbf16, #tpu.memory_space<vmem>>, vector<1x128x128xbf16>
    %22 = vector.shape_cast %21 : vector<1x128x128xbf16> to vector<128x128xbf16>
    %cst_20 = arith.constant dense<0.000000e+00> : vector<128x128xf32>
    %23 = tpu.matmul %20, %22, %cst_20 {dimension_numbers = #tpu.dot_dimension_numbers<[1], [0], [0], [1], [0, 0, 1, 1], [], []>} : vector<128x128xbf16>, vector<128x128xbf16>, vector<128x128xf32> -> vector<128x128xf32>
    %24 = arith.addf %18, %23 : vector<128x128xf32>
    %25 = vector.extract_strided_slice %3 {offsets = [0, 0, 0], sizes = [8, 16, 128], strides = [1, 1, 1]} : vector<8x18x128xbf16> to vector<8x16x128xbf16>
    %26 = vector.shape_cast %25 : vector<8x16x128xbf16> to vector<128x128xbf16>
    %c3 = arith.constant 3 : index
    %c0_21 = arith.constant 0 : index
    %c0_22 = arith.constant 0 : index
    %27 = vector.load %arg5[%c3, %c0_21, %c0_22] : memref<9x128x128xbf16, #tpu.memory_space<vmem>>, vector<1x128x128xbf16>
    %28 = vector.shape_cast %27 : vector<1x128x128xbf16> to vector<128x128xbf16>
    %cst_23 = arith.constant dense<0.000000e+00> : vector<128x128xf32>
    %29 = tpu.matmul %26, %28, %cst_23 {dimension_numbers = #tpu.dot_dimension_numbers<[1], [0], [0], [1], [0, 0, 1, 1], [], []>} : vector<128x128xbf16>, vector<128x128xbf16>, vector<128x128xf32> -> vector<128x128xf32>
    %30 = arith.addf %24, %29 : vector<128x128xf32>
    %31 = vector.extract_strided_slice %3 {offsets = [0, 1, 0], sizes = [8, 16, 128], strides = [1, 1, 1]} : vector<8x18x128xbf16> to vector<8x16x128xbf16>
    %32 = vector.shape_cast %31 : vector<8x16x128xbf16> to vector<128x128xbf16>
    %c4 = arith.constant 4 : index
    %c0_24 = arith.constant 0 : index
    %c0_25 = arith.constant 0 : index
    %33 = vector.load %arg5[%c4, %c0_24, %c0_25] : memref<9x128x128xbf16, #tpu.memory_space<vmem>>, vector<1x128x128xbf16>
    %34 = vector.shape_cast %33 : vector<1x128x128xbf16> to vector<128x128xbf16>
    %cst_26 = arith.constant dense<0.000000e+00> : vector<128x128xf32>
    %35 = tpu.matmul %32, %34, %cst_26 {dimension_numbers = #tpu.dot_dimension_numbers<[1], [0], [0], [1], [0, 0, 1, 1], [], []>} : vector<128x128xbf16>, vector<128x128xbf16>, vector<128x128xf32> -> vector<128x128xf32>
    %36 = arith.addf %30, %35 : vector<128x128xf32>
    %37 = vector.extract_strided_slice %3 {offsets = [0, 2, 0], sizes = [8, 16, 128], strides = [1, 1, 1]} : vector<8x18x128xbf16> to vector<8x16x128xbf16>
    %38 = vector.shape_cast %37 : vector<8x16x128xbf16> to vector<128x128xbf16>
    %c5 = arith.constant 5 : index
    %c0_27 = arith.constant 0 : index
    %c0_28 = arith.constant 0 : index
    %39 = vector.load %arg5[%c5, %c0_27, %c0_28] : memref<9x128x128xbf16, #tpu.memory_space<vmem>>, vector<1x128x128xbf16>
    %40 = vector.shape_cast %39 : vector<1x128x128xbf16> to vector<128x128xbf16>
    %cst_29 = arith.constant dense<0.000000e+00> : vector<128x128xf32>
    %41 = tpu.matmul %38, %40, %cst_29 {dimension_numbers = #tpu.dot_dimension_numbers<[1], [0], [0], [1], [0, 0, 1, 1], [], []>} : vector<128x128xbf16>, vector<128x128xbf16>, vector<128x128xf32> -> vector<128x128xf32>
    %42 = arith.addf %36, %41 : vector<128x128xf32>
    %43 = vector.extract_strided_slice %5 {offsets = [0, 0, 0], sizes = [8, 16, 128], strides = [1, 1, 1]} : vector<8x18x128xbf16> to vector<8x16x128xbf16>
    %44 = vector.shape_cast %43 : vector<8x16x128xbf16> to vector<128x128xbf16>
    %c6 = arith.constant 6 : index
    %c0_30 = arith.constant 0 : index
    %c0_31 = arith.constant 0 : index
    %45 = vector.load %arg5[%c6, %c0_30, %c0_31] : memref<9x128x128xbf16, #tpu.memory_space<vmem>>, vector<1x128x128xbf16>
    %46 = vector.shape_cast %45 : vector<1x128x128xbf16> to vector<128x128xbf16>
    %cst_32 = arith.constant dense<0.000000e+00> : vector<128x128xf32>
    %47 = tpu.matmul %44, %46, %cst_32 {dimension_numbers = #tpu.dot_dimension_numbers<[1], [0], [0], [1], [0, 0, 1, 1], [], []>} : vector<128x128xbf16>, vector<128x128xbf16>, vector<128x128xf32> -> vector<128x128xf32>
    %48 = arith.addf %42, %47 : vector<128x128xf32>
    %49 = vector.extract_strided_slice %5 {offsets = [0, 1, 0], sizes = [8, 16, 128], strides = [1, 1, 1]} : vector<8x18x128xbf16> to vector<8x16x128xbf16>
    %50 = vector.shape_cast %49 : vector<8x16x128xbf16> to vector<128x128xbf16>
    %c7 = arith.constant 7 : index
    %c0_33 = arith.constant 0 : index
    %c0_34 = arith.constant 0 : index
    %51 = vector.load %arg5[%c7, %c0_33, %c0_34] : memref<9x128x128xbf16, #tpu.memory_space<vmem>>, vector<1x128x128xbf16>
    %52 = vector.shape_cast %51 : vector<1x128x128xbf16> to vector<128x128xbf16>
    %cst_35 = arith.constant dense<0.000000e+00> : vector<128x128xf32>
    %53 = tpu.matmul %50, %52, %cst_35 {dimension_numbers = #tpu.dot_dimension_numbers<[1], [0], [0], [1], [0, 0, 1, 1], [], []>} : vector<128x128xbf16>, vector<128x128xbf16>, vector<128x128xf32> -> vector<128x128xf32>
    %54 = arith.addf %48, %53 : vector<128x128xf32>
    %55 = vector.extract_strided_slice %5 {offsets = [0, 2, 0], sizes = [8, 16, 128], strides = [1, 1, 1]} : vector<8x18x128xbf16> to vector<8x16x128xbf16>
    %56 = vector.shape_cast %55 : vector<8x16x128xbf16> to vector<128x128xbf16>
    %c8 = arith.constant 8 : index
    %c0_36 = arith.constant 0 : index
    %c0_37 = arith.constant 0 : index
    %57 = vector.load %arg5[%c8, %c0_36, %c0_37] : memref<9x128x128xbf16, #tpu.memory_space<vmem>>, vector<1x128x128xbf16>
    %58 = vector.shape_cast %57 : vector<1x128x128xbf16> to vector<128x128xbf16>
    %cst_38 = arith.constant dense<0.000000e+00> : vector<128x128xf32>
    %59 = tpu.matmul %56, %58, %cst_38 {dimension_numbers = #tpu.dot_dimension_numbers<[1], [0], [0], [1], [0, 0, 1, 1], [], []>} : vector<128x128xbf16>, vector<128x128xbf16>, vector<128x128xf32> -> vector<128x128xf32>
    %60 = arith.addf %54, %59 : vector<128x128xf32>
    %61 = vector.shape_cast %60 : vector<128x128xf32> to vector<8x16x128xf32>
    %c0_39 = arith.constant 0 : index
    %c0_40 = arith.constant 0 : index
    %c0_41 = arith.constant 0 : index
    %c0_42 = arith.constant 0 : index
    %62 = vector.load %arg6[%c0_39, %c0_40, %c0_41, %c0_42] : memref<1x8x16x128xf32, #tpu.memory_space<vmem>>, vector<1x8x16x128xf32>
    %63 = vector.shape_cast %62 : vector<1x8x16x128xf32> to vector<8x16x128xf32>
    %64 = vector.shape_cast %61 : vector<8x16x128xf32> to vector<1x8x16x128xf32>
    tpu.vector_store %arg6[%c0_39, %c0_40, %c0_41, %c0_42], %64 {strides = array<i32>} : memref<1x8x16x128xf32, #tpu.memory_space<vmem>>, vector<1x8x16x128xf32>,
    %cst_43 = arith.constant dense<0.000000e+00> : vector<128xf32>
    %65 = vector.multi_reduction <add>, %60, %cst_43 [0] : vector<128x128xf32> to vector<128xf32>
    %66 = vector.shape_cast %65 : vector<128xf32> to vector<1x128xf32>
    %c0_44 = arith.constant 0 : index
    %c0_45 = arith.constant 0 : index
    %c0_46 = arith.constant 0 : index
    %c0_47 = arith.constant 0 : index
    %67 = vector.load %arg7[%c0_44, %c0_45, %c0_46, %c0_47] : memref<1x1x2x128xf32, #tpu.memory_space<vmem>>, vector<1x1x1x128xf32>
    %68 = vector.shape_cast %67 : vector<1x1x1x128xf32> to vector<1x128xf32>
    %69 = vector.shape_cast %66 : vector<1x128xf32> to vector<1x1x1x128xf32>
    tpu.vector_store %arg7[%c0_44, %c0_45, %c0_46, %c0_47], %69 {strides = array<i32>} : memref<1x1x2x128xf32, #tpu.memory_space<vmem>>, vector<1x1x1x128xf32>,
    %70 = arith.mulf %60, %60 : vector<128x128xf32>
    %cst_48 = arith.constant dense<0.000000e+00> : vector<128xf32>
    %71 = vector.multi_reduction <add>, %70, %cst_48 [0] : vector<128x128xf32> to vector<128xf32>
    %72 = vector.shape_cast %71 : vector<128xf32> to vector<1x128xf32>
    %c0_49 = arith.constant 0 : index
    %c0_50 = arith.constant 0 : index
    %c1_51 = arith.constant 1 : index
    %c0_52 = arith.constant 0 : index
    %73 = vector.load %arg7[%c0_49, %c0_50, %c1_51, %c0_52] : memref<1x1x2x128xf32, #tpu.memory_space<vmem>>, vector<1x1x1x128xf32>
    %74 = vector.shape_cast %73 : vector<1x1x1x128xf32> to vector<1x128xf32>
    %75 = vector.shape_cast %72 : vector<1x128xf32> to vector<1x1x1x128xf32>
    tpu.vector_store %arg7[%c0_49, %c0_50, %c1_51, %c0_52], %75 {strides = array<i32>} : memref<1x1x2x128xf32, #tpu.memory_space<vmem>>, vector<1x1x1x128xf32>,
    return
  }
  func.func @transform_0(%arg0: i32, %arg1: i32) -> (i32, i32, i32, i32) {
    %c0_i32 = arith.constant 0 : i32
    %c0_i32_0 = arith.constant 0 : i32
    %c0_i32_1 = arith.constant 0 : i32
    return %arg0, %arg1, %c0_i32, %c0_i32_0 : i32, i32, i32, i32
  }
  func.func @transform_1(%arg0: i32, %arg1: i32) -> (i32, i32, i32, i32) {
    %c0_i32 = arith.constant 0 : i32
    %c0_i32_0 = arith.constant 0 : i32
    %c0_i32_1 = arith.constant 0 : i32
    return %arg0, %arg1, %c0_i32, %c0_i32_0 : i32, i32, i32, i32
  }
  func.func @transform_2(%arg0: i32, %arg1: i32) -> (i32, i32, i32, i32) {
    %c0_i32 = arith.constant 0 : i32
    %c0_i32_0 = arith.constant 0 : i32
    %c0_i32_1 = arith.constant 0 : i32
    return %arg0, %arg1, %c0_i32, %c0_i32_0 : i32, i32, i32, i32
  }
  func.func @transform_3(%arg0: i32, %arg1: i32) -> (i32, i32, i32) {
    %c0_i32 = arith.constant 0 : i32
    %c0_i32_0 = arith.constant 0 : i32
    %c0_i32_1 = arith.constant 0 : i32
    %c0_i32_2 = arith.constant 0 : i32
    return %c0_i32, %c0_i32_0, %c0_i32_1 : i32, i32, i32
  }
  func.func @transform_4(%arg0: i32, %arg1: i32) -> (i32, i32, i32, i32) {
    %c0_i32 = arith.constant 0 : i32
    %c0_i32_0 = arith.constant 0 : i32
    %c0_i32_1 = arith.constant 0 : i32
    return %arg0, %arg1, %c0_i32, %c0_i32_0 : i32, i32, i32, i32
  }
  func.func @transform_5(%arg0: i32, %arg1: i32) -> (i32, i32, i32, i32) {
    %c0_i32 = arith.constant 0 : i32
    %c0_i32_0 = arith.constant 0 : i32
    %c0_i32_1 = arith.constant 0 : i32
    return %arg0, %arg1, %c0_i32, %c0_i32_0 : i32, i32, i32, i32
  }
}

module attributes {stable_mosaic.version = 11 : i64} {
  func.func @_norm_relu_pool_kernel(%arg0: i32, %arg1: i32, %arg2: memref<1x8x16x128xf32, #tpu.memory_space<vmem>>, %arg3: memref<1x128xf32, #tpu.memory_space<vmem>>, %arg4: memref<1x128xf32, #tpu.memory_space<vmem>>, %arg5: memref<1x8x16x128xf32, #tpu.memory_space<vmem>>, %arg6: memref<1x4x8x128xf32, #tpu.memory_space<vmem>>) attributes {dimension_semantics = [#tpu.dimension_semantics<parallel>, #tpu.dimension_semantics<parallel>], iteration_bounds = array<i64: 2, 2>, scalar_prefetch = 0 : i64, scratch_operands = 0 : i64, tpu.core_type = #tpu.core_type<tc>, window_params = [{transform_indices = @transform_0, window_bounds = array<i64: 1, 8, 16, 128>}, {pipeline_mode = #tpu.pipeline_mode<synchronous>, transform_indices = @transform_1, window_bounds = array<i64: 1, 128>}, {pipeline_mode = #tpu.pipeline_mode<synchronous>, transform_indices = @transform_2, window_bounds = array<i64: 1, 128>}, {transform_indices = @transform_3, window_bounds = array<i64: 1, 8, 16, 128>}, {transform_indices = @transform_4, window_bounds = array<i64: 1, 4, 8, 128>}]} {
    %c0 = arith.constant 0 : index
    %c0_0 = arith.constant 0 : index
    %0 = vector.load %arg3[%c0, %c0_0] : memref<1x128xf32, #tpu.memory_space<vmem>>, vector<1x128xf32>
    %c0_1 = arith.constant 0 : index
    %c0_2 = arith.constant 0 : index
    %1 = vector.load %arg4[%c0_1, %c0_2] : memref<1x128xf32, #tpu.memory_space<vmem>>, vector<1x128xf32>
    %c0_3 = arith.constant 0 : index
    %c0_4 = arith.constant 0 : index
    %c0_5 = arith.constant 0 : index
    %c0_6 = arith.constant 0 : index
    %2 = vector.load %arg2[%c0_3, %c0_4, %c0_5, %c0_6] : memref<1x8x16x128xf32, #tpu.memory_space<vmem>>, vector<1x8x16x128xf32>
    %3 = vector.shape_cast %2 : vector<1x8x16x128xf32> to vector<8x16x128xf32>
    %4 = vector.shape_cast %0 : vector<1x128xf32> to vector<1x1x128xf32>
    %5 = vector.broadcast %4 : vector<1x1x128xf32> to vector<8x16x128xf32>
    %6 = arith.mulf %3, %5 : vector<8x16x128xf32>
    %7 = vector.shape_cast %1 : vector<1x128xf32> to vector<1x1x128xf32>
    %8 = vector.broadcast %7 : vector<1x1x128xf32> to vector<8x16x128xf32>
    %9 = arith.addf %6, %8 : vector<8x16x128xf32>
    %cst = arith.constant 0.000000e+00 : f32
    %10 = vector.broadcast %cst : f32 to vector<8x16x128xf32>
    %11 = arith.maximumf %9, %10 : vector<8x16x128xf32>
    %c0_7 = arith.constant 0 : index
    %c0_8 = arith.constant 0 : index
    %c0_9 = arith.constant 0 : index
    %c0_10 = arith.constant 0 : index
    %12 = vector.load %arg5[%c0_7, %c0_8, %c0_9, %c0_10] : memref<1x8x16x128xf32, #tpu.memory_space<vmem>>, vector<1x8x16x128xf32>
    %13 = vector.shape_cast %12 : vector<1x8x16x128xf32> to vector<8x16x128xf32>
    %14 = vector.shape_cast %11 : vector<8x16x128xf32> to vector<1x8x16x128xf32>
    tpu.vector_store %arg5[%c0_7, %c0_8, %c0_9, %c0_10], %14 {strides = array<i32>} : memref<1x8x16x128xf32, #tpu.memory_space<vmem>>, vector<1x8x16x128xf32>,
    %c0_11 = arith.constant 0 : index
    %c0_12 = arith.constant 0 : index
    %c0_13 = arith.constant 0 : index
    %c0_14 = arith.constant 0 : index
    %15 = tpu.strided_load %arg2[%c0_11, %c0_12, %c0_13, %c0_14] {strides = array<i32: 1, 1, 2, 1>} : memref<1x8x16x128xf32, #tpu.memory_space<vmem>>, vector<1x8x8x128xf32>
    %16 = vector.shape_cast %15 : vector<1x8x8x128xf32> to vector<8x8x128xf32>
    %17 = vector.shape_cast %0 : vector<1x128xf32> to vector<1x1x128xf32>
    %18 = vector.broadcast %17 : vector<1x1x128xf32> to vector<8x8x128xf32>
    %19 = arith.mulf %16, %18 : vector<8x8x128xf32>
    %20 = vector.shape_cast %1 : vector<1x128xf32> to vector<1x1x128xf32>
    %21 = vector.broadcast %20 : vector<1x1x128xf32> to vector<8x8x128xf32>
    %22 = arith.addf %19, %21 : vector<8x8x128xf32>
    %cst_15 = arith.constant 0.000000e+00 : f32
    %23 = vector.broadcast %cst_15 : f32 to vector<8x8x128xf32>
    %24 = arith.maximumf %22, %23 : vector<8x8x128xf32>
    %c0_16 = arith.constant 0 : index
    %c0_17 = arith.constant 0 : index
    %c1 = arith.constant 1 : index
    %c0_18 = arith.constant 0 : index
    %25 = tpu.strided_load %arg2[%c0_16, %c0_17, %c1, %c0_18] {strides = array<i32: 1, 1, 2, 1>} : memref<1x8x16x128xf32, #tpu.memory_space<vmem>>, vector<1x8x8x128xf32>
    %26 = vector.shape_cast %25 : vector<1x8x8x128xf32> to vector<8x8x128xf32>
    %27 = vector.shape_cast %0 : vector<1x128xf32> to vector<1x1x128xf32>
    %28 = vector.broadcast %27 : vector<1x1x128xf32> to vector<8x8x128xf32>
    %29 = arith.mulf %26, %28 : vector<8x8x128xf32>
    %30 = vector.shape_cast %1 : vector<1x128xf32> to vector<1x1x128xf32>
    %31 = vector.broadcast %30 : vector<1x1x128xf32> to vector<8x8x128xf32>
    %32 = arith.addf %29, %31 : vector<8x8x128xf32>
    %cst_19 = arith.constant 0.000000e+00 : f32
    %33 = vector.broadcast %cst_19 : f32 to vector<8x8x128xf32>
    %34 = arith.maximumf %32, %33 : vector<8x8x128xf32>
    %35 = arith.maximumf %24, %34 : vector<8x8x128xf32>
    %36 = vector.shape_cast %35 : vector<8x8x128xf32> to vector<4x2x8x128xf32>
    %cst_20 = arith.constant dense<0xFF800000> : vector<4x8x128xf32>
    %37 = vector.multi_reduction <maximumf>, %36, %cst_20 [1] : vector<4x2x8x128xf32> to vector<4x8x128xf32>
    %c0_21 = arith.constant 0 : index
    %c0_22 = arith.constant 0 : index
    %c0_23 = arith.constant 0 : index
    %c0_24 = arith.constant 0 : index
    %38 = vector.load %arg6[%c0_21, %c0_22, %c0_23, %c0_24] : memref<1x4x8x128xf32, #tpu.memory_space<vmem>>, vector<1x4x8x128xf32>
    %39 = vector.shape_cast %38 : vector<1x4x8x128xf32> to vector<4x8x128xf32>
    %40 = vector.shape_cast %37 : vector<4x8x128xf32> to vector<1x4x8x128xf32>
    tpu.vector_store %arg6[%c0_21, %c0_22, %c0_23, %c0_24], %40 {strides = array<i32>} : memref<1x4x8x128xf32, #tpu.memory_space<vmem>>, vector<1x4x8x128xf32>,
    return
  }
  func.func @transform_0(%arg0: i32, %arg1: i32) -> (i32, i32, i32, i32) {
    %c0_i32 = arith.constant 0 : i32
    %c0_i32_0 = arith.constant 0 : i32
    %c0_i32_1 = arith.constant 0 : i32
    return %arg0, %arg1, %c0_i32, %c0_i32_0 : i32, i32, i32, i32
  }
  func.func @transform_1(%arg0: i32, %arg1: i32) -> (i32, i32) {
    %c0_i32 = arith.constant 0 : i32
    %c0_i32_0 = arith.constant 0 : i32
    %c0_i32_1 = arith.constant 0 : i32
    return %c0_i32, %c0_i32_0 : i32, i32
  }
  func.func @transform_2(%arg0: i32, %arg1: i32) -> (i32, i32) {
    %c0_i32 = arith.constant 0 : i32
    %c0_i32_0 = arith.constant 0 : i32
    %c0_i32_1 = arith.constant 0 : i32
    return %c0_i32, %c0_i32_0 : i32, i32
  }
  func.func @transform_3(%arg0: i32, %arg1: i32) -> (i32, i32, i32, i32) {
    %c0_i32 = arith.constant 0 : i32
    %c0_i32_0 = arith.constant 0 : i32
    %c0_i32_1 = arith.constant 0 : i32
    return %arg0, %arg1, %c0_i32, %c0_i32_0 : i32, i32, i32, i32
  }
  func.func @transform_4(%arg0: i32, %arg1: i32) -> (i32, i32, i32, i32) {
    %c0_i32 = arith.constant 0 : i32
    %c0_i32_0 = arith.constant 0 : i32
    %c0_i32_1 = arith.constant 0 : i32
    return %arg0, %arg1, %c0_i32, %c0_i32_0 : i32, i32, i32, i32
  }
}

</mosaic_0001>

<llo_original>
// kernel: contracting_block_forward.5
$region0: #{contracting_block_forward.5}
  #allocation0 [shape = 'u32[]', space=smem, size = 0x4, offset = 0x4, fixed_abs, tag = 'smem constant byte address 0x4 - core index']
  #allocation1 [shape = 'u32[144,128]{1,0:T(1,128)}', space=vmem, size = 0x12000, scoped, tag = 'internal scratch']
  %s0 = inlined_call_operand.vmem [shape: f32[2,16,16,128], index: 0, kind: input, shape index: {}]
  %s1 = inlined_call_operand.vmem [shape: f32[1,128], index: 1, kind: input, shape index: {}]
  %s2 = inlined_call_operand.vmem [shape: f32[1,128], index: 2, kind: input, shape index: {}]
  %s3 = inlined_call_operand.vmem [shape: f32[2,16,16,128], index: 3, kind: output, shape index: {0}]
  %s4 = inlined_call_operand.vmem [shape: f32[2,8,8,128], index: 4, kind: output, shape index: {1}]
  %5 = xla_tuple %s3, %s4
  %s6 = sld [smem:[#allocation0]]
  $region53: #{contracting_block_forward.5} parent=0
    _
  %s8 = ssub.s32 1, %s6
  %s9 = scalar_select 0, %s8, %s6
  loop: start=0, step=1, limit=6
  $region2: #{contracting_block_forward.5} parent=0 // loop_pre_header
    _
  $region3: #{contracting_block_forward.5} parent=0 // loop_header
    %s11 = sphi 0, %s15
    %p12 = scmp.ge.s32.totalorder %s11, 6
    %s18 = sphi 0, %s30
    %s19 = sphi 0, %s26
    %s20 = sphi 0, %s18
    %s21 = sphi 0, %s19
    %s22 = sphi 0, %s20
    %s23 = sphi 0, %s21
    %s35 = sphi 0, %s37
    %s38 = sphi 0, %s35
    %s39 = sphi 0, %s38
    %s55 = sphi 0, %s39
    %s59 = sphi 0, %s59
    %s61 = sphi 0, %s59
    %s62 = sphi 0, %s61
    %s76 = sphi 0, %s62
    %s80 = sphi 0, %s80
    %s82 = sphi 0, %s80
    %s83 = sphi 0, %s82
    %s97 = sphi 0, %s83
    %s105 = sphi 0, %s107
    %s108 = sphi 0, %s105
    %s109 = sphi 0, %s108
    %s125 = sphi 0, %s109
    %s133 = sphi 0, %s135
    %s136 = sphi 0, %s133
    %s137 = sphi 0, %s136
    %s153 = sphi 0, %s137
  $region4: #{contracting_block_forward.5} parent=0 // loop_header_branch
    %14 = sbr.rel (%p12) target = $region8
  $region5: #{contracting_block_forward.5} parent=0 // loop_body
    %s16 = ssub.s32 %s11, 1
    %s17 = ssub.s32 %s11, 2
    %s24 = sadd.s32 1, %s19
    %p25 = scmp.ge.s32.totalorder %s24, 2
    %s26 = scalar_select %p25, 0, %s24
    %s27 = sadd.s32 1, %s18
    %s28 = scalar_select %p25, %s27, %s18
    %p29 = scmp.ge.s32.totalorder %s28, 2
    %s30 = scalar_select %p29, 0, %s28
    %s31 = ssub.s32 %s18, %s30
    %s32 = ssub.s32 %s19, %s26
    %s33 = sor.u32 %s31, %s32
    %p34 = scmp.eq.s32.totalorder %s33, 0
    %s36 = sadd.s32 %s35, 1
    %s37 = scalar_select %p34, %s35, %s36
    %p40 = pneg %p34
    %p41 = scmp.eq.s32.totalorder %s11, 3
    %p42 = por %p40, %p41
    %p43 = scmp.ne.s32.totalorder %s35, %s38
    %p44 = scmp.eq.s32.totalorder %s11, 0
    %p45 = por %p43, %p44
    %p46 = scmp.ne.s32.totalorder %s35, %s38
    %p47 = scmp.eq.s32.totalorder %s16, 3
    %p48 = por %p46, %p47
    %p49 = scmp.ne.s32.totalorder %s38, %s39
    %p50 = scmp.eq.s32.totalorder %s16, 0
    %p51 = por %p49, %p50
    %p52 = scmp.ne.s32.totalorder %s38, %s39
    %p53 = scmp.eq.s32.totalorder %s17, 3
    %p54 = por %p52, %p53
    %p56 = scmp.ne.s32.totalorder %s39, %s55
    %p57 = scmp.eq.s32.totalorder %s17, 0
    %p58 = por %p56, %p57
    %s60 = sadd.s32 %s59, 1
    %p63 = scmp.eq.s32.totalorder %s11, 3
    %p64 = scmp.ne.s32.totalorder %s59, %s61
    %p65 = scmp.eq.s32.totalorder %s11, 0
    %p66 = por %p64, %p65
    %p67 = scmp.ne.s32.totalorder %s59, %s61
    %p68 = scmp.eq.s32.totalorder %s16, 3
    %p69 = por %p67, %p68
    %p70 = scmp.ne.s32.totalorder %s61, %s62
    %p71 = scmp.eq.s32.totalorder %s16, 0
    %p72 = por %p70, %p71
    %p73 = scmp.ne.s32.totalorder %s61, %s62
    %p74 = scmp.eq.s32.totalorder %s17, 3
    %p75 = por %p73, %p74
    %p77 = scmp.ne.s32.totalorder %s62, %s76
    %p78 = scmp.eq.s32.totalorder %s17, 0
    %p79 = por %p77, %p78
    %s81 = sadd.s32 %s80, 1
    %p84 = scmp.eq.s32.totalorder %s11, 3
    %p85 = scmp.ne.s32.totalorder %s80, %s82
    %p86 = scmp.eq.s32.totalorder %s11, 0
    %p87 = por %p85, %p86
    %p88 = scmp.ne.s32.totalorder %s80, %s82
    %p89 = scmp.eq.s32.totalorder %s16, 3
    %p90 = por %p88, %p89
    %p91 = scmp.ne.s32.totalorder %s82, %s83
    %p92 = scmp.eq.s32.totalorder %s16, 0
    %p93 = por %p91, %p92
    %p94 = scmp.ne.s32.totalorder %s82, %s83
    %p95 = scmp.eq.s32.totalorder %s17, 3
    %p96 = por %p94, %p95
    %p98 = scmp.ne.s32.totalorder %s83, %s97
    %p99 = scmp.eq.s32.totalorder %s17, 0
    %p100 = por %p98, %p99
    %s101 = ssub.s32 %s18, %s30
    %s102 = ssub.s32 %s19, %s26
    %s103 = sor.u32 %s101, %s102
    %p104 = scmp.eq.s32.totalorder %s103, 0
    %s106 = sadd.s32 %s105, 1
    %s107 = scalar_select %p104, %s105, %s106
    %p110 = pneg %p104
    %p111 = scmp.eq.s32.totalorder %s11, 3
    %p112 = por %p110, %p111
    %p113 = scmp.ne.s32.totalorder %s105, %s108
    %p114 = scmp.eq.s32.totalorder %s11, 0
    %p115 = por %p113, %p114
    %p116 = scmp.ne.s32.totalorder %s105, %s108
    %p117 = scmp.eq.s32.totalorder %s16, 3
    %p118 = por %p116, %p117
    %p119 = scmp.ne.s32.totalorder %s108, %s109
    %p120 = scmp.eq.s32.totalorder %s16, 0
    %p121 = por %p119, %p120
    %p122 = scmp.ne.s32.totalorder %s108, %s109
    %p123 = scmp.eq.s32.totalorder %s17, 3
    %p124 = por %p122, %p123
    %p126 = scmp.ne.s32.totalorder %s109, %s125
    %p127 = scmp.eq.s32.totalorder %s17, 0
    %p128 = por %p126, %p127
    %s129 = ssub.s32 %s18, %s30
    %s130 = ssub.s32 %s19, %s26
    %s131 = sor.u32 %s129, %s130
    %p132 = scmp.eq.s32.totalorder %s131, 0
    %s134 = sadd.s32 %s133, 1
    %s135 = scalar_select %p132, %s133, %s134
    %p138 = pneg %p132
    %p139 = scmp.eq.s32.totalorder %s11, 3
    %p140 = por %p138, %p139
    %p141 = scmp.ne.s32.totalorder %s133, %s136
    %p142 = scmp.eq.s32.totalorder %s11, 0
    %p143 = por %p141, %p142
    %p144 = scmp.ne.s32.totalorder %s133, %s136
    %p145 = scmp.eq.s32.totalorder %s16, 3
    %p146 = por %p144, %p145
    %p147 = scmp.ne.s32.totalorder %s136, %s137
    %p148 = scmp.eq.s32.totalorder %s16, 0
    %p149 = por %p147, %p148
    %p150 = scmp.ne.s32.totalorder %s136, %s137
    %p151 = scmp.eq.s32.totalorder %s17, 3
    %p152 = por %p150, %p151
    %p154 = scmp.ne.s32.totalorder %s137, %s153
    %p155 = scmp.eq.s32.totalorder %s17, 0
    %p156 = por %p154, %p155
    %p157 = scmp.le.s32.totalorder 1, %s11
    %p158 = scmp.lt.s32.totalorder %s11, 5
    %p159 = pnand %p157, %p158
    %p160 = pneg %p159
    // Predicated region
    $region9: #{contracting_block_forward.5} parent=5 // pred_check
      _
    $region10: #{contracting_block_forward.5} parent=5 // pred_check_branch
      %162 = sbr.rel (%p159) target = $region12
    $region11: #{contracting_block_forward.5} parent=5 // pred_region
      %s163 = ssub.s32 %s11, 1
      // Predicated region
      $region13: #{contracting_block_forward.5} parent=11 // pred_check
        %p164 = pneg %p72
      $region14: #{contracting_block_forward.5} parent=11 // pred_check_branch
        %166 = sbr.rel (%p164) target = $region16
      $region15: #{contracting_block_forward.5} parent=11 // pred_region
        _
      $region16: #{contracting_block_forward.5} parent=11 // pred_fallthru
        _
      // Predicated region
      $region17: #{contracting_block_forward.5} parent=11 // pred_check
        %p167 = pneg %p93
      $region18: #{contracting_block_forward.5} parent=11 // pred_check_branch
        %169 = sbr.rel (%p167) target = $region20
      $region19: #{contracting_block_forward.5} parent=11 // pred_region
        _
      $region20: #{contracting_block_forward.5} parent=11 // pred_fallthru
        _
    $region12: #{contracting_block_forward.5} parent=5 // pred_fallthru
      _
    %p170 = scmp.lt.s32.totalorder %s11, 4
    // Predicated region
    $region21: #{contracting_block_forward.5} parent=5 // pred_check
      %p171 = pneg %p170
    $region22: #{contracting_block_forward.5} parent=5 // pred_check_branch
      %173 = sbr.rel (%p171) target = $region24
    $region23: #{contracting_block_forward.5} parent=5 // pred_region
      // Predicated region
      $region25: #{contracting_block_forward.5} parent=23 // pred_check
        %p174 = pneg %p45
      $region26: #{contracting_block_forward.5} parent=23 // pred_check_branch
        %176 = sbr.rel (%p174) target = $region28
      $region27: #{contracting_block_forward.5} parent=23 // pred_region
        %s177 = smul.u32 8, %s19
        %p178 = scmp.lt.s32.totalorder %s18, 1
        %s179 = scalar_select %p178, %s18, 1
        %p180 = scmp.lt.s32.totalorder %s177, 15
        %s181 = scalar_select %p180, %s177, 15
        %s182 = smul.addr %s181, 2
        %s183 = smul.addr %s179, 32
        %s184 = sadd.s32 %s182, %s183
        %s185 = smul.addr %s184, 8
        %s186 = scalar_lea.vmem %s0, %s185
        %s187 = smul.u32 8, %s19
      $region28: #{contracting_block_forward.5} parent=23 // pred_fallthru
        _
    $region24: #{contracting_block_forward.5} parent=5 // pred_fallthru
      _
    %p188 = scmp.le.s32.totalorder 1, %s11
    %p189 = scmp.lt.s32.totalorder %s11, 5
    %p190 = pnand %p188, %p189
    %p191 = pneg %p190
    // Predicated region
    $region29: #{contracting_block_forward.5} parent=5 // pred_check
      _
    $region30: #{contracting_block_forward.5} parent=5 // pred_check_branch
      %193 = sbr.rel (%p190) target = $region32
    $region31: #{contracting_block_forward.5} parent=5 // pred_region
      %s194 = ssub.s32 %s11, 1
      %s195 = smul.u32 8, %s21
      %p196 = scmp.lt.s32.totalorder %s20, 1
      %s197 = scalar_select %p196, %s20, 1
      %p198 = scmp.lt.s32.totalorder %s195, 15
      %s199 = scalar_select %p198, %s195, 15
      %s200 = smul.addr %s199, 2
      %s201 = smul.addr %s197, 32
      %s202 = sadd.s32 %s200, %s201
      %s203 = smul.addr %s202, 8
      %s204 = scalar_lea.vmem %s0, %s203
      %p205 = pneg %p51
      %p206 = pneg %p48
      %p207 = pneg %p72
      %p208 = pneg %p69
      %p209 = pneg %p93
      %p210 = pneg %p90
      %p211 = pneg %p121
      %p212 = pneg %p118
      %s213 = smul.u32 8, %s21
      %p214 = scmp.lt.s32.totalorder %s20, 1
      %s215 = scalar_select %p214, %s20, 1
      %p216 = scmp.lt.s32.totalorder %s213, 15
      %s217 = scalar_select %p216, %s213, 15
      %s218 = smul.addr %s217, 2
      %s219 = smul.addr %s215, 32
      %s220 = sadd.s32 %s218, %s219
      %s221 = smul.addr %s220, 8
      %s222 = scalar_lea.vmem %s3, %s221
      %p223 = pneg %p149
      %p224 = pneg %p146
      %s225 = smul.u32 4, %s21
      %p226 = scmp.lt.s32.totalorder %s20, 1
      %s227 = scalar_select %p226, %s20, 1
      %p228 = scmp.lt.s32.totalorder %s225, 7
      %s229 = scalar_select %p228, %s225, 7
      %s230 = smul.addr %s227, 8
      %s231 = sadd.s32 %s229, %s230
      %s232 = smul.addr %s231, 8
      %s233 = scalar_lea.vmem %s4, %s232
      %s234 = smul.u32 8, %s21
      %p235 = scmp.lt.s32.totalorder %s20, 1
      %s236 = scalar_select %p235, %s20, 1
      %p237 = scmp.lt.s32.totalorder %s234, 15
      %s238 = scalar_select %p237, %s234, 15
      %s239 = smul.addr %s238, 2
      %s240 = smul.addr %s236, 32
      %s241 = sadd.s32 %s239, %s240
      %s242 = smul.addr %s241, 8
      %s243 = scalar_lea.vmem %s0, %s242
      %s244 = smul.u32 8, %s21
      %s245 = smul.u32 8, %s21
      %p246 = scmp.lt.s32.totalorder %s20, 1
      %s247 = scalar_select %p246, %s20, 1
      %p248 = scmp.lt.s32.totalorder %s245, 15
      %s249 = scalar_select %p248, %s245, 15
      %s250 = smul.addr %s249, 2
      %s251 = smul.addr %s247, 32
      %s252 = sadd.s32 %s250, %s251
      %s253 = smul.addr %s252, 8
      %s254 = scalar_lea.vmem %s3, %s253
      %s255 = smul.u32 8, %s21
      %s256 = smul.u32 4, %s21
      %p257 = scmp.lt.s32.totalorder %s20, 1
      %s258 = scalar_select %p257, %s20, 1
      %p259 = scmp.lt.s32.totalorder %s256, 7
      %s260 = scalar_select %p259, %s256, 7
      %s261 = smul.addr %s258, 8
      %s262 = sadd.s32 %s260, %s261
      %s263 = smul.addr %s262, 8
      %s264 = scalar_lea.vmem %s4, %s263
      %s265 = smul.u32 4, %s21
      %v266 = vld [vmem:[%s1] sm:$0x1]
      %v267 = vld [vmem:[%s2] sm:$0x1]
      %v268 = vld [vmem:[%s243] sm:$0xff]
      %v269 = vld [vmem:[%s243 + $0x8] sm:$0xff]
      %v270 = vld [vmem:[%s243 + $0x10] sm:$0xff]
      %v271 = vld [vmem:[%s243 + $0x18] sm:$0xff]
      %v272 = vld [vmem:[%s243 + $0x20] sm:$0xff]
      %v273 = vld [vmem:[%s243 + $0x28] sm:$0xff]
      %v274 = vld [vmem:[%s243 + $0x30] sm:$0xff]
      %v275 = vld [vmem:[%s243 + $0x38] sm:$0xff]
      %v276 = vld [vmem:[%s243 + $0x40] sm:$0xff]
      %v277 = vld [vmem:[%s243 + $0x48] sm:$0xff]
      %v278 = vld [vmem:[%s243 + $0x50] sm:$0xff]
      %v279 = vld [vmem:[%s243 + $0x58] sm:$0xff]
      %v280 = vld [vmem:[%s243 + $0x60] sm:$0xff]
      %v281 = vld [vmem:[%s243 + $0x68] sm:$0xff]
      %v282 = vld [vmem:[%s243 + $0x70] sm:$0xff]
      %v283 = vld [vmem:[%s243 + $0x78] sm:$0xff]
      %v285 = vlaneseq
      %v286 = vshrl.u32 %v285, 7
      %v287 = vsub.s32 0, %v286
      %v288 = vrot.slane %v266, %v287
      %v290 = vmul.f32 %v268, %v288
      %v291 = vmul.f32 %v269, %v288
      %v292 = vmul.f32 %v270, %v288
      %v293 = vmul.f32 %v271, %v288
      %v294 = vmul.f32 %v272, %v288
      %v295 = vmul.f32 %v273, %v288
      %v296 = vmul.f32 %v274, %v288
      %v297 = vmul.f32 %v275, %v288
      %v298 = vmul.f32 %v276, %v288
      %v299 = vmul.f32 %v277, %v288
      %v300 = vmul.f32 %v278, %v288
      %v301 = vmul.f32 %v279, %v288
      %v302 = vmul.f32 %v280, %v288
      %v303 = vmul.f32 %v281, %v288
      %v304 = vmul.f32 %v282, %v288
      %v305 = vmul.f32 %v283, %v288
      %v307 = vlaneseq
      %v308 = vshrl.u32 %v307, 7
      %v309 = vsub.s32 0, %v308
      %v310 = vrot.slane %v267, %v309
      %v312 = vadd.f32 %v290, %v310
      %v313 = vadd.f32 %v291, %v310
      %v314 = vadd.f32 %v292, %v310
      %v315 = vadd.f32 %v293, %v310
      %v316 = vadd.f32 %v294, %v310
      %v317 = vadd.f32 %v295, %v310
      %v318 = vadd.f32 %v296, %v310
      %v319 = vadd.f32 %v297, %v310
      %v320 = vadd.f32 %v298, %v310
      %v321 = vadd.f32 %v299, %v310
      %v322 = vadd.f32 %v300, %v310
      %v323 = vadd.f32 %v301, %v310
      %v324 = vadd.f32 %v302, %v310
      %v325 = vadd.f32 %v303, %v310
      %v326 = vadd.f32 %v304, %v310
      %v327 = vadd.f32 %v305, %v310
      %v328 = vmax.f32 %v312, 0.0
      %v329 = vmax.f32 %v313, 0.0
      %v330 = vmax.f32 %v314, 0.0
      %v331 = vmax.f32 %v315, 0.0
      %v332 = vmax.f32 %v316, 0.0
      %v333 = vmax.f32 %v317, 0.0
      %v334 = vmax.f32 %v318, 0.0
      %v335 = vmax.f32 %v319, 0.0
      %v336 = vmax.f32 %v320, 0.0
      %v337 = vmax.f32 %v321, 0.0
      %v338 = vmax.f32 %v322, 0.0
      %v339 = vmax.f32 %v323, 0.0
      %v340 = vmax.f32 %v324, 0.0
      %v341 = vmax.f32 %v325, 0.0
      %v342 = vmax.f32 %v326, 0.0
      %v343 = vmax.f32 %v327, 0.0
      %344 = vst [vmem:[%s254] sm:$0xff] %v328
      %345 = vst [vmem:[%s254 + $0x8] sm:$0xff] %v329
      %346 = vst [vmem:[%s254 + $0x10] sm:$0xff] %v330
      %347 = vst [vmem:[%s254 + $0x18] sm:$0xff] %v331
      %348 = vst [vmem:[%s254 + $0x20] sm:$0xff] %v332
      %349 = vst [vmem:[%s254 + $0x28] sm:$0xff] %v333
      %350 = vst [vmem:[%s254 + $0x30] sm:$0xff] %v334
      %351 = vst [vmem:[%s254 + $0x38] sm:$0xff] %v335
      %352 = vst [vmem:[%s254 + $0x40] sm:$0xff] %v336
      %353 = vst [vmem:[%s254 + $0x48] sm:$0xff] %v337
      %354 = vst [vmem:[%s254 + $0x50] sm:$0xff] %v338
      %355 = vst [vmem:[%s254 + $0x58] sm:$0xff] %v339
      %356 = vst [vmem:[%s254 + $0x60] sm:$0xff] %v340
      %357 = vst [vmem:[%s254 + $0x68] sm:$0xff] %v341
      %358 = vst [vmem:[%s254 + $0x70] sm:$0xff] %v342
      %359 = vst [vmem:[%s254 + $0x78] sm:$0xff] %v343
      %v360 = vld [vmem:[%s243] ss:$2 sm:$0xff]
      %s361 = scalar_lea.vmem %s243, 16
      %v362 = vld [vmem:[%s361] ss:$2 sm:$0xff]
      %s363 = scalar_lea.vmem %s243, 32
      %v364 = vld [vmem:[%s363] ss:$2 sm:$0xff]
      %s365 = scalar_lea.vmem %s243, 48
      %v366 = vld [vmem:[%s365] ss:$2 sm:$0xff]
      %s367 = scalar_lea.vmem %s243, 64
      %v368 = vld [vmem:[%s367] ss:$2 sm:$0xff]
      %s369 = scalar_lea.vmem %s243, 80
      %v370 = vld [vmem:[%s369] ss:$2 sm:$0xff]
      %s371 = scalar_lea.vmem %s243, 96
      %v372 = vld [vmem:[%s371] ss:$2 sm:$0xff]
      %s373 = scalar_lea.vmem %s243, 112
      %v374 = vld [vmem:[%s373] ss:$2 sm:$0xff]
      %v375 = vmul.f32 %v360, %v288
      %v376 = vmul.f32 %v362, %v288
      %v377 = vmul.f32 %v364, %v288
      %v378 = vmul.f32 %v366, %v288
      %v379 = vmul.f32 %v368, %v288
      %v380 = vmul.f32 %v370, %v288
      %v381 = vmul.f32 %v372, %v288
      %v382 = vmul.f32 %v374, %v288
      %v383 = vadd.f32 %v375, %v310
      %v384 = vadd.f32 %v376, %v310
      %v385 = vadd.f32 %v377, %v310
      %v386 = vadd.f32 %v378, %v310
      %v387 = vadd.f32 %v379, %v310
      %v388 = vadd.f32 %v380, %v310
      %v389 = vadd.f32 %v381, %v310
      %v390 = vadd.f32 %v382, %v310
      %v391 = vmax.f32 %v383, 0.0
      %v392 = vmax.f32 %v384, 0.0
      %v393 = vmax.f32 %v385, 0.0
      %v394 = vmax.f32 %v386, 0.0
      %v395 = vmax.f32 %v387, 0.0
      %v396 = vmax.f32 %v388, 0.0
      %v397 = vmax.f32 %v389, 0.0
      %v398 = vmax.f32 %v390, 0.0
      %s399 = scalar_lea.vmem %s243, 1
      %v400 = vld [vmem:[%s399] ss:$2 sm:$0xff]
      %s401 = scalar_lea.vmem %s243, 17
      %v402 = vld [vmem:[%s401] ss:$2 sm:$0xff]
      %s403 = scalar_lea.vmem %s243, 33
      %v404 = vld [vmem:[%s403] ss:$2 sm:$0xff]
      %s405 = scalar_lea.vmem %s243, 49
      %v406 = vld [vmem:[%s405] ss:$2 sm:$0xff]
      %s407 = scalar_lea.vmem %s243, 65
      %v408 = vld [vmem:[%s407] ss:$2 sm:$0xff]
      %s409 = scalar_lea.vmem %s243, 81
      %v410 = vld [vmem:[%s409] ss:$2 sm:$0xff]
      %s411 = scalar_lea.vmem %s243, 97
      %v412 = vld [vmem:[%s411] ss:$2 sm:$0xff]
      %s413 = scalar_lea.vmem %s243, 113
      %v414 = vld [vmem:[%s413] ss:$2 sm:$0xff]
      %v415 = vmul.f32 %v400, %v288
      %v416 = vmul.f32 %v402, %v288
      %v417 = vmul.f32 %v404, %v288
      %v418 = vmul.f32 %v406, %v288
      %v419 = vmul.f32 %v408, %v288
      %v420 = vmul.f32 %v410, %v288
      %v421 = vmul.f32 %v412, %v288
      %v422 = vmul.f32 %v414, %v288
      %v423 = vadd.f32 %v415, %v310
      %v424 = vadd.f32 %v416, %v310
      %v425 = vadd.f32 %v417, %v310
      %v426 = vadd.f32 %v418, %v310
      %v427 = vadd.f32 %v419, %v310
      %v428 = vadd.f32 %v420, %v310
      %v429 = vadd.f32 %v421, %v310
      %v430 = vadd.f32 %v422, %v310
      %v431 = vmax.f32 %v423, 0.0
      %v432 = vmax.f32 %v424, 0.0
      %v433 = vmax.f32 %v425, 0.0
      %v434 = vmax.f32 %v426, 0.0
      %v435 = vmax.f32 %v427, 0.0
      %v436 = vmax.f32 %v428, 0.0
      %v437 = vmax.f32 %v429, 0.0
      %v438 = vmax.f32 %v430, 0.0
      %v439 = vmax.f32 %v391, %v431
      %v440 = vmax.f32 %v392, %v432
      %v441 = vmax.f32 %v393, %v433
      %v442 = vmax.f32 %v394, %v434
      %v443 = vmax.f32 %v395, %v435
      %v444 = vmax.f32 %v396, %v436
      %v445 = vmax.f32 %v397, %v437
      %v446 = vmax.f32 %v398, %v438
      %v447 = vmax.f32 %v439, %v440
      %v448 = vmax.f32 %v441, %v442
      %v449 = vmax.f32 %v443, %v444
      %v450 = vmax.f32 %v445, %v446
      %451 = vst [vmem:[%s264] sm:$0xff] %v447
      %452 = vst [vmem:[%s264 + $0x8] sm:$0xff] %v448
      %453 = vst [vmem:[%s264 + $0x10] sm:$0xff] %v449
      %454 = vst [vmem:[%s264 + $0x18] sm:$0xff] %v450
      %s455 = smul.u32 8, %s21
      %p456 = scmp.lt.s32.totalorder %s20, 1
      %s457 = scalar_select %p456, %s20, 1
      %p458 = scmp.lt.s32.totalorder %s455, 15
      %s459 = scalar_select %p458, %s455, 15
      %s460 = smul.addr %s459, 2
      %s461 = smul.addr %s457, 32
      %s462 = sadd.s32 %s460, %s461
      %s463 = smul.addr %s462, 8
      %s464 = scalar_lea.vmem %s3, %s463
      %s465 = smul.u32 4, %s21
      %p466 = scmp.lt.s32.totalorder %s20, 1
      %s467 = scalar_select %p466, %s20, 1
      %p468 = scmp.lt.s32.totalorder %s465, 7
      %s469 = scalar_select %p468, %s465, 7
      %s470 = smul.addr %s467, 8
      %s471 = sadd.s32 %s469, %s470
      %s472 = smul.addr %s471, 8
      %s473 = scalar_lea.vmem %s4, %s472
      // Predicated region
      $region33: #{contracting_block_forward.5} parent=31 // pred_check
        %p474 = pneg %p118
      $region34: #{contracting_block_forward.5} parent=31 // pred_check_branch
        %476 = sbr.rel (%p474) target = $region36
      $region35: #{contracting_block_forward.5} parent=31 // pred_region
        %s477 = smul.u32 8, %s21
      $region36: #{contracting_block_forward.5} parent=31 // pred_fallthru
        _
      // Predicated region
      $region37: #{contracting_block_forward.5} parent=31 // pred_check
        %p478 = pneg %p146
      $region38: #{contracting_block_forward.5} parent=31 // pred_check_branch
        %480 = sbr.rel (%p478) target = $region40
      $region39: #{contracting_block_forward.5} parent=31 // pred_region
        %s481 = smul.u32 4, %s21
      $region40: #{contracting_block_forward.5} parent=31 // pred_fallthru
        _
    $region32: #{contracting_block_forward.5} parent=5 // pred_fallthru
      _
    %p482 = scmp.le.s32.totalorder 2, %s11
    // Predicated region
    $region41: #{contracting_block_forward.5} parent=5 // pred_check
      %p483 = pneg %p482
    $region42: #{contracting_block_forward.5} parent=5 // pred_check_branch
      %485 = sbr.rel (%p483) target = $region44
    $region43: #{contracting_block_forward.5} parent=5 // pred_region
      %s486 = ssub.s32 %s11, 2
      // Predicated region
      $region45: #{contracting_block_forward.5} parent=43 // pred_check
        %p487 = pneg %p124
      $region46: #{contracting_block_forward.5} parent=43 // pred_check_branch
        %489 = sbr.rel (%p487) target = $region48
      $region47: #{contracting_block_forward.5} parent=43 // pred_region
        %s490 = smul.u32 8, %s23
        %p491 = scmp.lt.s32.totalorder %s22, 1
        %s492 = scalar_select %p491, %s22, 1
        %p493 = scmp.lt.s32.totalorder %s490, 15
        %s494 = scalar_select %p493, %s490, 15
        %s495 = smul.addr %s494, 2
        %s496 = smul.addr %s492, 32
        %s497 = sadd.s32 %s495, %s496
        %s498 = smul.addr %s497, 8
        %s499 = scalar_lea.vmem %s3, %s498
      $region48: #{contracting_block_forward.5} parent=43 // pred_fallthru
        _
      // Predicated region
      $region49: #{contracting_block_forward.5} parent=43 // pred_check
        %p500 = pneg %p152
      $region50: #{contracting_block_forward.5} parent=43 // pred_check_branch
        %502 = sbr.rel (%p500) target = $region52
      $region51: #{contracting_block_forward.5} parent=43 // pred_region
        %s503 = smul.u32 4, %s23
        %p504 = scmp.lt.s32.totalorder %s22, 1
        %s505 = scalar_select %p504, %s22, 1
        %p506 = scmp.lt.s32.totalorder %s503, 7
        %s507 = scalar_select %p506, %s503, 7
        %s508 = smul.addr %s505, 8
        %s509 = sadd.s32 %s507, %s508
        %s510 = smul.addr %s509, 8
        %s511 = scalar_lea.vmem %s4, %s510
      $region52: #{contracting_block_forward.5} parent=43 // pred_fallthru
        _
    $region44: #{contracting_block_forward.5} parent=5 // pred_fallthru
      _
  $region6: #{contracting_block_forward.5} parent=0 // loop_footer
    %s15 = sadd.s32 1, %s11
  $region7: #{contracting_block_forward.5} parent=0 // loop_footer_branch
    %10 = sbr.rel target = $region3
  $region8: #{contracting_block_forward.5} parent=0 // loop_exit
    _

// kernel: contracting_block_forward.3
$region0: #{contracting_block_forward.3}
  #allocation0 [shape = 'u32[]', space=smem, size = 0x4, offset = 0x4, fixed_abs, tag = 'smem constant byte address 0x4 - core index']
  #allocation1 [shape = 'u32[144,128]{1,0:T(1,128)}', space=vmem, size = 0x12000, scoped, tag = 'internal scratch']
  %s0 = inlined_call_operand.vmem [shape: bf16[2,16,18,128], index: 0, kind: input, shape index: {}]
  %s1 = inlined_call_operand.vmem [shape: bf16[2,16,18,128], index: 1, kind: input, shape index: {}]
  %s2 = inlined_call_operand.vmem [shape: bf16[2,16,18,128], index: 2, kind: input, shape index: {}]
  %s3 = inlined_call_operand.vmem [shape: bf16[9,128,128], index: 3, kind: input, shape index: {}]
  %s4 = inlined_call_operand.vmem [shape: f32[2,16,16,128], index: 4, kind: output, shape index: {0}]
  %s5 = inlined_call_operand.vmem [shape: f32[2,2,2,128], index: 5, kind: output, shape index: {1}]
  %6 = xla_tuple %s4, %s5
  %s7 = sld [smem:[#allocation0]]
  $region57: #{contracting_block_forward.3} parent=0
    _
  %s9 = ssub.s32 1, %s7
  %s10 = scalar_select 0, %s9, %s7
  loop: start=0, step=1, limit=6
  $region2: #{contracting_block_forward.3} parent=0 // loop_pre_header
    _
  $region3: #{contracting_block_forward.3} parent=0 // loop_header
    %s12 = sphi 0, %s16
    %p13 = scmp.ge.s32.totalorder %s12, 6
    %s19 = sphi 0, %s31
    %s20 = sphi 0, %s27
    %s21 = sphi 0, %s19
    %s22 = sphi 0, %s20
    %s23 = sphi 0, %s21
    %s24 = sphi 0, %s22
    %s36 = sphi 0, %s38
    %s39 = sphi 0, %s36
    %s40 = sphi 0, %s39
    %s56 = sphi 0, %s40
    %s64 = sphi 0, %s66
    %s67 = sphi 0, %s64
    %s68 = sphi 0, %s67
    %s84 = sphi 0, %s68
    %s92 = sphi 0, %s94
    %s95 = sphi 0, %s92
    %s96 = sphi 0, %s95
    %s112 = sphi 0, %s96
    %s116 = sphi 0, %s116
    %s118 = sphi 0, %s116
    %s119 = sphi 0, %s118
    %s133 = sphi 0, %s119
    %s141 = sphi 0, %s143
    %s144 = sphi 0, %s141
    %s145 = sphi 0, %s144
    %s161 = sphi 0, %s145
    %s169 = sphi 0, %s171
    %s172 = sphi 0, %s169
    %s173 = sphi 0, %s172
    %s189 = sphi 0, %s173
  $region4: #{contracting_block_forward.3} parent=0 // loop_header_branch
    %15 = sbr.rel (%p13) target = $region8
  $region5: #{contracting_block_forward.3} parent=0 // loop_body
    %s17 = ssub.s32 %s12, 1
    %s18 = ssub.s32 %s12, 2
    %s25 = sadd.s32 1, %s20
    %p26 = scmp.ge.s32.totalorder %s25, 2
    %s27 = scalar_select %p26, 0, %s25
    %s28 = sadd.s32 1, %s19
    %s29 = scalar_select %p26, %s28, %s19
    %p30 = scmp.ge.s32.totalorder %s29, 2
    %s31 = scalar_select %p30, 0, %s29
    %s32 = ssub.s32 %s19, %s31
    %s33 = ssub.s32 %s20, %s27
    %s34 = sor.u32 %s32, %s33
    %p35 = scmp.eq.s32.totalorder %s34, 0
    %s37 = sadd.s32 %s36, 1
    %s38 = scalar_select %p35, %s36, %s37
    %p41 = pneg %p35
    %p42 = scmp.eq.s32.totalorder %s12, 3
    %p43 = por %p41, %p42
    %p44 = scmp.ne.s32.totalorder %s36, %s39
    %p45 = scmp.eq.s32.totalorder %s12, 0
    %p46 = por %p44, %p45
    %p47 = scmp.ne.s32.totalorder %s36, %s39
    %p48 = scmp.eq.s32.totalorder %s17, 3
    %p49 = por %p47, %p48
    %p50 = scmp.ne.s32.totalorder %s39, %s40
    %p51 = scmp.eq.s32.totalorder %s17, 0
    %p52 = por %p50, %p51
    %p53 = scmp.ne.s32.totalorder %s39, %s40
    %p54 = scmp.eq.s32.totalorder %s18, 3
    %p55 = por %p53, %p54
    %p57 = scmp.ne.s32.totalorder %s40, %s56
    %p58 = scmp.eq.s32.totalorder %s18, 0
    %p59 = por %p57, %p58
    %s60 = ssub.s32 %s19, %s31
    %s61 = ssub.s32 %s20, %s27
    %s62 = sor.u32 %s60, %s61
    %p63 = scmp.eq.s32.totalorder %s62, 0
    %s65 = sadd.s32 %s64, 1
    %s66 = scalar_select %p63, %s64, %s65
    %p69 = pneg %p63
    %p70 = scmp.eq.s32.totalorder %s12, 3
    %p71 = por %p69, %p70
    %p72 = scmp.ne.s32.totalorder %s64, %s67
    %p73 = scmp.eq.s32.totalorder %s12, 0
    %p74 = por %p72, %p73
    %p75 = scmp.ne.s32.totalorder %s64, %s67
    %p76 = scmp.eq.s32.totalorder %s17, 3
    %p77 = por %p75, %p76
    %p78 = scmp.ne.s32.totalorder %s67, %s68
    %p79 = scmp.eq.s32.totalorder %s17, 0
    %p80 = por %p78, %p79
    %p81 = scmp.ne.s32.totalorder %s67, %s68
    %p82 = scmp.eq.s32.totalorder %s18, 3
    %p83 = por %p81, %p82
    %p85 = scmp.ne.s32.totalorder %s68, %s84
    %p86 = scmp.eq.s32.totalorder %s18, 0
    %p87 = por %p85, %p86
    %s88 = ssub.s32 %s19, %s31
    %s89 = ssub.s32 %s20, %s27
    %s90 = sor.u32 %s88, %s89
    %p91 = scmp.eq.s32.totalorder %s90, 0
    %s93 = sadd.s32 %s92, 1
    %s94 = scalar_select %p91, %s92, %s93
    %p97 = pneg %p91
    %p98 = scmp.eq.s32.totalorder %s12, 3
    %p99 = por %p97, %p98
    %p100 = scmp.ne.s32.totalorder %s92, %s95
    %p101 = scmp.eq.s32.totalorder %s12, 0
    %p102 = por %p100, %p101
    %p103 = scmp.ne.s32.totalorder %s92, %s95
    %p104 = scmp.eq.s32.totalorder %s17, 3
    %p105 = por %p103, %p104
    %p106 = scmp.ne.s32.totalorder %s95, %s96
    %p107 = scmp.eq.s32.totalorder %s17, 0
    %p108 = por %p106, %p107
    %p109 = scmp.ne.s32.totalorder %s95, %s96
    %p110 = scmp.eq.s32.totalorder %s18, 3
    %p111 = por %p109, %p110
    %p113 = scmp.ne.s32.totalorder %s96, %s112
    %p114 = scmp.eq.s32.totalorder %s18, 0
    %p115 = por %p113, %p114
    %s117 = sadd.s32 %s116, 1
    %p120 = scmp.eq.s32.totalorder %s12, 3
    %p121 = scmp.ne.s32.totalorder %s116, %s118
    %p122 = scmp.eq.s32.totalorder %s12, 0
    %p123 = por %p121, %p122
    %p124 = scmp.ne.s32.totalorder %s116, %s118
    %p125 = scmp.eq.s32.totalorder %s17, 3
    %p126 = por %p124, %p125
    %p127 = scmp.ne.s32.totalorder %s118, %s119
    %p128 = scmp.eq.s32.totalorder %s17, 0
    %p129 = por %p127, %p128
    %p130 = scmp.ne.s32.totalorder %s118, %s119
    %p131 = scmp.eq.s32.totalorder %s18, 3
    %p132 = por %p130, %p131
    %p134 = scmp.ne.s32.totalorder %s119, %s133
    %p135 = scmp.eq.s32.totalorder %s18, 0
    %p136 = por %p134, %p135
    %s137 = ssub.s32 %s19, %s31
    %s138 = ssub.s32 %s20, %s27
    %s139 = sor.u32 %s137, %s138
    %p140 = scmp.eq.s32.totalorder %s139, 0
    %s142 = sadd.s32 %s141, 1
    %s143 = scalar_select %p140, %s141, %s142
    %p146 = pneg %p140
    %p147 = scmp.eq.s32.totalorder %s12, 3
    %p148 = por %p146, %p147
    %p149 = scmp.ne.s32.totalorder %s141, %s144
    %p150 = scmp.eq.s32.totalorder %s12, 0
    %p151 = por %p149, %p150
    %p152 = scmp.ne.s32.totalorder %s141, %s144
    %p153 = scmp.eq.s32.totalorder %s17, 3
    %p154 = por %p152, %p153
    %p155 = scmp.ne.s32.totalorder %s144, %s145
    %p156 = scmp.eq.s32.totalorder %s17, 0
    %p157 = por %p155, %p156
    %p158 = scmp.ne.s32.totalorder %s144, %s145
    %p159 = scmp.eq.s32.totalorder %s18, 3
    %p160 = por %p158, %p159
    %p162 = scmp.ne.s32.totalorder %s145, %s161
    %p163 = scmp.eq.s32.totalorder %s18, 0
    %p164 = por %p162, %p163
    %s165 = ssub.s32 %s19, %s31
    %s166 = ssub.s32 %s20, %s27
    %s167 = sor.u32 %s165, %s166
    %p168 = scmp.eq.s32.totalorder %s167, 0
    %s170 = sadd.s32 %s169, 1
    %s171 = scalar_select %p168, %s169, %s170
    %p174 = pneg %p168
    %p175 = scmp.eq.s32.totalorder %s12, 3
    %p176 = por %p174, %p175
    %p177 = scmp.ne.s32.totalorder %s169, %s172
    %p178 = scmp.eq.s32.totalorder %s12, 0
    %p179 = por %p177, %p178
    %p180 = scmp.ne.s32.totalorder %s169, %s172
    %p181 = scmp.eq.s32.totalorder %s17, 3
    %p182 = por %p180, %p181
    %p183 = scmp.ne.s32.totalorder %s172, %s173
    %p184 = scmp.eq.s32.totalorder %s17, 0
    %p185 = por %p183, %p184
    %p186 = scmp.ne.s32.totalorder %s172, %s173
    %p187 = scmp.eq.s32.totalorder %s18, 3
    %p188 = por %p186, %p187
    %p190 = scmp.ne.s32.totalorder %s173, %s189
    %p191 = scmp.eq.s32.totalorder %s18, 0
    %p192 = por %p190, %p191
    %p193 = scmp.le.s32.totalorder 1, %s12
    %p194 = scmp.lt.s32.totalorder %s12, 5
    %p195 = pnand %p193, %p194
    %p196 = pneg %p195
    // Predicated region
    $region9: #{contracting_block_forward.3} parent=5 // pred_check
      _
    $region10: #{contracting_block_forward.3} parent=5 // pred_check_branch
      %198 = sbr.rel (%p195) target = $region12
    $region11: #{contracting_block_forward.3} parent=5 // pred_region
      %s199 = ssub.s32 %s12, 1
      // Predicated region
      $region13: #{contracting_block_forward.3} parent=11 // pred_check
        %p200 = pneg %p129
      $region14: #{contracting_block_forward.3} parent=11 // pred_check_branch
        %202 = sbr.rel (%p200) target = $region16
      $region15: #{contracting_block_forward.3} parent=11 // pred_region
        _
      $region16: #{contracting_block_forward.3} parent=11 // pred_fallthru
        _
    $region12: #{contracting_block_forward.3} parent=5 // pred_fallthru
      _
    %p203 = scmp.lt.s32.totalorder %s12, 4
    // Predicated region
    $region17: #{contracting_block_forward.3} parent=5 // pred_check
      %p204 = pneg %p203
    $region18: #{contracting_block_forward.3} parent=5 // pred_check_branch
      %206 = sbr.rel (%p204) target = $region20
    $region19: #{contracting_block_forward.3} parent=5 // pred_region
      // Predicated region
      $region21: #{contracting_block_forward.3} parent=19 // pred_check
        %p207 = pneg %p46
      $region22: #{contracting_block_forward.3} parent=19 // pred_check_branch
        %209 = sbr.rel (%p207) target = $region24
      $region23: #{contracting_block_forward.3} parent=19 // pred_region
        %s210 = smul.u32 8, %s20
        %p211 = scmp.lt.s32.totalorder %s19, 1
        %s212 = scalar_select %p211, %s19, 1
        %p213 = scmp.lt.s32.totalorder %s210, 15
        %s214 = scalar_select %p213, %s210, 15
        %s215 = smul.addr %s214, 3
        %s216 = smul.addr %s212, 48
        %s217 = sadd.s32 %s215, %s216
        %s218 = smul.addr %s217, 4
        %s219 = scalar_lea.vmem %s0, %s218
        %s220 = smul.u32 8, %s20
      $region24: #{contracting_block_forward.3} parent=19 // pred_fallthru
        _
      // Predicated region
      $region25: #{contracting_block_forward.3} parent=19 // pred_check
        %p221 = pneg %p74
      $region26: #{contracting_block_forward.3} parent=19 // pred_check_branch
        %223 = sbr.rel (%p221) target = $region28
      $region27: #{contracting_block_forward.3} parent=19 // pred_region
        %s224 = smul.u32 8, %s20
        %p225 = scmp.lt.s32.totalorder %s19, 1
        %s226 = scalar_select %p225, %s19, 1
        %p227 = scmp.lt.s32.totalorder %s224, 15
        %s228 = scalar_select %p227, %s224, 15
        %s229 = smul.addr %s228, 3
        %s230 = smul.addr %s226, 48
        %s231 = sadd.s32 %s229, %s230
        %s232 = smul.addr %s231, 4
        %s233 = scalar_lea.vmem %s1, %s232
        %s234 = smul.u32 8, %s20
      $region28: #{contracting_block_forward.3} parent=19 // pred_fallthru
        _
      // Predicated region
      $region29: #{contracting_block_forward.3} parent=19 // pred_check
        %p235 = pneg %p102
      $region30: #{contracting_block_forward.3} parent=19 // pred_check_branch
        %237 = sbr.rel (%p235) target = $region32
      $region31: #{contracting_block_forward.3} parent=19 // pred_region
        %s238 = smul.u32 8, %s20
        %p239 = scmp.lt.s32.totalorder %s19, 1
        %s240 = scalar_select %p239, %s19, 1
        %p241 = scmp.lt.s32.totalorder %s238, 15
        %s242 = scalar_select %p241, %s238, 15
        %s243 = smul.addr %s242, 3
        %s244 = smul.addr %s240, 48
        %s245 = sadd.s32 %s243, %s244
        %s246 = smul.addr %s245, 4
        %s247 = scalar_lea.vmem %s2, %s246
        %s248 = smul.u32 8, %s20
      $region32: #{contracting_block_forward.3} parent=19 // pred_fallthru
        _
    $region20: #{contracting_block_forward.3} parent=5 // pred_fallthru
      _
    %p249 = scmp.le.s32.totalorder 1, %s12
    %p250 = scmp.lt.s32.totalorder %s12, 5
    %p251 = pnand %p249, %p250
    %p252 = pneg %p251
    // Predicated region
    $region33: #{contracting_block_forward.3} parent=5 // pred_check
      _
    $region34: #{contracting_block_forward.3} parent=5 // pred_check_branch
      %254 = sbr.rel (%p251) target = $region36
    $region35: #{contracting_block_forward.3} parent=5 // pred_region
      %s255 = ssub.s32 %s12, 1
      %s256 = smul.u32 8, %s22
      %p257 = scmp.lt.s32.totalorder %s21, 1
      %s258 = scalar_select %p257, %s21, 1
      %p259 = scmp.lt.s32.totalorder %s256, 15
      %s260 = scalar_select %p259, %s256, 15
      %s261 = smul.addr %s260, 3
      %s262 = smul.addr %s258, 48
      %s263 = sadd.s32 %s261, %s262
      %s264 = smul.addr %s263, 4
      %s265 = scalar_lea.vmem %s0, %s264
      %p266 = pneg %p52
      %p267 = pneg %p49
      %s268 = smul.u32 8, %s22
      %p269 = scmp.lt.s32.totalorder %s21, 1
      %s270 = scalar_select %p269, %s21, 1
      %p271 = scmp.lt.s32.totalorder %s268, 15
      %s272 = scalar_select %p271, %s268, 15
      %s273 = smul.addr %s272, 3
      %s274 = smul.addr %s270, 48
      %s275 = sadd.s32 %s273, %s274
      %s276 = smul.addr %s275, 4
      %s277 = scalar_lea.vmem %s1, %s276
      %p278 = pneg %p80
      %p279 = pneg %p77
      %s280 = smul.u32 8, %s22
      %p281 = scmp.lt.s32.totalorder %s21, 1
      %s282 = scalar_select %p281, %s21, 1
      %p283 = scmp.lt.s32.totalorder %s280, 15
      %s284 = scalar_select %p283, %s280, 15
      %s285 = smul.addr %s284, 3
      %s286 = smul.addr %s282, 48
      %s287 = sadd.s32 %s285, %s286
      %s288 = smul.addr %s287, 4
      %s289 = scalar_lea.vmem %s2, %s288
      %p290 = pneg %p108
      %p291 = pneg %p105
      %p292 = pneg %p129
      %p293 = pneg %p126
      %p294 = pneg %p157
      %p295 = pneg %p154
      %s296 = smul.u32 8, %s22
      %p297 = scmp.lt.s32.totalorder %s21, 1
      %s298 = scalar_select %p297, %s21, 1
      %p299 = scmp.lt.s32.totalorder %s296, 15
      %s300 = scalar_select %p299, %s296, 15
      %s301 = smul.addr %s300, 2
      %s302 = smul.addr %s298, 32
      %s303 = sadd.s32 %s301, %s302
      %s304 = smul.addr %s303, 8
      %s305 = scalar_lea.vmem %s4, %s304
      %p306 = pneg %p185
      %p307 = pneg %p182
      %p308 = scmp.lt.s32.totalorder %s21, 1
      %s309 = scalar_select %p308, %s21, 1
      %p310 = scmp.lt.s32.totalorder %s22, 1
      %s311 = scalar_select %p310, %s22, 1
      %s312 = smul.addr %s309, 2
      %s313 = sadd.s32 %s311, %s312
      %s314 = smul.addr %s313, 2
      %s315 = scalar_lea.vmem %s5, %s314
      %s316 = smul.u32 8, %s22
      %p317 = scmp.lt.s32.totalorder %s21, 1
      %s318 = scalar_select %p317, %s21, 1
      %p319 = scmp.lt.s32.totalorder %s316, 15
      %s320 = scalar_select %p319, %s316, 15
      %s321 = smul.addr %s320, 3
      %s322 = smul.addr %s318, 48
      %s323 = sadd.s32 %s321, %s322
      %s324 = smul.addr %s323, 4
      %s325 = scalar_lea.vmem %s0, %s324
      %s326 = smul.u32 8, %s22
      %s327 = smul.u32 8, %s22
      %p328 = scmp.lt.s32.totalorder %s21, 1
      %s329 = scalar_select %p328, %s21, 1
      %p330 = scmp.lt.s32.totalorder %s327, 15
      %s331 = scalar_select %p330, %s327, 15
      %s332 = smul.addr %s331, 3
      %s333 = smul.addr %s329, 48
      %s334 = sadd.s32 %s332, %s333
      %s335 = smul.addr %s334, 4
      %s336 = scalar_lea.vmem %s1, %s335
      %s337 = smul.u32 8, %s22
      %s338 = smul.u32 8, %s22
      %p339 = scmp.lt.s32.totalorder %s21, 1
      %s340 = scalar_select %p339, %s21, 1
      %p341 = scmp.lt.s32.totalorder %s338, 15
      %s342 = scalar_select %p341, %s338, 15
      %s343 = smul.addr %s342, 3
      %s344 = smul.addr %s340, 48
      %s345 = sadd.s32 %s343, %s344
      %s346 = smul.addr %s345, 4
      %s347 = scalar_lea.vmem %s2, %s346
      %s348 = smul.u32 8, %s22
      %s349 = smul.u32 8, %s22
      %p350 = scmp.lt.s32.totalorder %s21, 1
      %s351 = scalar_select %p350, %s21, 1
      %p352 = scmp.lt.s32.totalorder %s349, 15
      %s353 = scalar_select %p352, %s349, 15
      %s354 = smul.addr %s353, 2
      %s355 = smul.addr %s351, 32
      %s356 = sadd.s32 %s354, %s355
      %s357 = smul.addr %s356, 8
      %s358 = scalar_lea.vmem %s4, %s357
      %s359 = smul.u32 8, %s22
      %p360 = scmp.lt.s32.totalorder %s21, 1
      %s361 = scalar_select %p360, %s21, 1
      %p362 = scmp.lt.s32.totalorder %s22, 1
      %s363 = scalar_select %p362, %s22, 1
      %s364 = smul.addr %s361, 2
      %s365 = sadd.s32 %s363, %s364
      %s366 = smul.addr %s365, 2
      %s367 = scalar_lea.vmem %s5, %s366
      %v369 = vld [vmem:[%s325] sm:$0xf]
      %v370 = vld [vmem:[%s325 + $0x4] sm:$0xf]
      %v371 = vld [vmem:[%s325 + $0x8] sm:$0x1]
      %v372 = vld [vmem:[%s325 + $0xc] sm:$0xf]
      %v373 = vld [vmem:[%s325 + $0x10] sm:$0xf]
      %v374 = vld [vmem:[%s325 + $0x14] sm:$0x1]
      %v375 = vld [vmem:[%s325 + $0x18] sm:$0xf]
      %v376 = vld [vmem:[%s325 + $0x1c] sm:$0xf]
      %v377 = vld [vmem:[%s325 + $0x20] sm:$0x1]
      %v378 = vld [vmem:[%s325 + $0x24] sm:$0xf]
      %v379 = vld [vmem:[%s325 + $0x28] sm:$0xf]
      %v380 = vld [vmem:[%s325 + $0x2c] sm:$0x1]
      %v381 = vld [vmem:[%s325 + $0x30] sm:$0xf]
      %v382 = vld [vmem:[%s325 + $0x34] sm:$0xf]
      %v383 = vld [vmem:[%s325 + $0x38] sm:$0x1]
      %v384 = vld [vmem:[%s325 + $0x3c] sm:$0xf]
      %v385 = vld [vmem:[%s325 + $0x40] sm:$0xf]
      %v386 = vld [vmem:[%s325 + $0x44] sm:$0x1]
      %v387 = vld [vmem:[%s325 + $0x48] sm:$0xf]
      %v388 = vld [vmem:[%s325 + $0x4c] sm:$0xf]
      %v389 = vld [vmem:[%s325 + $0x50] sm:$0x1]
      %v390 = vld [vmem:[%s325 + $0x54] sm:$0xf]
      %v391 = vld [vmem:[%s325 + $0x58] sm:$0xf]
      %v392 = vld [vmem:[%s325 + $0x5c] sm:$0x1]
      %v393 = vld [vmem:[%s336] sm:$0xf]
      %v394 = vld [vmem:[%s336 + $0x4] sm:$0xf]
      %v395 = vld [vmem:[%s336 + $0x8] sm:$0x1]
      %v396 = vld [vmem:[%s336 + $0xc] sm:$0xf]
      %v397 = vld [vmem:[%s336 + $0x10] sm:$0xf]
      %v398 = vld [vmem:[%s336 + $0x14] sm:$0x1]
      %v399 = vld [vmem:[%s336 + $0x18] sm:$0xf]
      %v400 = vld [vmem:[%s336 + $0x1c] sm:$0xf]
      %v401 = vld [vmem:[%s336 + $0x20] sm:$0x1]
      %v402 = vld [vmem:[%s336 + $0x24] sm:$0xf]
      %v403 = vld [vmem:[%s336 + $0x28] sm:$0xf]
      %v404 = vld [vmem:[%s336 + $0x2c] sm:$0x1]
      %v405 = vld [vmem:[%s336 + $0x30] sm:$0xf]
      %v406 = vld [vmem:[%s336 + $0x34] sm:$0xf]
      %v407 = vld [vmem:[%s336 + $0x38] sm:$0x1]
      %v408 = vld [vmem:[%s336 + $0x3c] sm:$0xf]
      %v409 = vld [vmem:[%s336 + $0x40] sm:$0xf]
      %v410 = vld [vmem:[%s336 + $0x44] sm:$0x1]
      %v411 = vld [vmem:[%s336 + $0x48] sm:$0xf]
      %v412 = vld [vmem:[%s336 + $0x4c] sm:$0xf]
      %v413 = vld [vmem:[%s336 + $0x50] sm:$0x1]
      %v414 = vld [vmem:[%s336 + $0x54] sm:$0xf]
      %v415 = vld [vmem:[%s336 + $0x58] sm:$0xf]
      %v416 = vld [vmem:[%s336 + $0x5c] sm:$0x1]
      %v417 = vld [vmem:[%s347] sm:$0xf]
      %v418 = vld [vmem:[%s347 + $0x4] sm:$0xf]
      %v419 = vld [vmem:[%s347 + $0x8] sm:$0x1]
      %v420 = vld [vmem:[%s347 + $0xc] sm:$0xf]
      %v421 = vld [vmem:[%s347 + $0x10] sm:$0xf]
      %v422 = vld [vmem:[%s347 + $0x14] sm:$0x1]
      %v423 = vld [vmem:[%s347 + $0x18] sm:$0xf]
      %v424 = vld [vmem:[%s347 + $0x1c] sm:$0xf]
      %v425 = vld [vmem:[%s347 + $0x20] sm:$0x1]
      %v426 = vld [vmem:[%s347 + $0x24] sm:$0xf]
      %v427 = vld [vmem:[%s347 + $0x28] sm:$0xf]
      %v428 = vld [vmem:[%s347 + $0x2c] sm:$0x1]
      %v429 = vld [vmem:[%s347 + $0x30] sm:$0xf]
      %v430 = vld [vmem:[%s347 + $0x34] sm:$0xf]
      %v431 = vld [vmem:[%s347 + $0x38] sm:$0x1]
      %v432 = vld [vmem:[%s347 + $0x3c] sm:$0xf]
      %v433 = vld [vmem:[%s347 + $0x40] sm:$0xf]
      %v434 = vld [vmem:[%s347 + $0x44] sm:$0x1]
      %v435 = vld [vmem:[%s347 + $0x48] sm:$0xf]
      %v436 = vld [vmem:[%s347 + $0x4c] sm:$0xf]
      %v437 = vld [vmem:[%s347 + $0x50] sm:$0x1]
      %v438 = vld [vmem:[%s347 + $0x54] sm:$0xf]
      %v439 = vld [vmem:[%s347 + $0x58] sm:$0xf]
      %v440 = vld [vmem:[%s347 + $0x5c] sm:$0x1]
      %v441 = vld [vmem:[%s3] sm:$0xf]
      %v442 = vld [vmem:[%s3 + $0x4] sm:$0xf]
      %v443 = vld [vmem:[%s3 + $0x8] sm:$0xf]
      %v444 = vld [vmem:[%s3 + $0xc] sm:$0xf]
      %v445 = vld [vmem:[%s3 + $0x10] sm:$0xf]
      %v446 = vld [vmem:[%s3 + $0x14] sm:$0xf]
      %v447 = vld [vmem:[%s3 + $0x18] sm:$0xf]
      %v448 = vld [vmem:[%s3 + $0x1c] sm:$0xf]
      %v449 = vld [vmem:[%s3 + $0x20] sm:$0xf]
      %v450 = vld [vmem:[%s3 + $0x24] sm:$0xf]
      %v451 = vld [vmem:[%s3 + $0x28] sm:$0xf]
      %v452 = vld [vmem:[%s3 + $0x2c] sm:$0xf]
      %v453 = vld [vmem:[%s3 + $0x30] sm:$0xf]
      %v454 = vld [vmem:[%s3 + $0x34] sm:$0xf]
      %v455 = vld [vmem:[%s3 + $0x38] sm:$0xf]
      %v456 = vld [vmem:[%s3 + $0x3c] sm:$0xf]
      %vm457 = vsmask.f32 3328
      %vm458 = vsmask.f32 7440
      %vm459 = vmor %vm457, %vm458
      %v461 = vshrl.u32 %v369, 16
      %v463 = vrot.slane %v461, 4
      %v464 = vshll.u32 %v369, 16
      %v466 = vrot.slane %v464, 5
      %v467 = vor.u32 %v463, %v466
      %v468 = vrot.slane %v467, 4
      %v470 = vshll.u32 %v370, 16
      %v472 = vrot.slane %v470, 5
      %v473 = vsel %vm459, %v468, %v472
      %v474 = vshrl.u32 %v370, 16
      %v476 = vrot.slane %v474, 4
      %v477 = vor.u32 %v476, %v472
      %v478 = vrot.slane %v477, 4
      %v480 = vshll.u32 %v371, 16
      %v482 = vrot.slane %v480, 5
      %v483 = vsel %vm459, %v478, %v482
      %v485 = vshrl.u32 %v372, 16
      %v487 = vrot.slane %v485, 4
      %v488 = vshll.u32 %v372, 16
      %v490 = vrot.slane %v488, 5
      %v491 = vor.u32 %v487, %v490
      %v492 = vrot.slane %v491, 4
      %v494 = vshll.u32 %v373, 16
      %v496 = vrot.slane %v494, 5
      %v497 = vsel %vm459, %v492, %v496
      %v498 = vshrl.u32 %v373, 16
      %v500 = vrot.slane %v498, 4
      %v501 = vor.u32 %v500, %v496
      %v502 = vrot.slane %v501, 4
      %v504 = vshll.u32 %v374, 16
      %v506 = vrot.slane %v504, 5
      %v507 = vsel %vm459, %v502, %v506
      %v509 = vshrl.u32 %v375, 16
      %v511 = vrot.slane %v509, 4
      %v512 = vshll.u32 %v375, 16
      %v514 = vrot.slane %v512, 5
      %v515 = vor.u32 %v511, %v514
      %v516 = vrot.slane %v515, 4
      %v518 = vshll.u32 %v376, 16
      %v520 = vrot.slane %v518, 5
      %v521 = vsel %vm459, %v516, %v520
      %v522 = vshrl.u32 %v376, 16
      %v524 = vrot.slane %v522, 4
      %v525 = vor.u32 %v524, %v520
      %v526 = vrot.slane %v525, 4
      %v528 = vshll.u32 %v377, 16
      %v530 = vrot.slane %v528, 5
      %v531 = vsel %vm459, %v526, %v530
      %v533 = vshrl.u32 %v378, 16
      %v535 = vrot.slane %v533, 4
      %v536 = vshll.u32 %v378, 16
      %v538 = vrot.slane %v536, 5
      %v539 = vor.u32 %v535, %v538
      %v540 = vrot.slane %v539, 4
      %v542 = vshll.u32 %v379, 16
      %v544 = vrot.slane %v542, 5
      %v545 = vsel %vm459, %v540, %v544
      %v546 = vshrl.u32 %v379, 16
      %v548 = vrot.slane %v546, 4
      %v549 = vor.u32 %v548, %v544
      %v550 = vrot.slane %v549, 4
      %v552 = vshll.u32 %v380, 16
      %v554 = vrot.slane %v552, 5
      %v555 = vsel %vm459, %v550, %v554
      %v557 = vshrl.u32 %v381, 16
      %v559 = vrot.slane %v557, 4
      %v560 = vshll.u32 %v381, 16
      %v562 = vrot.slane %v560, 5
      %v563 = vor.u32 %v559, %v562
      %v564 = vrot.slane %v563, 4
      %v566 = vshll.u32 %v382, 16
      %v568 = vrot.slane %v566, 5
      %v569 = vsel %vm459, %v564, %v568
      %v570 = vshrl.u32 %v382, 16
      %v572 = vrot.slane %v570, 4
      %v573 = vor.u32 %v572, %v568
      %v574 = vrot.slane %v573, 4
      %v576 = vshll.u32 %v383, 16
      %v578 = vrot.slane %v576, 5
      %v579 = vsel %vm459, %v574, %v578
      %v581 = vshrl.u32 %v384, 16
      %v583 = vrot.slane %v581, 4
      %v584 = vshll.u32 %v384, 16
      %v586 = vrot.slane %v584, 5
      %v587 = vor.u32 %v583, %v586
      %v588 = vrot.slane %v587, 4
      %v590 = vshll.u32 %v385, 16
      %v592 = vrot.slane %v590, 5
      %v593 = vsel %vm459, %v588, %v592
      %v594 = vshrl.u32 %v385, 16
      %v596 = vrot.slane %v594, 4
      %v597 = vor.u32 %v596, %v592
      %v598 = vrot.slane %v597, 4
      %v600 = vshll.u32 %v386, 16
      %v602 = vrot.slane %v600, 5
      %v603 = vsel %vm459, %v598, %v602
      %v605 = vshrl.u32 %v387, 16
      %v607 = vrot.slane %v605, 4
      %v608 = vshll.u32 %v387, 16
      %v610 = vrot.slane %v608, 5
      %v611 = vor.u32 %v607, %v610
      %v612 = vrot.slane %v611, 4
      %v614 = vshll.u32 %v388, 16
      %v616 = vrot.slane %v614, 5
      %v617 = vsel %vm459, %v612, %v616
      %v618 = vshrl.u32 %v388, 16
      %v620 = vrot.slane %v618, 4
      %v621 = vor.u32 %v620, %v616
      %v622 = vrot.slane %v621, 4
      %v624 = vshll.u32 %v389, 16
      %v626 = vrot.slane %v624, 5
      %v627 = vsel %vm459, %v622, %v626
      %v629 = vshrl.u32 %v390, 16
      %v631 = vrot.slane %v629, 4
      %v632 = vshll.u32 %v390, 16
      %v634 = vrot.slane %v632, 5
      %v635 = vor.u32 %v631, %v634
      %v636 = vrot.slane %v635, 4
      %v638 = vshll.u32 %v391, 16
      %v640 = vrot.slane %v638, 5
      %v641 = vsel %vm459, %v636, %v640
      %v642 = vshrl.u32 %v391, 16
      %v644 = vrot.slane %v642, 4
      %v645 = vor.u32 %v644, %v640
      %v646 = vrot.slane %v645, 4
      %v648 = vshll.u32 %v392, 16
      %v650 = vrot.slane %v648, 5
      %v651 = vsel %vm459, %v646, %v650
      %s652 = scalar_lea.vmem %s3, 64
      %v653 = vld [vmem:[%s652] sm:$0xf]
      %v654 = vld [vmem:[%s652 + $0x4] sm:$0xf]
      %v655 = vld [vmem:[%s652 + $0x8] sm:$0xf]
      %v656 = vld [vmem:[%s652 + $0xc] sm:$0xf]
      %v657 = vld [vmem:[%s652 + $0x10] sm:$0xf]
      %v658 = vld [vmem:[%s652 + $0x14] sm:$0xf]
      %v659 = vld [vmem:[%s652 + $0x18] sm:$0xf]
      %v660 = vld [vmem:[%s652 + $0x1c] sm:$0xf]
      %v661 = vld [vmem:[%s652 + $0x20] sm:$0xf]
      %v662 = vld [vmem:[%s652 + $0x24] sm:$0xf]
      %v663 = vld [vmem:[%s652 + $0x28] sm:$0xf]
      %v664 = vld [vmem:[%s652 + $0x2c] sm:$0xf]
      %v665 = vld [vmem:[%s652 + $0x30] sm:$0xf]
      %v666 = vld [vmem:[%s652 + $0x34] sm:$0xf]
      %v667 = vld [vmem:[%s652 + $0x38] sm:$0xf]
      %v668 = vld [vmem:[%s652 + $0x3c] sm:$0xf]
      %v669 = vunpack.c.l.b16 %v473
      %v670 = vunpack.c.l.b16 %v483
      %v671 = vunpack.c.l.b16 %v497
      %v672 = vunpack.c.l.b16 %v507
      %v673 = vunpack.c.l.b16 %v521
      %v674 = vunpack.c.l.b16 %v531
      %v675 = vunpack.c.l.b16 %v545
      %v676 = vunpack.c.l.b16 %v555
      %v677 = vunpack.c.l.b16 %v569
      %v678 = vunpack.c.l.b16 %v579
      %v679 = vunpack.c.l.b16 %v593
      %v680 = vunpack.c.l.b16 %v603
      %v681 = vunpack.c.l.b16 %v617
      %v682 = vunpack.c.l.b16 %v627
      %v683 = vunpack.c.l.b16 %v641
      %v684 = vunpack.c.l.b16 %v651
      %v685 = vpack.c.b16 %v670, %v669
      %v686 = vpack.c.b16 %v672, %v671
      %v687 = vpack.c.b16 %v674, %v673
      %v688 = vpack.c.b16 %v676, %v675
      %v689 = vpack.c.b16 %v678, %v677
      %v690 = vpack.c.b16 %v680, %v679
      %v691 = vpack.c.b16 %v682, %v681
      %v692 = vpack.c.b16 %v684, %v683
      %v717 = vunpack.c.l.b16 %v653
      %v718 = vunpack.c.l.b16 %v654
      %v719 = vunpack.c.l.b16 %v655
      %v720 = vunpack.c.l.b16 %v656
      %v721 = vunpack.c.l.b16 %v657
      %v722 = vunpack.c.l.b16 %v658
      %v723 = vunpack.c.l.b16 %v659
      %v724 = vunpack.c.l.b16 %v660
      %v725 = vunpack.c.l.b16 %v661
      %v726 = vunpack.c.l.b16 %v662
      %v727 = vunpack.c.l.b16 %v663
      %v728 = vunpack.c.l.b16 %v664
      %v729 = vunpack.c.l.b16 %v665
      %v730 = vunpack.c.l.b16 %v666
      %v731 = vunpack.c.l.b16 %v667
      %v732 = vunpack.c.l.b16 %v668
      %v733 = vpack.c.b16 %v718, %v717
      %v734 = vpack.c.b16 %v720, %v719
      %v735 = vpack.c.b16 %v722, %v721
      %v736 = vpack.c.b16 %v724, %v723
      %v737 = vpack.c.b16 %v726, %v725
      %v738 = vpack.c.b16 %v728, %v727
      %v739 = vpack.c.b16 %v730, %v729
      %v740 = vpack.c.b16 %v732, %v731
      %749 = vmatprep.subr.bf16.mxu0 0
      %750 = vmatpush1.bf16.msra.mxu0 %v733
      %751 = vmatprep.subr.bf16.mxu0 0
      %752 = vmatpush1.bf16.msra.mxu0 %v734
      %753 = vmatprep.subr.bf16.mxu0 0
      %754 = vmatpush1.bf16.msra.mxu0 %v735
      %755 = vmatprep.subr.bf16.mxu0 0
      %756 = vmatpush1.bf16.msra.mxu0 %v736
      %757 = vmatprep.subr.bf16.mxu0 0
      %758 = vmatpush1.bf16.msra.mxu0 %v737
      %759 = vmatprep.subr.bf16.mxu0 0
      %760 = vmatpush1.bf16.msra.mxu0 %v738
      %761 = vmatprep.subr.bf16.mxu0 0
      %762 = vmatpush1.bf16.msra.mxu0 %v739
      %763 = vmatprep.subr.bf16.mxu0 0
      %764 = vmatpush1.bf16.msra.mxu0 %v740
      %765 = vmatprep.subr.bf16.mxu0 0
      %766 = vmatpush1.bf16.msra.mxu0 0
      %767 = vmatprep.subr.bf16.mxu0 0
      %768 = vmatpush1.bf16.msra.mxu0 0
      %769 = vmatprep.subr.bf16.mxu0 0
      %770 = vmatpush1.bf16.msra.mxu0 0
      %771 = vmatprep.subr.bf16.mxu0 0
      %772 = vmatpush1.bf16.msra.mxu0 0
      %773 = vmatprep.subr.bf16.mxu0 0
      %774 = vmatpush1.bf16.msra.mxu0 0
      %775 = vmatprep.subr.bf16.mxu0 0
      %776 = vmatpush1.bf16.msra.mxu0 0
      %777 = vmatprep.subr.bf16.mxu0 0
      %778 = vmatpush1.bf16.msra.mxu0 0
      %779 = vmatprep.subr.bf16.mxu0 0
      %780 = vmatpush1.bf16.msra.mxu0 0
      %781 = vmatprep.mubr.bf16.mxu0 0
      %782 = vmatmul.mubr.bf16.gmra.mrb[0].mxu0 %v685
      %v783 = vpop.f32.mrb[0].mxu0
      %v784 = vadd.f32 0.0, %v783
      %v785 = vpop.f32.mrb[0].mxu0
      %v786 = vpop.f32.mrb[0].mxu0
      %v787 = vadd.f32 0.0, %v786
      %v788 = vpop.f32.mrb[0].mxu0
      %789 = vmatprep.mubr.bf16.mxu0 0
      %790 = vmatmul.mubr.bf16.gmra.mrb[0].mxu0 %v686
      %v791 = vpop.f32.mrb[0].mxu0
      %v792 = vadd.f32 0.0, %v791
      %v793 = vpop.f32.mrb[0].mxu0
      %v794 = vpop.f32.mrb[0].mxu0
      %v795 = vadd.f32 0.0, %v794
      %v796 = vpop.f32.mrb[0].mxu0
      %797 = vmatprep.mubr.bf16.mxu0 0
      %798 = vmatmul.mubr.bf16.gmra.mrb[0].mxu0 %v687
      %v799 = vpop.f32.mrb[0].mxu0
      %v800 = vadd.f32 0.0, %v799
      %v801 = vpop.f32.mrb[0].mxu0
      %v802 = vpop.f32.mrb[0].mxu0
      %v803 = vadd.f32 0.0, %v802
      %v804 = vpop.f32.mrb[0].mxu0
      %805 = vmatprep.mubr.bf16.mxu0 0
      %806 = vmatmul.mubr.bf16.gmra.mrb[0].mxu0 %v688
      %v807 = vpop.f32.mrb[0].mxu0
      %v808 = vadd.f32 0.0, %v807
      %v809 = vpop.f32.mrb[0].mxu0
      %v810 = vpop.f32.mrb[0].mxu0
      %v811 = vadd.f32 0.0, %v810
      %v812 = vpop.f32.mrb[0].mxu0
      %813 = vmatprep.mubr.bf16.mxu0 0
      %814 = vmatmul.mubr.bf16.gmra.mrb[0].mxu0 %v689
      %v815 = vpop.f32.mrb[0].mxu0
      %v816 = vadd.f32 0.0, %v815
      %v817 = vpop.f32.mrb[0].mxu0
      %v818 = vpop.f32.mrb[0].mxu0
      %v819 = vadd.f32 0.0, %v818
      %v820 = vpop.f32.mrb[0].mxu0
      %821 = vmatprep.mubr.bf16.mxu0 0
      %822 = vmatmul.mubr.bf16.gmra.mrb[0].mxu0 %v690
      %v823 = vpop.f32.mrb[0].mxu0
      %v824 = vadd.f32 0.0, %v823
      %v825 = vpop.f32.mrb[0].mxu0
      %v826 = vpop.f32.mrb[0].mxu0
      %v827 = vadd.f32 0.0, %v826
      %v828 = vpop.f32.mrb[0].mxu0
      %829 = vmatprep.mubr.bf16.mxu0 0
      %830 = vmatmul.mubr.bf16.gmra.mrb[0].mxu0 %v691
      %v831 = vpop.f32.mrb[0].mxu0
      %v832 = vadd.f32 0.0, %v831
      %v833 = vpop.f32.mrb[0].mxu0
      %v834 = vpop.f32.mrb[0].mxu0
      %v835 = vadd.f32 0.0, %v834
      %v836 = vpop.f32.mrb[0].mxu0
      %837 = vmatprep.mubr.bf16.mxu0 0
      %838 = vmatmul.mubr.bf16.gmra.mrb[0].mxu0 %v692
      %v839 = vpop.f32.mrb[0].mxu0
      %v840 = vadd.f32 0.0, %v839
      %v841 = vpop.f32.mrb[0].mxu0
      %v842 = vpop.f32.mrb[0].mxu0
      %v843 = vadd.f32 0.0, %v842
      %v844 = vpop.f32.mrb[0].mxu0
      %845 = vdwg.mxu0
      %v862 = vunpack.c.l.b16 %v369
      %v863 = vunpack.c.l.b16 %v370
      %v864 = vunpack.c.l.b16 %v372
      %v865 = vunpack.c.l.b16 %v373
      %v866 = vunpack.c.l.b16 %v375
      %v867 = vunpack.c.l.b16 %v376
      %v868 = vunpack.c.l.b16 %v378
      %v869 = vunpack.c.l.b16 %v379
      %v870 = vunpack.c.l.b16 %v381
      %v871 = vunpack.c.l.b16 %v382
      %v872 = vunpack.c.l.b16 %v384
      %v873 = vunpack.c.l.b16 %v385
      %v874 = vunpack.c.l.b16 %v387
      %v875 = vunpack.c.l.b16 %v388
      %v876 = vunpack.c.l.b16 %v390
      %v877 = vunpack.c.l.b16 %v391
      %v878 = vpack.c.b16 %v863, %v862
      %v879 = vpack.c.b16 %v865, %v864
      %v880 = vpack.c.b16 %v867, %v866
      %v881 = vpack.c.b16 %v869, %v868
      %v882 = vpack.c.b16 %v871, %v870
      %v883 = vpack.c.b16 %v873, %v872
      %v884 = vpack.c.b16 %v875, %v874
      %v885 = vpack.c.b16 %v877, %v876
      %v910 = vunpack.c.l.b16 %v441
      %v911 = vunpack.c.l.b16 %v442
      %v912 = vunpack.c.l.b16 %v443
      %v913 = vunpack.c.l.b16 %v444
      %v914 = vunpack.c.l.b16 %v445
      %v915 = vunpack.c.l.b16 %v446
      %v916 = vunpack.c.l.b16 %v447
      %v917 = vunpack.c.l.b16 %v448
      %v918 = vunpack.c.l.b16 %v449
      %v919 = vunpack.c.l.b16 %v450
      %v920 = vunpack.c.l.b16 %v451
      %v921 = vunpack.c.l.b16 %v452
      %v922 = vunpack.c.l.b16 %v453
      %v923 = vunpack.c.l.b16 %v454
      %v924 = vunpack.c.l.b16 %v455
      %v925 = vunpack.c.l.b16 %v456
      %v926 = vpack.c.b16 %v911, %v910
      %v927 = vpack.c.b16 %v913, %v912
      %v928 = vpack.c.b16 %v915, %v914
      %v929 = vpack.c.b16 %v917, %v916
      %v930 = vpack.c.b16 %v919, %v918
      %v931 = vpack.c.b16 %v921, %v920
      %v932 = vpack.c.b16 %v923, %v922
      %v933 = vpack.c.b16 %v925, %v924
      %942 = vmatprep.subr.bf16.mxu0 0
      %943 = vmatpush1.bf16.msra.mxu0 %v926
      %944 = vmatprep.subr.bf16.mxu0 0
      %945 = vmatpush1.bf16.msra.mxu0 %v927
      %946 = vmatprep.subr.bf16.mxu0 0
      %947 = vmatpush1.bf16.msra.mxu0 %v928
      %948 = vmatprep.subr.bf16.mxu0 0
      %949 = vmatpush1.bf16.msra.mxu0 %v929
      %950 = vmatprep.subr.bf16.mxu0 0
      %951 = vmatpush1.bf16.msra.mxu0 %v930
      %952 = vmatprep.subr.bf16.mxu0 0
      %953 = vmatpush1.bf16.msra.mxu0 %v931
      %954 = vmatprep.subr.bf16.mxu0 0
      %955 = vmatpush1.bf16.msra.mxu0 %v932
      %956 = vmatprep.subr.bf16.mxu0 0
      %957 = vmatpush1.bf16.msra.mxu0 %v933
      %958 = vmatprep.subr.bf16.mxu0 0
      %959 = vmatpush1.bf16.msra.mxu0 0
      %960 = vmatprep.subr.bf16.mxu0 0
      %961 = vmatpush1.bf16.msra.mxu0 0
      %962 = vmatprep.subr.bf16.mxu0 0
      %963 = vmatpush1.bf16.msra.mxu0 0
      %964 = vmatprep.subr.bf16.mxu0 0
      %965 = vmatpush1.bf16.msra.mxu0 0
      %966 = vmatprep.subr.bf16.mxu0 0
      %967 = vmatpush1.bf16.msra.mxu0 0
      %968 = vmatprep.subr.bf16.mxu0 0
      %969 = vmatpush1.bf16.msra.mxu0 0
      %970 = vmatprep.subr.bf16.mxu0 0
      %971 = vmatpush1.bf16.msra.mxu0 0
      %972 = vmatprep.subr.bf16.mxu0 0
      %973 = vmatpush1.bf16.msra.mxu0 0
      %974 = vmatprep.mubr.bf16.mxu0 0
      %975 = vmatmul.mubr.bf16.gmra.mrb[0].mxu0 %v878
      %v976 = vpop.f32.mrb[0].mxu0
      %v977 = vadd.f32 %v784, %v976
      %v978 = vpop.f32.mrb[0].mxu0
      %v979 = vpop.f32.mrb[0].mxu0
      %v980 = vadd.f32 %v787, %v979
      %v981 = vpop.f32.mrb[0].mxu0
      %982 = vmatprep.mubr.bf16.mxu0 0
      %983 = vmatmul.mubr.bf16.gmra.mrb[0].mxu0 %v879
      %v984 = vpop.f32.mrb[0].mxu0
      %v985 = vadd.f32 %v792, %v984
      %v986 = vpop.f32.mrb[0].mxu0
      %v987 = vpop.f32.mrb[0].mxu0
      %v988 = vadd.f32 %v795, %v987
      %v989 = vpop.f32.mrb[0].mxu0
      %990 = vmatprep.mubr.bf16.mxu0 0
      %991 = vmatmul.mubr.bf16.gmra.mrb[0].mxu0 %v880
      %v992 = vpop.f32.mrb[0].mxu0
      %v993 = vadd.f32 %v800, %v992
      %v994 = vpop.f32.mrb[0].mxu0
      %v995 = vpop.f32.mrb[0].mxu0
      %v996 = vadd.f32 %v803, %v995
      %v997 = vpop.f32.mrb[0].mxu0
      %998 = vmatprep.mubr.bf16.mxu0 0
      %999 = vmatmul.mubr.bf16.gmra.mrb[0].mxu0 %v881
      %v1000 = vpop.f32.mrb[0].mxu0
      %v1001 = vadd.f32 %v808, %v1000
      %v1002 = vpop.f32.mrb[0].mxu0
      %v1003 = vpop.f32.mrb[0].mxu0
      %v1004 = vadd.f32 %v811, %v1003
      %v1005 = vpop.f32.mrb[0].mxu0
      %1006 = vmatprep.mubr.bf16.mxu0 0
      %1007 = vmatmul.mubr.bf16.gmra.mrb[0].mxu0 %v882
      %v1008 = vpop.f32.mrb[0].mxu0
      %v1009 = vadd.f32 %v816, %v1008
      %v1010 = vpop.f32.mrb[0].mxu0
      %v1011 = vpop.f32.mrb[0].mxu0
      %v1012 = vadd.f32 %v819, %v1011
      %v1013 = vpop.f32.mrb[0].mxu0
      %1014 = vmatprep.mubr.bf16.mxu0 0
      %1015 = vmatmul.mubr.bf16.gmra.mrb[0].mxu0 %v883
      %v1016 = vpop.f32.mrb[0].mxu0
      %v1017 = vadd.f32 %v824, %v1016
      %v1018 = vpop.f32.mrb[0].mxu0
      %v1019 = vpop.f32.mrb[0].mxu0
      %v1020 = vadd.f32 %v827, %v1019
      %v1021 = vpop.f32.mrb[0].mxu0
      %1022 = vmatprep.mubr.bf16.mxu0 0
      %1023 = vmatmul.mubr.bf16.gmra.mrb[0].mxu0 %v884
      %v1024 = vpop.f32.mrb[0].mxu0
      %v1025 = vadd.f32 %v832, %v1024
      %v1026 = vpop.f32.mrb[0].mxu0
      %v1027 = vpop.f32.mrb[0].mxu0
      %v1028 = vadd.f32 %v835, %v1027
      %v1029 = vpop.f32.mrb[0].mxu0
      %1030 = vmatprep.mubr.bf16.mxu0 0
      %1031 = vmatmul.mubr.bf16.gmra.mrb[0].mxu0 %v885
      %v1032 = vpop.f32.mrb[0].mxu0
      %v1033 = vadd.f32 %v840, %v1032
      %v1034 = vpop.f32.mrb[0].mxu0
      %v1035 = vpop.f32.mrb[0].mxu0
      %v1036 = vadd.f32 %v843, %v1035
      %v1037 = vpop.f32.mrb[0].mxu0
      %1038 = vdwg.mxu0
      %vm1047 = vcmask 1042432
      %vm1048 = vcmask 1046532
      %vm1049 = vmor %vm1047, %vm1048
      %v1050 = vrot.slane %v369, 5
      %v1051 = vrot.slane %v1050, 4
      %v1052 = vrot.slane %v370, 5
      %v1053 = vsel %vm1049, %v1051, %v1052
      %v1054 = vrot.slane %v1052, 4
      %v1055 = vrot.slane %v371, 5
      %v1056 = vsel %vm1049, %v1054, %v1055
      %v1057 = vrot.slane %v372, 5
      %v1058 = vrot.slane %v1057, 4
      %v1059 = vrot.slane %v373, 5
      %v1060 = vsel %vm1049, %v1058, %v1059
      %v1061 = vrot.slane %v1059, 4
      %v1062 = vrot.slane %v374, 5
      %v1063 = vsel %vm1049, %v1061, %v1062
      %v1064 = vrot.slane %v375, 5
      %v1065 = vrot.slane %v1064, 4
      %v1066 = vrot.slane %v376, 5
      %v1067 = vsel %vm1049, %v1065, %v1066
      %v1068 = vrot.slane %v1066, 4
      %v1069 = vrot.slane %v377, 5
      %v1070 = vsel %vm1049, %v1068, %v1069
      %v1071 = vrot.slane %v378, 5
      %v1072 = vrot.slane %v1071, 4
      %v1073 = vrot.slane %v379, 5
      %v1074 = vsel %vm1049, %v1072, %v1073
      %v1075 = vrot.slane %v1073, 4
      %v1076 = vrot.slane %v380, 5
      %v1077 = vsel %vm1049, %v1075, %v1076
      %v1078 = vrot.slane %v381, 5
      %v1079 = vrot.slane %v1078, 4
      %v1080 = vrot.slane %v382, 5
      %v1081 = vsel %vm1049, %v1079, %v1080
      %v1082 = vrot.slane %v1080, 4
      %v1083 = vrot.slane %v383, 5
      %v1084 = vsel %vm1049, %v1082, %v1083
      %v1085 = vrot.slane %v384, 5
      %v1086 = vrot.slane %v1085, 4
      %v1087 = vrot.slane %v385, 5
      %v1088 = vsel %vm1049, %v1086, %v1087
      %v1089 = vrot.slane %v1087, 4
      %v1090 = vrot.slane %v386, 5
      %v1091 = vsel %vm1049, %v1089, %v1090
      %v1092 = vrot.slane %v387, 5
      %v1093 = vrot.slane %v1092, 4
      %v1094 = vrot.slane %v388, 5
      %v1095 = vsel %vm1049, %v1093, %v1094
      %v1096 = vrot.slane %v1094, 4
      %v1097 = vrot.slane %v389, 5
      %v1098 = vsel %vm1049, %v1096, %v1097
      %v1099 = vrot.slane %v390, 5
      %v1100 = vrot.slane %v1099, 4
      %v1101 = vrot.slane %v391, 5
      %v1102 = vsel %vm1049, %v1100, %v1101
      %v1103 = vrot.slane %v1101, 4
      %v1104 = vrot.slane %v392, 5
      %v1105 = vsel %vm1049, %v1103, %v1104
      %s1106 = scalar_lea.vmem %s3, 128
      %v1107 = vld [vmem:[%s1106] sm:$0xf]
      %v1108 = vld [vmem:[%s1106 + $0x4] sm:$0xf]
      %v1109 = vld [vmem:[%s1106 + $0x8] sm:$0xf]
      %v1110 = vld [vmem:[%s1106 + $0xc] sm:$0xf]
      %v1111 = vld [vmem:[%s1106 + $0x10] sm:$0xf]
      %v1112 = vld [vmem:[%s1106 + $0x14] sm:$0xf]
      %v1113 = vld [vmem:[%s1106 + $0x18] sm:$0xf]
      %v1114 = vld [vmem:[%s1106 + $0x1c] sm:$0xf]
      %v1115 = vld [vmem:[%s1106 + $0x20] sm:$0xf]
      %v1116 = vld [vmem:[%s1106 + $0x24] sm:$0xf]
      %v1117 = vld [vmem:[%s1106 + $0x28] sm:$0xf]
      %v1118 = vld [vmem:[%s1106 + $0x2c] sm:$0xf]
      %v1119 = vld [vmem:[%s1106 + $0x30] sm:$0xf]
      %v1120 = vld [vmem:[%s1106 + $0x34] sm:$0xf]
      %v1121 = vld [vmem:[%s1106 + $0x38] sm:$0xf]
      %v1122 = vld [vmem:[%s1106 + $0x3c] sm:$0xf]
      %v1123 = vunpack.c.l.b16 %v1053
      %v1124 = vunpack.c.l.b16 %v1056
      %v1125 = vunpack.c.l.b16 %v1060
      %v1126 = vunpack.c.l.b16 %v1063
      %v1127 = vunpack.c.l.b16 %v1067
      %v1128 = vunpack.c.l.b16 %v1070
      %v1129 = vunpack.c.l.b16 %v1074
      %v1130 = vunpack.c.l.b16 %v1077
      %v1131 = vunpack.c.l.b16 %v1081
      %v1132 = vunpack.c.l.b16 %v1084
      %v1133 = vunpack.c.l.b16 %v1088
      %v1134 = vunpack.c.l.b16 %v1091
      %v1135 = vunpack.c.l.b16 %v1095
      %v1136 = vunpack.c.l.b16 %v1098
      %v1137 = vunpack.c.l.b16 %v1102
      %v1138 = vunpack.c.l.b16 %v1105
      %v1139 = vpack.c.b16 %v1124, %v1123
      %v1140 = vpack.c.b16 %v1126, %v1125
      %v1141 = vpack.c.b16 %v1128, %v1127
      %v1142 = vpack.c.b16 %v1130, %v1129
      %v1143 = vpack.c.b16 %v1132, %v1131
      %v1144 = vpack.c.b16 %v1134, %v1133
      %v1145 = vpack.c.b16 %v1136, %v1135
      %v1146 = vpack.c.b16 %v1138, %v1137
      %v1171 = vunpack.c.l.b16 %v1107
      %v1172 = vunpack.c.l.b16 %v1108
      %v1173 = vunpack.c.l.b16 %v1109
      %v1174 = vunpack.c.l.b16 %v1110
      %v1175 = vunpack.c.l.b16 %v1111
      %v1176 = vunpack.c.l.b16 %v1112
      %v1177 = vunpack.c.l.b16 %v1113
      %v1178 = vunpack.c.l.b16 %v1114
      %v1179 = vunpack.c.l.b16 %v1115
      %v1180 = vunpack.c.l.b16 %v1116
      %v1181 = vunpack.c.l.b16 %v1117
      %v1182 = vunpack.c.l.b16 %v1118
      %v1183 = vunpack.c.l.b16 %v1119
      %v1184 = vunpack.c.l.b16 %v1120
      %v1185 = vunpack.c.l.b16 %v1121
      %v1186 = vunpack.c.l.b16 %v1122
      %v1187 = vpack.c.b16 %v1172, %v1171
      %v1188 = vpack.c.b16 %v1174, %v1173
      %v1189 = vpack.c.b16 %v1176, %v1175
      %v1190 = vpack.c.b16 %v1178, %v1177
      %v1191 = vpack.c.b16 %v1180, %v1179
      %v1192 = vpack.c.b16 %v1182, %v1181
      %v1193 = vpack.c.b16 %v1184, %v1183
      %v1194 = vpack.c.b16 %v1186, %v1185
      %1203 = vmatprep.subr.bf16.mxu0 0
      %1204 = vmatpush1.bf16.msra.mxu0 %v1187
      %1205 = vmatprep.subr.bf16.mxu0 0
      %1206 = vmatpush1.bf16.msra.mxu0 %v1188
      %1207 = vmatprep.subr.bf16.mxu0 0
      %1208 = vmatpush1.bf16.msra.mxu0 %v1189
      %1209 = vmatprep.subr.bf16.mxu0 0
      %1210 = vmatpush1.bf16.msra.mxu0 %v1190
      %1211 = vmatprep.subr.bf16.mxu0 0
      %1212 = vmatpush1.bf16.msra.mxu0 %v1191
      %1213 = vmatprep.subr.bf16.mxu0 0
      %1214 = vmatpush1.bf16.msra.mxu0 %v1192
      %1215 = vmatprep.subr.bf16.mxu0 0
      %1216 = vmatpush1.bf16.msra.mxu0 %v1193
      %1217 = vmatprep.subr.bf16.mxu0 0
      %1218 = vmatpush1.bf16.msra.mxu0 %v1194
      %1219 = vmatprep.subr.bf16.mxu0 0
      %1220 = vmatpush1.bf16.msra.mxu0 0
      %1221 = vmatprep.subr.bf16.mxu0 0
      %1222 = vmatpush1.bf16.msra.mxu0 0
      %1223 = vmatprep.subr.bf16.mxu0 0
      %1224 = vmatpush1.bf16.msra.mxu0 0
      %1225 = vmatprep.subr.bf16.mxu0 0
      %1226 = vmatpush1.bf16.msra.mxu0 0
      %1227 = vmatprep.subr.bf16.mxu0 0
      %1228 = vmatpush1.bf16.msra.mxu0 0
      %1229 = vmatprep.subr.bf16.mxu0 0
      %1230 = vmatpush1.bf16.msra.mxu0 0
      %1231 = vmatprep.subr.bf16.mxu0 0
      %1232 = vmatpush1.bf16.msra.mxu0 0
      %1233 = vmatprep.subr.bf16.mxu0 0
      %1234 = vmatpush1.bf16.msra.mxu0 0
      %1235 = vmatprep.mubr.bf16.mxu0 0
      %1236 = vmatmul.mubr.bf16.gmra.mrb[0].mxu0 %v1139
      %v1237 = vpop.f32.mrb[0].mxu0
      %v1238 = vadd.f32 0.0, %v1237
      %v1239 = vpop.f32.mrb[0].mxu0
      %v1240 = vpop.f32.mrb[0].mxu0
      %v1241 = vadd.f32 0.0, %v1240
      %v1242 = vpop.f32.mrb[0].mxu0
      %1243 = vmatprep.mubr.bf16.mxu0 0
      %1244 = vmatmul.mubr.bf16.gmra.mrb[0].mxu0 %v1140
      %v1245 = vpop.f32.mrb[0].mxu0
      %v1246 = vadd.f32 0.0, %v1245
      %v1247 = vpop.f32.mrb[0].mxu0
      %v1248 = vpop.f32.mrb[0].mxu0
      %v1249 = vadd.f32 0.0, %v1248
      %v1250 = vpop.f32.mrb[0].mxu0
      %1251 = vmatprep.mubr.bf16.mxu0 0
      %1252 = vmatmul.mubr.bf16.gmra.mrb[0].mxu0 %v1141
      %v1253 = vpop.f32.mrb[0].mxu0
      %v1254 = vadd.f32 0.0, %v1253
      %v1255 = vpop.f32.mrb[0].mxu0
      %v1256 = vpop.f32.mrb[0].mxu0
      %v1257 = vadd.f32 0.0, %v1256
      %v1258 = vpop.f32.mrb[0].mxu0
      %1259 = vmatprep.mubr.bf16.mxu0 0
      %1260 = vmatmul.mubr.bf16.gmra.mrb[0].mxu0 %v1142
      %v1261 = vpop.f32.mrb[0].mxu0
      %v1262 = vadd.f32 0.0, %v1261
      %v1263 = vpop.f32.mrb[0].mxu0
      %v1264 = vpop.f32.mrb[0].mxu0
      %v1265 = vadd.f32 0.0, %v1264
      %v1266 = vpop.f32.mrb[0].mxu0
      %1267 = vmatprep.mubr.bf16.mxu0 0
      %1268 = vmatmul.mubr.bf16.gmra.mrb[0].mxu0 %v1143
      %v1269 = vpop.f32.mrb[0].mxu0
      %v1270 = vadd.f32 0.0, %v1269
      %v1271 = vpop.f32.mrb[0].mxu0
      %v1272 = vpop.f32.mrb[0].mxu0
      %v1273 = vadd.f32 0.0, %v1272
      %v1274 = vpop.f32.mrb[0].mxu0
      %1275 = vmatprep.mubr.bf16.mxu0 0
      %1276 = vmatmul.mubr.bf16.gmra.mrb[0].mxu0 %v1144
      %v1277 = vpop.f32.mrb[0].mxu0
      %v1278 = vadd.f32 0.0, %v1277
      %v1279 = vpop.f32.mrb[0].mxu0
      %v1280 = vpop.f32.mrb[0].mxu0
      %v1281 = vadd.f32 0.0, %v1280
      %v1282 = vpop.f32.mrb[0].mxu0
      %1283 = vmatprep.mubr.bf16.mxu0 0
      %1284 = vmatmul.mubr.bf16.gmra.mrb[0].mxu0 %v1145
      %v1285 = vpop.f32.mrb[0].mxu0
      %v1286 = vadd.f32 0.0, %v1285
      %v1287 = vpop.f32.mrb[0].mxu0
      %v1288 = vpop.f32.mrb[0].mxu0
      %v1289 = vadd.f32 0.0, %v1288
      %v1290 = vpop.f32.mrb[0].mxu0
      %1291 = vmatprep.mubr.bf16.mxu0 0
      %1292 = vmatmul.mubr.bf16.gmra.mrb[0].mxu0 %v1146
      %v1293 = vpop.f32.mrb[0].mxu0
      %v1294 = vadd.f32 0.0, %v1293
      %v1295 = vpop.f32.mrb[0].mxu0
      %v1296 = vpop.f32.mrb[0].mxu0
      %v1297 = vadd.f32 0.0, %v1296
      %v1298 = vpop.f32.mrb[0].mxu0
      %1299 = vdwg.mxu0
      %v1300 = vadd.f32 %v977, %v1238
      %v1301 = vadd.f32 %v980, %v1241
      %v1302 = vadd.f32 %v985, %v1246
      %v1303 = vadd.f32 %v988, %v1249
      %v1304 = vadd.f32 %v993, %v1254
      %v1305 = vadd.f32 %v996, %v1257
      %v1306 = vadd.f32 %v1001, %v1262
      %v1307 = vadd.f32 %v1004, %v1265
      %v1308 = vadd.f32 %v1009, %v1270
      %v1309 = vadd.f32 %v1012, %v1273
      %v1310 = vadd.f32 %v1017, %v1278
      %v1311 = vadd.f32 %v1020, %v1281
      %v1312 = vadd.f32 %v1025, %v1286
      %v1313 = vadd.f32 %v1028, %v1289
      %v1314 = vadd.f32 %v1033, %v1294
      %v1315 = vadd.f32 %v1036, %v1297
      %s1316 = scalar_lea.vmem %s3, 192
      %v1317 = vld [vmem:[%s1316] sm:$0xf]
      %v1318 = vld [vmem:[%s1316 + $0x4] sm:$0xf]
      %v1319 = vld [vmem:[%s1316 + $0x8] sm:$0xf]
      %v1320 = vld [vmem:[%s1316 + $0xc] sm:$0xf]
      %v1321 = vld [vmem:[%s1316 + $0x10] sm:$0xf]
      %v1322 = vld [vmem:[%s1316 + $0x14] sm:$0xf]
      %v1323 = vld [vmem:[%s1316 + $0x18] sm:$0xf]
      %v1324 = vld [vmem:[%s1316 + $0x1c] sm:$0xf]
      %v1325 = vld [vmem:[%s1316 + $0x20] sm:$0xf]
      %v1326 = vld [vmem:[%s1316 + $0x24] sm:$0xf]
      %v1327 = vld [vmem:[%s1316 + $0x28] sm:$0xf]
      %v1328 = vld [vmem:[%s1316 + $0x2c] sm:$0xf]
      %v1329 = vld [vmem:[%s1316 + $0x30] sm:$0xf]
      %v1330 = vld [vmem:[%s1316 + $0x34] sm:$0xf]
      %v1331 = vld [vmem:[%s1316 + $0x38] sm:$0xf]
      %v1332 = vld [vmem:[%s1316 + $0x3c] sm:$0xf]
      %v1349 = vunpack.c.l.b16 %v393
      %v1350 = vunpack.c.l.b16 %v394
      %v1351 = vunpack.c.l.b16 %v396
      %v1352 = vunpack.c.l.b16 %v397
      %v1353 = vunpack.c.l.b16 %v399
      %v1354 = vunpack.c.l.b16 %v400
      %v1355 = vunpack.c.l.b16 %v402
      %v1356 = vunpack.c.l.b16 %v403
      %v1357 = vunpack.c.l.b16 %v405
      %v1358 = vunpack.c.l.b16 %v406
      %v1359 = vunpack.c.l.b16 %v408
      %v1360 = vunpack.c.l.b16 %v409
      %v1361 = vunpack.c.l.b16 %v411
      %v1362 = vunpack.c.l.b16 %v412
      %v1363 = vunpack.c.l.b16 %v414
      %v1364 = vunpack.c.l.b16 %v415
      %v1365 = vpack.c.b16 %v1350, %v1349
      %v1366 = vpack.c.b16 %v1352, %v1351
      %v1367 = vpack.c.b16 %v1354, %v1353
      %v1368 = vpack.c.b16 %v1356, %v1355
      %v1369 = vpack.c.b16 %v1358, %v1357
      %v1370 = vpack.c.b16 %v1360, %v1359
      %v1371 = vpack.c.b16 %v1362, %v1361
      %v1372 = vpack.c.b16 %v1364, %v1363
      %v1397 = vunpack.c.l.b16 %v1317
      %v1398 = vunpack.c.l.b16 %v1318
      %v1399 = vunpack.c.l.b16 %v1319
      %v1400 = vunpack.c.l.b16 %v1320
      %v1401 = vunpack.c.l.b16 %v1321
      %v1402 = vunpack.c.l.b16 %v1322
      %v1403 = vunpack.c.l.b16 %v1323
      %v1404 = vunpack.c.l.b16 %v1324
      %v1405 = vunpack.c.l.b16 %v1325
      %v1406 = vunpack.c.l.b16 %v1326
      %v1407 = vunpack.c.l.b16 %v1327
      %v1408 = vunpack.c.l.b16 %v1328
      %v1409 = vunpack.c.l.b16 %v1329
      %v1410 = vunpack.c.l.b16 %v1330
      %v1411 = vunpack.c.l.b16 %v1331
      %v1412 = vunpack.c.l.b16 %v1332
      %v1413 = vpack.c.b16 %v1398, %v1397
      %v1414 = vpack.c.b16 %v1400, %v1399
      %v1415 = vpack.c.b16 %v1402, %v1401
      %v1416 = vpack.c.b16 %v1404, %v1403
      %v1417 = vpack.c.b16 %v1406, %v1405
      %v1418 = vpack.c.b16 %v1408, %v1407
      %v1419 = vpack.c.b16 %v1410, %v1409
      %v1420 = vpack.c.b16 %v1412, %v1411
      %1429 = vmatprep.subr.bf16.mxu0 0
      %1430 = vmatpush1.bf16.msra.mxu0 %v1413
      %1431 = vmatprep.subr.bf16.mxu0 0
      %1432 = vmatpush1.bf16.msra.mxu0 %v1414
      %1433 = vmatprep.subr.bf16.mxu0 0
      %1434 = vmatpush1.bf16.msra.mxu0 %v1415
      %1435 = vmatprep.subr.bf16.mxu0 0
      %1436 = vmatpush1.bf16.msra.mxu0 %v1416
      %1437 = vmatprep.subr.bf16.mxu0 0
      %1438 = vmatpush1.bf16.msra.mxu0 %v1417
      %1439 = vmatprep.subr.bf16.mxu0 0
      %1440 = vmatpush1.bf16.msra.mxu0 %v1418
      %1441 = vmatprep.subr.bf16.mxu0 0
      %1442 = vmatpush1.bf16.msra.mxu0 %v1419
      %1443 = vmatprep.subr.bf16.mxu0 0
      %1444 = vmatpush1.bf16.msra.mxu0 %v1420
      %1445 = vmatprep.subr.bf16.mxu0 0
      %1446 = vmatpush1.bf16.msra.mxu0 0
      %1447 = vmatprep.subr.bf16.mxu0 0
      %1448 = vmatpush1.bf16.msra.mxu0 0
      %1449 = vmatprep.subr.bf16.mxu0 0
      %1450 = vmatpush1.bf16.msra.mxu0 0
      %1451 = vmatprep.subr.bf16.mxu0 0
      %1452 = vmatpush1.bf16.msra.mxu0 0
      %1453 = vmatprep.subr.bf16.mxu0 0
      %1454 = vmatpush1.bf16.msra.mxu0 0
      %1455 = vmatprep.subr.bf16.mxu0 0
      %1456 = vmatpush1.bf16.msra.mxu0 0
      %1457 = vmatprep.subr.bf16.mxu0 0
      %1458 = vmatpush1.bf16.msra.mxu0 0
      %1459 = vmatprep.subr.bf16.mxu0 0
      %1460 = vmatpush1.bf16.msra.mxu0 0
      %1461 = vmatprep.mubr.bf16.mxu0 0
      %1462 = vmatmul.mubr.bf16.gmra.mrb[0].mxu0 %v1365
      %v1463 = vpop.f32.mrb[0].mxu0
      %v1464 = vadd.f32 0.0, %v1463
      %v1465 = vpop.f32.mrb[0].mxu0
      %v1466 = vpop.f32.mrb[0].mxu0
      %v1467 = vadd.f32 0.0, %v1466
      %v1468 = vpop.f32.mrb[0].mxu0
      %1469 = vmatprep.mubr.bf16.mxu0 0
      %1470 = vmatmul.mubr.bf16.gmra.mrb[0].mxu0 %v1366
      %v1471 = vpop.f32.mrb[0].mxu0
      %v1472 = vadd.f32 0.0, %v1471
      %v1473 = vpop.f32.mrb[0].mxu0
      %v1474 = vpop.f32.mrb[0].mxu0
      %v1475 = vadd.f32 0.0, %v1474
      %v1476 = vpop.f32.mrb[0].mxu0
      %1477 = vmatprep.mubr.bf16.mxu0 0
      %1478 = vmatmul.mubr.bf16.gmra.mrb[0].mxu0 %v1367
      %v1479 = vpop.f32.mrb[0].mxu0
      %v1480 = vadd.f32 0.0, %v1479
      %v1481 = vpop.f32.mrb[0].mxu0
      %v1482 = vpop.f32.mrb[0].mxu0
      %v1483 = vadd.f32 0.0, %v1482
      %v1484 = vpop.f32.mrb[0].mxu0
      %1485 = vmatprep.mubr.bf16.mxu0 0
      %1486 = vmatmul.mubr.bf16.gmra.mrb[0].mxu0 %v1368
      %v1487 = vpop.f32.mrb[0].mxu0
      %v1488 = vadd.f32 0.0, %v1487
      %v1489 = vpop.f32.mrb[0].mxu0
      %v1490 = vpop.f32.mrb[0].mxu0
      %v1491 = vadd.f32 0.0, %v1490
      %v1492 = vpop.f32.mrb[0].mxu0
      %1493 = vmatprep.mubr.bf16.mxu0 0
      %1494 = vmatmul.mubr.bf16.gmra.mrb[0].mxu0 %v1369
      %v1495 = vpop.f32.mrb[0].mxu0
      %v1496 = vadd.f32 0.0, %v1495
      %v1497 = vpop.f32.mrb[0].mxu0
      %v1498 = vpop.f32.mrb[0].mxu0
      %v1499 = vadd.f32 0.0, %v1498
      %v1500 = vpop.f32.mrb[0].mxu0
      %1501 = vmatprep.mubr.bf16.mxu0 0
      %1502 = vmatmul.mubr.bf16.gmra.mrb[0].mxu0 %v1370
      %v1503 = vpop.f32.mrb[0].mxu0
      %v1504 = vadd.f32 0.0, %v1503
      %v1505 = vpop.f32.mrb[0].mxu0
      %v1506 = vpop.f32.mrb[0].mxu0
      %v1507 = vadd.f32 0.0, %v1506
      %v1508 = vpop.f32.mrb[0].mxu0
      %1509 = vmatprep.mubr.bf16.mxu0 0
      %1510 = vmatmul.mubr.bf16.gmra.mrb[0].mxu0 %v1371
      %v1511 = vpop.f32.mrb[0].mxu0
      %v1512 = vadd.f32 0.0, %v1511
      %v1513 = vpop.f32.mrb[0].mxu0
      %v1514 = vpop.f32.mrb[0].mxu0
      %v1515 = vadd.f32 0.0, %v1514
      %v1516 = vpop.f32.mrb[0].mxu0
      %1517 = vmatprep.mubr.bf16.mxu0 0
      %1518 = vmatmul.mubr.bf16.gmra.mrb[0].mxu0 %v1372
      %v1519 = vpop.f32.mrb[0].mxu0
      %v1520 = vadd.f32 0.0, %v1519
      %v1521 = vpop.f32.mrb[0].mxu0
      %v1522 = vpop.f32.mrb[0].mxu0
      %v1523 = vadd.f32 0.0, %v1522
      %v1524 = vpop.f32.mrb[0].mxu0
      %1525 = vdwg.mxu0
      %v1526 = vadd.f32 %v1300, %v1464
      %v1527 = vadd.f32 %v1301, %v1467
      %v1528 = vadd.f32 %v1302, %v1472
      %v1529 = vadd.f32 %v1303, %v1475
      %v1530 = vadd.f32 %v1304, %v1480
      %v1531 = vadd.f32 %v1305, %v1483
      %v1532 = vadd.f32 %v1306, %v1488
      %v1533 = vadd.f32 %v1307, %v1491
      %v1534 = vadd.f32 %v1308, %v1496
      %v1535 = vadd.f32 %v1309, %v1499
      %v1536 = vadd.f32 %v1310, %v1504
      %v1537 = vadd.f32 %v1311, %v1507
      %v1538 = vadd.f32 %v1312, %v1512
      %v1539 = vadd.f32 %v1313, %v1515
      %v1540 = vadd.f32 %v1314, %v1520
      %v1541 = vadd.f32 %v1315, %v1523
      %v1543 = vshrl.u32 %v393, 16
      %v1545 = vrot.slane %v1543, 4
      %v1546 = vshll.u32 %v393, 16
      %v1548 = vrot.slane %v1546, 5
      %v1549 = vor.u32 %v1545, %v1548
      %v1550 = vrot.slane %v1549, 4
      %v1552 = vshll.u32 %v394, 16
      %v1554 = vrot.slane %v1552, 5
      %v1555 = vsel %vm459, %v1550, %v1554
      %v1556 = vshrl.u32 %v394, 16
      %v1558 = vrot.slane %v1556, 4
      %v1559 = vor.u32 %v1558, %v1554
      %v1560 = vrot.slane %v1559, 4
      %v1562 = vshll.u32 %v395, 16
      %v1564 = vrot.slane %v1562, 5
      %v1565 = vsel %vm459, %v1560, %v1564
      %v1567 = vshrl.u32 %v396, 16
      %v1569 = vrot.slane %v1567, 4
      %v1570 = vshll.u32 %v396, 16
      %v1572 = vrot.slane %v1570, 5
      %v1573 = vor.u32 %v1569, %v1572
      %v1574 = vrot.slane %v1573, 4
      %v1576 = vshll.u32 %v397, 16
      %v1578 = vrot.slane %v1576, 5
      %v1579 = vsel %vm459, %v1574, %v1578
      %v1580 = vshrl.u32 %v397, 16
      %v1582 = vrot.slane %v1580, 4
      %v1583 = vor.u32 %v1582, %v1578
      %v1584 = vrot.slane %v1583, 4
      %v1586 = vshll.u32 %v398, 16
      %v1588 = vrot.slane %v1586, 5
      %v1589 = vsel %vm459, %v1584, %v1588
      %v1591 = vshrl.u32 %v399, 16
      %v1593 = vrot.slane %v1591, 4
      %v1594 = vshll.u32 %v399, 16
      %v1596 = vrot.slane %v1594, 5
      %v1597 = vor.u32 %v1593, %v1596
      %v1598 = vrot.slane %v1597, 4
      %v1600 = vshll.u32 %v400, 16
      %v1602 = vrot.slane %v1600, 5
      %v1603 = vsel %vm459, %v1598, %v1602
      %v1604 = vshrl.u32 %v400, 16
      %v1606 = vrot.slane %v1604, 4
      %v1607 = vor.u32 %v1606, %v1602
      %v1608 = vrot.slane %v1607, 4
      %v1610 = vshll.u32 %v401, 16
      %v1612 = vrot.slane %v1610, 5
      %v1613 = vsel %vm459, %v1608, %v1612
      %v1615 = vshrl.u32 %v402, 16
      %v1617 = vrot.slane %v1615, 4
      %v1618 = vshll.u32 %v402, 16
      %v1620 = vrot.slane %v1618, 5
      %v1621 = vor.u32 %v1617, %v1620
      %v1622 = vrot.slane %v1621, 4
      %v1624 = vshll.u32 %v403, 16
      %v1626 = vrot.slane %v1624, 5
      %v1627 = vsel %vm459, %v1622, %v1626
      %v1628 = vshrl.u32 %v403, 16
      %v1630 = vrot.slane %v1628, 4
      %v1631 = vor.u32 %v1630, %v1626
      %v1632 = vrot.slane %v1631, 4
      %v1634 = vshll.u32 %v404, 16
      %v1636 = vrot.slane %v1634, 5
      %v1637 = vsel %vm459, %v1632, %v1636
      %v1639 = vshrl.u32 %v405, 16
      %v1641 = vrot.slane %v1639, 4
      %v1642 = vshll.u32 %v405, 16
      %v1644 = vrot.slane %v1642, 5
      %v1645 = vor.u32 %v1641, %v1644
      %v1646 = vrot.slane %v1645, 4
      %v1648 = vshll.u32 %v406, 16
      %v1650 = vrot.slane %v1648, 5
      %v1651 = vsel %vm459, %v1646, %v1650
      %v1652 = vshrl.u32 %v406, 16
      %v1654 = vrot.slane %v1652, 4
      %v1655 = vor.u32 %v1654, %v1650
      %v1656 = vrot.slane %v1655, 4
      %v1658 = vshll.u32 %v407, 16
      %v1660 = vrot.slane %v1658, 5
      %v1661 = vsel %vm459, %v1656, %v1660
      %v1663 = vshrl.u32 %v408, 16
      %v1665 = vrot.slane %v1663, 4
      %v1666 = vshll.u32 %v408, 16
      %v1668 = vrot.slane %v1666, 5
      %v1669 = vor.u32 %v1665, %v1668
      %v1670 = vrot.slane %v1669, 4
      %v1672 = vshll.u32 %v409, 16
      %v1674 = vrot.slane %v1672, 5
      %v1675 = vsel %vm459, %v1670, %v1674
      %v1676 = vshrl.u32 %v409, 16
      %v1678 = vrot.slane %v1676, 4
      %v1679 = vor.u32 %v1678, %v1674
      %v1680 = vrot.slane %v1679, 4
      %v1682 = vshll.u32 %v410, 16
      %v1684 = vrot.slane %v1682, 5
      %v1685 = vsel %vm459, %v1680, %v1684
      %v1687 = vshrl.u32 %v411, 16
      %v1689 = vrot.slane %v1687, 4
      %v1690 = vshll.u32 %v411, 16
      %v1692 = vrot.slane %v1690, 5
      %v1693 = vor.u32 %v1689, %v1692
      %v1694 = vrot.slane %v1693, 4
      %v1696 = vshll.u32 %v412, 16
      %v1698 = vrot.slane %v1696, 5
      %v1699 = vsel %vm459, %v1694, %v1698
      %v1700 = vshrl.u32 %v412, 16
      %v1702 = vrot.slane %v1700, 4
      %v1703 = vor.u32 %v1702, %v1698
      %v1704 = vrot.slane %v1703, 4
      %v1706 = vshll.u32 %v413, 16
      %v1708 = vrot.slane %v1706, 5
      %v1709 = vsel %vm459, %v1704, %v1708
      %v1711 = vshrl.u32 %v414, 16
      %v1713 = vrot.slane %v1711, 4
      %v1714 = vshll.u32 %v414, 16
      %v1716 = vrot.slane %v1714, 5
      %v1717 = vor.u32 %v1713, %v1716
      %v1718 = vrot.slane %v1717, 4
      %v1720 = vshll.u32 %v415, 16
      %v1722 = vrot.slane %v1720, 5
      %v1723 = vsel %vm459, %v1718, %v1722
      %v1724 = vshrl.u32 %v415, 16
      %v1726 = vrot.slane %v1724, 4
      %v1727 = vor.u32 %v1726, %v1722
      %v1728 = vrot.slane %v1727, 4
      %v1730 = vshll.u32 %v416, 16
      %v1732 = vrot.slane %v1730, 5
      %v1733 = vsel %vm459, %v1728, %v1732
      %s1734 = scalar_lea.vmem %s3, 256
      %v1735 = vld [vmem:[%s1734] sm:$0xf]
      %v1736 = vld [vmem:[%s1734 + $0x4] sm:$0xf]
      %v1737 = vld [vmem:[%s1734 + $0x8] sm:$0xf]
      %v1738 = vld [vmem:[%s1734 + $0xc] sm:$0xf]
      %v1739 = vld [vmem:[%s1734 + $0x10] sm:$0xf]
      %v1740 = vld [vmem:[%s1734 + $0x14] sm:$0xf]
      %v1741 = vld [vmem:[%s1734 + $0x18] sm:$0xf]
      %v1742 = vld [vmem:[%s1734 + $0x1c] sm:$0xf]
      %v1743 = vld [vmem:[%s1734 + $0x20] sm:$0xf]
      %v1744 = vld [vmem:[%s1734 + $0x24] sm:$0xf]
      %v1745 = vld [vmem:[%s1734 + $0x28] sm:$0xf]
      %v1746 = vld [vmem:[%s1734 + $0x2c] sm:$0xf]
      %v1747 = vld [vmem:[%s1734 + $0x30] sm:$0xf]
      %v1748 = vld [vmem:[%s1734 + $0x34] sm:$0xf]
      %v1749 = vld [vmem:[%s1734 + $0x38] sm:$0xf]
      %v1750 = vld [vmem:[%s1734 + $0x3c] sm:$0xf]
      %v1751 = vunpack.c.l.b16 %v1555
      %v1752 = vunpack.c.l.b16 %v1565
      %v1753 = vunpack.c.l.b16 %v1579
      %v1754 = vunpack.c.l.b16 %v1589
      %v1755 = vunpack.c.l.b16 %v1603
      %v1756 = vunpack.c.l.b16 %v1613
      %v1757 = vunpack.c.l.b16 %v1627
      %v1758 = vunpack.c.l.b16 %v1637
      %v1759 = vunpack.c.l.b16 %v1651
      %v1760 = vunpack.c.l.b16 %v1661
      %v1761 = vunpack.c.l.b16 %v1675
      %v1762 = vunpack.c.l.b16 %v1685
      %v1763 = vunpack.c.l.b16 %v1699
      %v1764 = vunpack.c.l.b16 %v1709
      %v1765 = vunpack.c.l.b16 %v1723
      %v1766 = vunpack.c.l.b16 %v1733
      %v1767 = vpack.c.b16 %v1752, %v1751
      %v1768 = vpack.c.b16 %v1754, %v1753
      %v1769 = vpack.c.b16 %v1756, %v1755
      %v1770 = vpack.c.b16 %v1758, %v1757
      %v1771 = vpack.c.b16 %v1760, %v1759
      %v1772 = vpack.c.b16 %v1762, %v1761
      %v1773 = vpack.c.b16 %v1764, %v1763
      %v1774 = vpack.c.b16 %v1766, %v1765
      %v1799 = vunpack.c.l.b16 %v1735
      %v1800 = vunpack.c.l.b16 %v1736
      %v1801 = vunpack.c.l.b16 %v1737
      %v1802 = vunpack.c.l.b16 %v1738
      %v1803 = vunpack.c.l.b16 %v1739
      %v1804 = vunpack.c.l.b16 %v1740
      %v1805 = vunpack.c.l.b16 %v1741
      %v1806 = vunpack.c.l.b16 %v1742
      %v1807 = vunpack.c.l.b16 %v1743
      %v1808 = vunpack.c.l.b16 %v1744
      %v1809 = vunpack.c.l.b16 %v1745
      %v1810 = vunpack.c.l.b16 %v1746
      %v1811 = vunpack.c.l.b16 %v1747
      %v1812 = vunpack.c.l.b16 %v1748
      %v1813 = vunpack.c.l.b16 %v1749
      %v1814 = vunpack.c.l.b16 %v1750
      %v1815 = vpack.c.b16 %v1800, %v1799
      %v1816 = vpack.c.b16 %v1802, %v1801
      %v1817 = vpack.c.b16 %v1804, %v1803
      %v1818 = vpack.c.b16 %v1806, %v1805
      %v1819 = vpack.c.b16 %v1808, %v1807
      %v1820 = vpack.c.b16 %v1810, %v1809
      %v1821 = vpack.c.b16 %v1812, %v1811
      %v1822 = vpack.c.b16 %v1814, %v1813
      %1831 = vmatprep.subr.bf16.mxu0 0
      %1832 = vmatpush1.bf16.msra.mxu0 %v1815
      %1833 = vmatprep.subr.bf16.mxu0 0
      %1834 = vmatpush1.bf16.msra.mxu0 %v1816
      %1835 = vmatprep.subr.bf16.mxu0 0
      %1836 = vmatpush1.bf16.msra.mxu0 %v1817
      %1837 = vmatprep.subr.bf16.mxu0 0
      %1838 = vmatpush1.bf16.msra.mxu0 %v1818
      %1839 = vmatprep.subr.bf16.mxu0 0
      %1840 = vmatpush1.bf16.msra.mxu0 %v1819
      %1841 = vmatprep.subr.bf16.mxu0 0
      %1842 = vmatpush1.bf16.msra.mxu0 %v1820
      %1843 = vmatprep.subr.bf16.mxu0 0
      %1844 = vmatpush1.bf16.msra.mxu0 %v1821
      %1845 = vmatprep.subr.bf16.mxu0 0
      %1846 = vmatpush1.bf16.msra.mxu0 %v1822
      %1847 = vmatprep.subr.bf16.mxu0 0
      %1848 = vmatpush1.bf16.msra.mxu0 0
      %1849 = vmatprep.subr.bf16.mxu0 0
      %1850 = vmatpush1.bf16.msra.mxu0 0
      %1851 = vmatprep.subr.bf16.mxu0 0
      %1852 = vmatpush1.bf16.msra.mxu0 0
      %1853 = vmatprep.subr.bf16.mxu0 0
      %1854 = vmatpush1.bf16.msra.mxu0 0
      %1855 = vmatprep.subr.bf16.mxu0 0
      %1856 = vmatpush1.bf16.msra.mxu0 0
      %1857 = vmatprep.subr.bf16.mxu0 0
      %1858 = vmatpush1.bf16.msra.mxu0 0
      %1859 = vmatprep.subr.bf16.mxu0 0
      %1860 = vmatpush1.bf16.msra.mxu0 0
      %1861 = vmatprep.subr.bf16.mxu0 0
      %1862 = vmatpush1.bf16.msra.mxu0 0
      %1863 = vmatprep.mubr.bf16.mxu0 0
      %1864 = vmatmul.mubr.bf16.gmra.mrb[0].mxu0 %v1767
      %v1865 = vpop.f32.mrb[0].mxu0
      %v1866 = vadd.f32 0.0, %v1865
      %v1867 = vpop.f32.mrb[0].mxu0
      %v1868 = vpop.f32.mrb[0].mxu0
      %v1869 = vadd.f32 0.0, %v1868
      %v1870 = vpop.f32.mrb[0].mxu0
      %1871 = vmatprep.mubr.bf16.mxu0 0
      %1872 = vmatmul.mubr.bf16.gmra.mrb[0].mxu0 %v1768
      %v1873 = vpop.f32.mrb[0].mxu0
      %v1874 = vadd.f32 0.0, %v1873
      %v1875 = vpop.f32.mrb[0].mxu0
      %v1876 = vpop.f32.mrb[0].mxu0
      %v1877 = vadd.f32 0.0, %v1876
      %v1878 = vpop.f32.mrb[0].mxu0
      %1879 = vmatprep.mubr.bf16.mxu0 0
      %1880 = vmatmul.mubr.bf16.gmra.mrb[0].mxu0 %v1769
      %v1881 = vpop.f32.mrb[0].mxu0
      %v1882 = vadd.f32 0.0, %v1881
      %v1883 = vpop.f32.mrb[0].mxu0
      %v1884 = vpop.f32.mrb[0].mxu0
      %v1885 = vadd.f32 0.0, %v1884
      %v1886 = vpop.f32.mrb[0].mxu0
      %1887 = vmatprep.mubr.bf16.mxu0 0
      %1888 = vmatmul.mubr.bf16.gmra.mrb[0].mxu0 %v1770
      %v1889 = vpop.f32.mrb[0].mxu0
      %v1890 = vadd.f32 0.0, %v1889
      %v1891 = vpop.f32.mrb[0].mxu0
      %v1892 = vpop.f32.mrb[0].mxu0
      %v1893 = vadd.f32 0.0, %v1892
      %v1894 = vpop.f32.mrb[0].mxu0
      %1895 = vmatprep.mubr.bf16.mxu0 0
      %1896 = vmatmul.mubr.bf16.gmra.mrb[0].mxu0 %v1771
      %v1897 = vpop.f32.mrb[0].mxu0
      %v1898 = vadd.f32 0.0, %v1897
      %v1899 = vpop.f32.mrb[0].mxu0
      %v1900 = vpop.f32.mrb[0].mxu0
      %v1901 = vadd.f32 0.0, %v1900
      %v1902 = vpop.f32.mrb[0].mxu0
      %1903 = vmatprep.mubr.bf16.mxu0 0
      %1904 = vmatmul.mubr.bf16.gmra.mrb[0].mxu0 %v1772
      %v1905 = vpop.f32.mrb[0].mxu0
      %v1906 = vadd.f32 0.0, %v1905
      %v1907 = vpop.f32.mrb[0].mxu0
      %v1908 = vpop.f32.mrb[0].mxu0
      %v1909 = vadd.f32 0.0, %v1908
      %v1910 = vpop.f32.mrb[0].mxu0
      %1911 = vmatprep.mubr.bf16.mxu0 0
      %1912 = vmatmul.mubr.bf16.gmra.mrb[0].mxu0 %v1773
      %v1913 = vpop.f32.mrb[0].mxu0
      %v1914 = vadd.f32 0.0, %v1913
      %v1915 = vpop.f32.mrb[0].mxu0
      %v1916 = vpop.f32.mrb[0].mxu0
      %v1917 = vadd.f32 0.0, %v1916
      %v1918 = vpop.f32.mrb[0].mxu0
      %1919 = vmatprep.mubr.bf16.mxu0 0
      %1920 = vmatmul.mubr.bf16.gmra.mrb[0].mxu0 %v1774
      %v1921 = vpop.f32.mrb[0].mxu0
      %v1922 = vadd.f32 0.0, %v1921
      %v1923 = vpop.f32.mrb[0].mxu0
      %v1924 = vpop.f32.mrb[0].mxu0
      %v1925 = vadd.f32 0.0, %v1924
      %v1926 = vpop.f32.mrb[0].mxu0
      %1927 = vdwg.mxu0
      %v1928 = vadd.f32 %v1526, %v1866
      %v1929 = vadd.f32 %v1527, %v1869
      %v1930 = vadd.f32 %v1528, %v1874
      %v1931 = vadd.f32 %v1529, %v1877
      %v1932 = vadd.f32 %v1530, %v1882
      %v1933 = vadd.f32 %v1531, %v1885
      %v1934 = vadd.f32 %v1532, %v1890
      %v1935 = vadd.f32 %v1533, %v1893
      %v1936 = vadd.f32 %v1534, %v1898
      %v1937 = vadd.f32 %v1535, %v1901
      %v1938 = vadd.f32 %v1536, %v1906
      %v1939 = vadd.f32 %v1537, %v1909
      %v1940 = vadd.f32 %v1538, %v1914
      %v1941 = vadd.f32 %v1539, %v1917
      %v1942 = vadd.f32 %v1540, %v1922
      %v1943 = vadd.f32 %v1541, %v1925
      %v1952 = vrot.slane %v393, 5
      %v1953 = vrot.slane %v1952, 4
      %v1954 = vrot.slane %v394, 5
      %v1955 = vsel %vm1049, %v1953, %v1954
      %v1956 = vrot.slane %v1954, 4
      %v1957 = vrot.slane %v395, 5
      %v1958 = vsel %vm1049, %v1956, %v1957
      %v1959 = vrot.slane %v396, 5
      %v1960 = vrot.slane %v1959, 4
      %v1961 = vrot.slane %v397, 5
      %v1962 = vsel %vm1049, %v1960, %v1961
      %v1963 = vrot.slane %v1961, 4
      %v1964 = vrot.slane %v398, 5
      %v1965 = vsel %vm1049, %v1963, %v1964
      %v1966 = vrot.slane %v399, 5
      %v1967 = vrot.slane %v1966, 4
      %v1968 = vrot.slane %v400, 5
      %v1969 = vsel %vm1049, %v1967, %v1968
      %v1970 = vrot.slane %v1968, 4
      %v1971 = vrot.slane %v401, 5
      %v1972 = vsel %vm1049, %v1970, %v1971
      %v1973 = vrot.slane %v402, 5
      %v1974 = vrot.slane %v1973, 4
      %v1975 = vrot.slane %v403, 5
      %v1976 = vsel %vm1049, %v1974, %v1975
      %v1977 = vrot.slane %v1975, 4
      %v1978 = vrot.slane %v404, 5
      %v1979 = vsel %vm1049, %v1977, %v1978
      %v1980 = vrot.slane %v405, 5
      %v1981 = vrot.slane %v1980, 4
      %v1982 = vrot.slane %v406, 5
      %v1983 = vsel %vm1049, %v1981, %v1982
      %v1984 = vrot.slane %v1982, 4
      %v1985 = vrot.slane %v407, 5
      %v1986 = vsel %vm1049, %v1984, %v1985
      %v1987 = vrot.slane %v408, 5
      %v1988 = vrot.slane %v1987, 4
      %v1989 = vrot.slane %v409, 5
      %v1990 = vsel %vm1049, %v1988, %v1989
      %v1991 = vrot.slane %v1989, 4
      %v1992 = vrot.slane %v410, 5
      %v1993 = vsel %vm1049, %v1991, %v1992
      %v1994 = vrot.slane %v411, 5
      %v1995 = vrot.slane %v1994, 4
      %v1996 = vrot.slane %v412, 5
      %v1997 = vsel %vm1049, %v1995, %v1996
      %v1998 = vrot.slane %v1996, 4
      %v1999 = vrot.slane %v413, 5
      %v2000 = vsel %vm1049, %v1998, %v1999
      %v2001 = vrot.slane %v414, 5
      %v2002 = vrot.slane %v2001, 4
      %v2003 = vrot.slane %v415, 5
      %v2004 = vsel %vm1049, %v2002, %v2003
      %v2005 = vrot.slane %v2003, 4
      %v2006 = vrot.slane %v416, 5
      %v2007 = vsel %vm1049, %v2005, %v2006
      %s2008 = scalar_lea.vmem %s3, 320
      %v2009 = vld [vmem:[%s2008] sm:$0xf]
      %v2010 = vld [vmem:[%s2008 + $0x4] sm:$0xf]
      %v2011 = vld [vmem:[%s2008 + $0x8] sm:$0xf]
      %v2012 = vld [vmem:[%s2008 + $0xc] sm:$0xf]
      %v2013 = vld [vmem:[%s2008 + $0x10] sm:$0xf]
      %v2014 = vld [vmem:[%s2008 + $0x14] sm:$0xf]
      %v2015 = vld [vmem:[%s2008 + $0x18] sm:$0xf]
      %v2016 = vld [vmem:[%s2008 + $0x1c] sm:$0xf]
      %v2017 = vld [vmem:[%s2008 + $0x20] sm:$0xf]
      %v2018 = vld [vmem:[%s2008 + $0x24] sm:$0xf]
      %v2019 = vld [vmem:[%s2008 + $0x28] sm:$0xf]
      %v2020 = vld [vmem:[%s2008 + $0x2c] sm:$0xf]
      %v2021 = vld [vmem:[%s2008 + $0x30] sm:$0xf]
      %v2022 = vld [vmem:[%s2008 + $0x34] sm:$0xf]
      %v2023 = vld [vmem:[%s2008 + $0x38] sm:$0xf]
      %v2024 = vld [vmem:[%s2008 + $0x3c] sm:$0xf]
      %v2025 = vunpack.c.l.b16 %v1955
      %v2026 = vunpack.c.l.b16 %v1958
      %v2027 = vunpack.c.l.b16 %v1962
      %v2028 = vunpack.c.l.b16 %v1965
      %v2029 = vunpack.c.l.b16 %v1969
      %v2030 = vunpack.c.l.b16 %v1972
      %v2031 = vunpack.c.l.b16 %v1976
      %v2032 = vunpack.c.l.b16 %v1979
      %v2033 = vunpack.c.l.b16 %v1983
      %v2034 = vunpack.c.l.b16 %v1986
      %v2035 = vunpack.c.l.b16 %v1990
      %v2036 = vunpack.c.l.b16 %v1993
      %v2037 = vunpack.c.l.b16 %v1997
      %v2038 = vunpack.c.l.b16 %v2000
      %v2039 = vunpack.c.l.b16 %v2004
      %v2040 = vunpack.c.l.b16 %v2007
      %v2041 = vpack.c.b16 %v2026, %v2025
      %v2042 = vpack.c.b16 %v2028, %v2027
      %v2043 = vpack.c.b16 %v2030, %v2029
      %v2044 = vpack.c.b16 %v2032, %v2031
      %v2045 = vpack.c.b16 %v2034, %v2033
      %v2046 = vpack.c.b16 %v2036, %v2035
      %v2047 = vpack.c.b16 %v2038, %v2037
      %v2048 = vpack.c.b16 %v2040, %v2039
      %v2073 = vunpack.c.l.b16 %v2009
      %v2074 = vunpack.c.l.b16 %v2010
      %v2075 = vunpack.c.l.b16 %v2011
      %v2076 = vunpack.c.l.b16 %v2012
      %v2077 = vunpack.c.l.b16 %v2013
      %v2078 = vunpack.c.l.b16 %v2014
      %v2079 = vunpack.c.l.b16 %v2015
      %v2080 = vunpack.c.l.b16 %v2016
      %v2081 = vunpack.c.l.b16 %v2017
      %v2082 = vunpack.c.l.b16 %v2018
      %v2083 = vunpack.c.l.b16 %v2019
      %v2084 = vunpack.c.l.b16 %v2020
      %v2085 = vunpack.c.l.b16 %v2021
      %v2086 = vunpack.c.l.b16 %v2022
      %v2087 = vunpack.c.l.b16 %v2023
      %v2088 = vunpack.c.l.b16 %v2024
      %v2089 = vpack.c.b16 %v2074, %v2073
      %v2090 = vpack.c.b16 %v2076, %v2075
      %v2091 = vpack.c.b16 %v2078, %v2077
      %v2092 = vpack.c.b16 %v2080, %v2079
      %v2093 = vpack.c.b16 %v2082, %v2081
      %v2094 = vpack.c.b16 %v2084, %v2083
      %v2095 = vpack.c.b16 %v2086, %v2085
      %v2096 = vpack.c.b16 %v2088, %v2087
      %2105 = vmatprep.subr.bf16.mxu0 0
      %2106 = vmatpush1.bf16.msra.mxu0 %v2089
      %2107 = vmatprep.subr.bf16.mxu0 0
      %2108 = vmatpush1.bf16.msra.mxu0 %v2090
      %2109 = vmatprep.subr.bf16.mxu0 0
      %2110 = vmatpush1.bf16.msra.mxu0 %v2091
      %2111 = vmatprep.subr.bf16.mxu0 0
      %2112 = vmatpush1.bf16.msra.mxu0 %v2092
      %2113 = vmatprep.subr.bf16.mxu0 0
      %2114 = vmatpush1.bf16.msra.mxu0 %v2093
      %2115 = vmatprep.subr.bf16.mxu0 0
      %2116 = vmatpush1.bf16.msra.mxu0 %v2094
      %2117 = vmatprep.subr.bf16.mxu0 0
      %2118 = vmatpush1.bf16.msra.mxu0 %v2095
      %2119 = vmatprep.subr.bf16.mxu0 0
      %2120 = vmatpush1.bf16.msra.mxu0 %v2096
      %2121 = vmatprep.subr.bf16.mxu0 0
      %2122 = vmatpush1.bf16.msra.mxu0 0
      %2123 = vmatprep.subr.bf16.mxu0 0
      %2124 = vmatpush1.bf16.msra.mxu0 0
      %2125 = vmatprep.subr.bf16.mxu0 0
      %2126 = vmatpush1.bf16.msra.mxu0 0
      %2127 = vmatprep.subr.bf16.mxu0 0
      %2128 = vmatpush1.bf16.msra.mxu0 0
      %2129 = vmatprep.subr.bf16.mxu0 0
      %2130 = vmatpush1.bf16.msra.mxu0 0
      %2131 = vmatprep.subr.bf16.mxu0 0
      %2132 = vmatpush1.bf16.msra.mxu0 0
      %2133 = vmatprep.subr.bf16.mxu0 0
      %2134 = vmatpush1.bf16.msra.mxu0 0
      %2135 = vmatprep.subr.bf16.mxu0 0
      %2136 = vmatpush1.bf16.msra.mxu0 0
      %2137 = vmatprep.mubr.bf16.mxu0 0
      %2138 = vmatmul.mubr.bf16.gmra.mrb[0].mxu0 %v2041
      %v2139 = vpop.f32.mrb[0].mxu0
      %v2140 = vadd.f32 0.0, %v2139
      %v2141 = vpop.f32.mrb[0].mxu0
      %v2142 = vpop.f32.mrb[0].mxu0
      %v2143 = vadd.f32 0.0, %v2142
      %v2144 = vpop.f32.mrb[0].mxu0
      %2145 = vmatprep.mubr.bf16.mxu0 0
      %2146 = vmatmul.mubr.bf16.gmra.mrb[0].mxu0 %v2042
      %v2147 = vpop.f32.mrb[0].mxu0
      %v2148 = vadd.f32 0.0, %v2147
      %v2149 = vpop.f32.mrb[0].mxu0
      %v2150 = vpop.f32.mrb[0].mxu0
      %v2151 = vadd.f32 0.0, %v2150
      %v2152 = vpop.f32.mrb[0].mxu0
      %2153 = vmatprep.mubr.bf16.mxu0 0
      %2154 = vmatmul.mubr.bf16.gmra.mrb[0].mxu0 %v2043
      %v2155 = vpop.f32.mrb[0].mxu0
      %v2156 = vadd.f32 0.0, %v2155
      %v2157 = vpop.f32.mrb[0].mxu0
      %v2158 = vpop.f32.mrb[0].mxu0
      %v2159 = vadd.f32 0.0, %v2158
      %v2160 = vpop.f32.mrb[0].mxu0
      %2161 = vmatprep.mubr.bf16.mxu0 0
      %2162 = vmatmul.mubr.bf16.gmra.mrb[0].mxu0 %v2044
      %v2163 = vpop.f32.mrb[0].mxu0
      %v2164 = vadd.f32 0.0, %v2163
      %v2165 = vpop.f32.mrb[0].mxu0
      %v2166 = vpop.f32.mrb[0].mxu0
      %v2167 = vadd.f32 0.0, %v2166
      %v2168 = vpop.f32.mrb[0].mxu0
      %2169 = vmatprep.mubr.bf16.mxu0 0
      %2170 = vmatmul.mubr.bf16.gmra.mrb[0].mxu0 %v2045
      %v2171 = vpop.f32.mrb[0].mxu0
      %v2172 = vadd.f32 0.0, %v2171
      %v2173 = vpop.f32.mrb[0].mxu0
      %v2174 = vpop.f32.mrb[0].mxu0
      %v2175 = vadd.f32 0.0, %v2174
      %v2176 = vpop.f32.mrb[0].mxu0
      %2177 = vmatprep.mubr.bf16.mxu0 0
      %2178 = vmatmul.mubr.bf16.gmra.mrb[0].mxu0 %v2046
      %v2179 = vpop.f32.mrb[0].mxu0
      %v2180 = vadd.f32 0.0, %v2179
      %v2181 = vpop.f32.mrb[0].mxu0
      %v2182 = vpop.f32.mrb[0].mxu0
      %v2183 = vadd.f32 0.0, %v2182
      %v2184 = vpop.f32.mrb[0].mxu0
      %2185 = vmatprep.mubr.bf16.mxu0 0
      %2186 = vmatmul.mubr.bf16.gmra.mrb[0].mxu0 %v2047
      %v2187 = vpop.f32.mrb[0].mxu0
      %v2188 = vadd.f32 0.0, %v2187
      %v2189 = vpop.f32.mrb[0].mxu0
      %v2190 = vpop.f32.mrb[0].mxu0
      %v2191 = vadd.f32 0.0, %v2190
      %v2192 = vpop.f32.mrb[0].mxu0
      %2193 = vmatprep.mubr.bf16.mxu0 0
      %2194 = vmatmul.mubr.bf16.gmra.mrb[0].mxu0 %v2048
      %v2195 = vpop.f32.mrb[0].mxu0
      %v2196 = vadd.f32 0.0, %v2195
      %v2197 = vpop.f32.mrb[0].mxu0
      %v2198 = vpop.f32.mrb[0].mxu0
      %v2199 = vadd.f32 0.0, %v2198
      %v2200 = vpop.f32.mrb[0].mxu0
      %2201 = vdwg.mxu0
      %v2202 = vadd.f32 %v1928, %v2140
      %v2203 = vadd.f32 %v1929, %v2143
      %v2204 = vadd.f32 %v1930, %v2148
      %v2205 = vadd.f32 %v1931, %v2151
      %v2206 = vadd.f32 %v1932, %v2156
      %v2207 = vadd.f32 %v1933, %v2159
      %v2208 = vadd.f32 %v1934, %v2164
      %v2209 = vadd.f32 %v1935, %v2167
      %v2210 = vadd.f32 %v1936, %v2172
      %v2211 = vadd.f32 %v1937, %v2175
      %v2212 = vadd.f32 %v1938, %v2180
      %v2213 = vadd.f32 %v1939, %v2183
      %v2214 = vadd.f32 %v1940, %v2188
      %v2215 = vadd.f32 %v1941, %v2191
      %v2216 = vadd.f32 %v1942, %v2196
      %v2217 = vadd.f32 %v1943, %v2199
      %s2218 = scalar_lea.vmem %s3, 384
      %v2219 = vld [vmem:[%s2218] sm:$0xf]
      %v2220 = vld [vmem:[%s2218 + $0x4] sm:$0xf]
      %v2221 = vld [vmem:[%s2218 + $0x8] sm:$0xf]
      %v2222 = vld [vmem:[%s2218 + $0xc] sm:$0xf]
      %v2223 = vld [vmem:[%s2218 + $0x10] sm:$0xf]
      %v2224 = vld [vmem:[%s2218 + $0x14] sm:$0xf]
      %v2225 = vld [vmem:[%s2218 + $0x18] sm:$0xf]
      %v2226 = vld [vmem:[%s2218 + $0x1c] sm:$0xf]
      %v2227 = vld [vmem:[%s2218 + $0x20] sm:$0xf]
      %v2228 = vld [vmem:[%s2218 + $0x24] sm:$0xf]
      %v2229 = vld [vmem:[%s2218 + $0x28] sm:$0xf]
      %v2230 = vld [vmem:[%s2218 + $0x2c] sm:$0xf]
      %v2231 = vld [vmem:[%s2218 + $0x30] sm:$0xf]
      %v2232 = vld [vmem:[%s2218 + $0x34] sm:$0xf]
      %v2233 = vld [vmem:[%s2218 + $0x38] sm:$0xf]
      %v2234 = vld [vmem:[%s2218 + $0x3c] sm:$0xf]
      %v2251 = vunpack.c.l.b16 %v417
      %v2252 = vunpack.c.l.b16 %v418
      %v2253 = vunpack.c.l.b16 %v420
      %v2254 = vunpack.c.l.b16 %v421
      %v2255 = vunpack.c.l.b16 %v423
      %v2256 = vunpack.c.l.b16 %v424
      %v2257 = vunpack.c.l.b16 %v426
      %v2258 = vunpack.c.l.b16 %v427
      %v2259 = vunpack.c.l.b16 %v429
      %v2260 = vunpack.c.l.b16 %v430
      %v2261 = vunpack.c.l.b16 %v432
      %v2262 = vunpack.c.l.b16 %v433
      %v2263 = vunpack.c.l.b16 %v435
      %v2264 = vunpack.c.l.b16 %v436
      %v2265 = vunpack.c.l.b16 %v438
      %v2266 = vunpack.c.l.b16 %v439
      %v2267 = vpack.c.b16 %v2252, %v2251
      %v2268 = vpack.c.b16 %v2254, %v2253
      %v2269 = vpack.c.b16 %v2256, %v2255
      %v2270 = vpack.c.b16 %v2258, %v2257
      %v2271 = vpack.c.b16 %v2260, %v2259
      %v2272 = vpack.c.b16 %v2262, %v2261
      %v2273 = vpack.c.b16 %v2264, %v2263
      %v2274 = vpack.c.b16 %v2266, %v2265
      %v2299 = vunpack.c.l.b16 %v2219
      %v2300 = vunpack.c.l.b16 %v2220
      %v2301 = vunpack.c.l.b16 %v2221
      %v2302 = vunpack.c.l.b16 %v2222
      %v2303 = vunpack.c.l.b16 %v2223
      %v2304 = vunpack.c.l.b16 %v2224
      %v2305 = vunpack.c.l.b16 %v2225
      %v2306 = vunpack.c.l.b16 %v2226
      %v2307 = vunpack.c.l.b16 %v2227
      %v2308 = vunpack.c.l.b16 %v2228
      %v2309 = vunpack.c.l.b16 %v2229
      %v2310 = vunpack.c.l.b16 %v2230
      %v2311 = vunpack.c.l.b16 %v2231
      %v2312 = vunpack.c.l.b16 %v2232
      %v2313 = vunpack.c.l.b16 %v2233
      %v2314 = vunpack.c.l.b16 %v2234
      %v2315 = vpack.c.b16 %v2300, %v2299
      %v2316 = vpack.c.b16 %v2302, %v2301
      %v2317 = vpack.c.b16 %v2304, %v2303
      %v2318 = vpack.c.b16 %v2306, %v2305
      %v2319 = vpack.c.b16 %v2308, %v2307
      %v2320 = vpack.c.b16 %v2310, %v2309
      %v2321 = vpack.c.b16 %v2312, %v2311
      %v2322 = vpack.c.b16 %v2314, %v2313
      %2331 = vmatprep.subr.bf16.mxu0 0
      %2332 = vmatpush1.bf16.msra.mxu0 %v2315
      %2333 = vmatprep.subr.bf16.mxu0 0
      %2334 = vmatpush1.bf16.msra.mxu0 %v2316
      %2335 = vmatprep.subr.bf16.mxu0 0
      %2336 = vmatpush1.bf16.msra.mxu0 %v2317
      %2337 = vmatprep.subr.bf16.mxu0 0
      %2338 = vmatpush1.bf16.msra.mxu0 %v2318
      %2339 = vmatprep.subr.bf16.mxu0 0
      %2340 = vmatpush1.bf16.msra.mxu0 %v2319
      %2341 = vmatprep.subr.bf16.mxu0 0
      %2342 = vmatpush1.bf16.msra.mxu0 %v2320
      %2343 = vmatprep.subr.bf16.mxu0 0
      %2344 = vmatpush1.bf16.msra.mxu0 %v2321
      %2345 = vmatprep.subr.bf16.mxu0 0
      %2346 = vmatpush1.bf16.msra.mxu0 %v2322
      %2347 = vmatprep.subr.bf16.mxu0 0
      %2348 = vmatpush1.bf16.msra.mxu0 0
      %2349 = vmatprep.subr.bf16.mxu0 0
      %2350 = vmatpush1.bf16.msra.mxu0 0
      %2351 = vmatprep.subr.bf16.mxu0 0
      %2352 = vmatpush1.bf16.msra.mxu0 0
      %2353 = vmatprep.subr.bf16.mxu0 0
      %2354 = vmatpush1.bf16.msra.mxu0 0
      %2355 = vmatprep.subr.bf16.mxu0 0
      %2356 = vmatpush1.bf16.msra.mxu0 0
      %2357 = vmatprep.subr.bf16.mxu0 0
      %2358 = vmatpush1.bf16.msra.mxu0 0
      %2359 = vmatprep.subr.bf16.mxu0 0
      %2360 = vmatpush1.bf16.msra.mxu0 0
      %2361 = vmatprep.subr.bf16.mxu0 0
      %2362 = vmatpush1.bf16.msra.mxu0 0
      %2363 = vmatprep.mubr.bf16.mxu0 0
      %2364 = vmatmul.mubr.bf16.gmra.mrb[0].mxu0 %v2267
      %v2365 = vpop.f32.mrb[0].mxu0
      %v2366 = vadd.f32 0.0, %v2365
      %v2367 = vpop.f32.mrb[0].mxu0
      %v2368 = vpop.f32.mrb[0].mxu0
      %v2369 = vadd.f32 0.0, %v2368
      %v2370 = vpop.f32.mrb[0].mxu0
      %2371 = vmatprep.mubr.bf16.mxu0 0
      %2372 = vmatmul.mubr.bf16.gmra.mrb[0].mxu0 %v2268
      %v2373 = vpop.f32.mrb[0].mxu0
      %v2374 = vadd.f32 0.0, %v2373
      %v2375 = vpop.f32.mrb[0].mxu0
      %v2376 = vpop.f32.mrb[0].mxu0
      %v2377 = vadd.f32 0.0, %v2376
      %v2378 = vpop.f32.mrb[0].mxu0
      %2379 = vmatprep.mubr.bf16.mxu0 0
      %2380 = vmatmul.mubr.bf16.gmra.mrb[0].mxu0 %v2269
      %v2381 = vpop.f32.mrb[0].mxu0
      %v2382 = vadd.f32 0.0, %v2381
      %v2383 = vpop.f32.mrb[0].mxu0
      %v2384 = vpop.f32.mrb[0].mxu0
      %v2385 = vadd.f32 0.0, %v2384
      %v2386 = vpop.f32.mrb[0].mxu0
      %2387 = vmatprep.mubr.bf16.mxu0 0
      %2388 = vmatmul.mubr.bf16.gmra.mrb[0].mxu0 %v2270
      %v2389 = vpop.f32.mrb[0].mxu0
      %v2390 = vadd.f32 0.0, %v2389
      %v2391 = vpop.f32.mrb[0].mxu0
      %v2392 = vpop.f32.mrb[0].mxu0
      %v2393 = vadd.f32 0.0, %v2392
      %v2394 = vpop.f32.mrb[0].mxu0
      %2395 = vmatprep.mubr.bf16.mxu0 0
      %2396 = vmatmul.mubr.bf16.gmra.mrb[0].mxu0 %v2271
      %v2397 = vpop.f32.mrb[0].mxu0
      %v2398 = vadd.f32 0.0, %v2397
      %v2399 = vpop.f32.mrb[0].mxu0
      %v2400 = vpop.f32.mrb[0].mxu0
      %v2401 = vadd.f32 0.0, %v2400
      %v2402 = vpop.f32.mrb[0].mxu0
      %2403 = vmatprep.mubr.bf16.mxu0 0
      %2404 = vmatmul.mubr.bf16.gmra.mrb[0].mxu0 %v2272
      %v2405 = vpop.f32.mrb[0].mxu0
      %v2406 = vadd.f32 0.0, %v2405
      %v2407 = vpop.f32.mrb[0].mxu0
      %v2408 = vpop.f32.mrb[0].mxu0
      %v2409 = vadd.f32 0.0, %v2408
      %v2410 = vpop.f32.mrb[0].mxu0
      %2411 = vmatprep.mubr.bf16.mxu0 0
      %2412 = vmatmul.mubr.bf16.gmra.mrb[0].mxu0 %v2273
      %v2413 = vpop.f32.mrb[0].mxu0
      %v2414 = vadd.f32 0.0, %v2413
      %v2415 = vpop.f32.mrb[0].mxu0
      %v2416 = vpop.f32.mrb[0].mxu0
      %v2417 = vadd.f32 0.0, %v2416
      %v2418 = vpop.f32.mrb[0].mxu0
      %2419 = vmatprep.mubr.bf16.mxu0 0
      %2420 = vmatmul.mubr.bf16.gmra.mrb[0].mxu0 %v2274
      %v2421 = vpop.f32.mrb[0].mxu0
      %v2422 = vadd.f32 0.0, %v2421
      %v2423 = vpop.f32.mrb[0].mxu0
      %v2424 = vpop.f32.mrb[0].mxu0
      %v2425 = vadd.f32 0.0, %v2424
      %v2426 = vpop.f32.mrb[0].mxu0
      %2427 = vdwg.mxu0
      %v2428 = vadd.f32 %v2202, %v2366
      %v2429 = vadd.f32 %v2203, %v2369
      %v2430 = vadd.f32 %v2204, %v2374
      %v2431 = vadd.f32 %v2205, %v2377
      %v2432 = vadd.f32 %v2206, %v2382
      %v2433 = vadd.f32 %v2207, %v2385
      %v2434 = vadd.f32 %v2208, %v2390
      %v2435 = vadd.f32 %v2209, %v2393
      %v2436 = vadd.f32 %v2210, %v2398
      %v2437 = vadd.f32 %v2211, %v2401
      %v2438 = vadd.f32 %v2212, %v2406
      %v2439 = vadd.f32 %v2213, %v2409
      %v2440 = vadd.f32 %v2214, %v2414
      %v2441 = vadd.f32 %v2215, %v2417
      %v2442 = vadd.f32 %v2216, %v2422
      %v2443 = vadd.f32 %v2217, %v2425
      %v2445 = vshrl.u32 %v417, 16
      %v2447 = vrot.slane %v2445, 4
      %v2448 = vshll.u32 %v417, 16
      %v2450 = vrot.slane %v2448, 5
      %v2451 = vor.u32 %v2447, %v2450
      %v2452 = vrot.slane %v2451, 4
      %v2454 = vshll.u32 %v418, 16
      %v2456 = vrot.slane %v2454, 5
      %v2457 = vsel %vm459, %v2452, %v2456
      %v2458 = vshrl.u32 %v418, 16
      %v2460 = vrot.slane %v2458, 4
      %v2461 = vor.u32 %v2460, %v2456
      %v2462 = vrot.slane %v2461, 4
      %v2464 = vshll.u32 %v419, 16
      %v2466 = vrot.slane %v2464, 5
      %v2467 = vsel %vm459, %v2462, %v2466
      %v2469 = vshrl.u32 %v420, 16
      %v2471 = vrot.slane %v2469, 4
      %v2472 = vshll.u32 %v420, 16
      %v2474 = vrot.slane %v2472, 5
      %v2475 = vor.u32 %v2471, %v2474
      %v2476 = vrot.slane %v2475, 4
      %v2478 = vshll.u32 %v421, 16
      %v2480 = vrot.slane %v2478, 5
      %v2481 = vsel %vm459, %v2476, %v2480
      %v2482 = vshrl.u32 %v421, 16
      %v2484 = vrot.slane %v2482, 4
      %v2485 = vor.u32 %v2484, %v2480
      %v2486 = vrot.slane %v2485, 4
      %v2488 = vshll.u32 %v422, 16
      %v2490 = vrot.slane %v2488, 5
      %v2491 = vsel %vm459, %v2486, %v2490
      %v2493 = vshrl.u32 %v423, 16
      %v2495 = vrot.slane %v2493, 4
      %v2496 = vshll.u32 %v423, 16
      %v2498 = vrot.slane %v2496, 5
      %v2499 = vor.u32 %v2495, %v2498
      %v2500 = vrot.slane %v2499, 4
      %v2502 = vshll.u32 %v424, 16
      %v2504 = vrot.slane %v2502, 5
      %v2505 = vsel %vm459, %v2500, %v2504
      %v2506 = vshrl.u32 %v424, 16
      %v2508 = vrot.slane %v2506, 4
      %v2509 = vor.u32 %v2508, %v2504
      %v2510 = vrot.slane %v2509, 4
      %v2512 = vshll.u32 %v425, 16
      %v2514 = vrot.slane %v2512, 5
      %v2515 = vsel %vm459, %v2510, %v2514
      %v2517 = vshrl.u32 %v426, 16
      %v2519 = vrot.slane %v2517, 4
      %v2520 = vshll.u32 %v426, 16
      %v2522 = vrot.slane %v2520, 5
      %v2523 = vor.u32 %v2519, %v2522
      %v2524 = vrot.slane %v2523, 4
      %v2526 = vshll.u32 %v427, 16
      %v2528 = vrot.slane %v2526, 5
      %v2529 = vsel %vm459, %v2524, %v2528
      %v2530 = vshrl.u32 %v427, 16
      %v2532 = vrot.slane %v2530, 4
      %v2533 = vor.u32 %v2532, %v2528
      %v2534 = vrot.slane %v2533, 4
      %v2536 = vshll.u32 %v428, 16
      %v2538 = vrot.slane %v2536, 5
      %v2539 = vsel %vm459, %v2534, %v2538
      %v2541 = vshrl.u32 %v429, 16
      %v2543 = vrot.slane %v2541, 4
      %v2544 = vshll.u32 %v429, 16
      %v2546 = vrot.slane %v2544, 5
      %v2547 = vor.u32 %v2543, %v2546
      %v2548 = vrot.slane %v2547, 4
      %v2550 = vshll.u32 %v430, 16
      %v2552 = vrot.slane %v2550, 5
      %v2553 = vsel %vm459, %v2548, %v2552
      %v2554 = vshrl.u32 %v430, 16
      %v2556 = vrot.slane %v2554, 4
      %v2557 = vor.u32 %v2556, %v2552
      %v2558 = vrot.slane %v2557, 4
      %v2560 = vshll.u32 %v431, 16
      %v2562 = vrot.slane %v2560, 5
      %v2563 = vsel %vm459, %v2558, %v2562
      %v2565 = vshrl.u32 %v432, 16
      %v2567 = vrot.slane %v2565, 4
      %v2568 = vshll.u32 %v432, 16
      %v2570 = vrot.slane %v2568, 5
      %v2571 = vor.u32 %v2567, %v2570
      %v2572 = vrot.slane %v2571, 4
      %v2574 = vshll.u32 %v433, 16
      %v2576 = vrot.slane %v2574, 5
      %v2577 = vsel %vm459, %v2572, %v2576
      %v2578 = vshrl.u32 %v433, 16
      %v2580 = vrot.slane %v2578, 4
      %v2581 = vor.u32 %v2580, %v2576
      %v2582 = vrot.slane %v2581, 4
      %v2584 = vshll.u32 %v434, 16
      %v2586 = vrot.slane %v2584, 5
      %v2587 = vsel %vm459, %v2582, %v2586
      %v2589 = vshrl.u32 %v435, 16
      %v2591 = vrot.slane %v2589, 4
      %v2592 = vshll.u32 %v435, 16
      %v2594 = vrot.slane %v2592, 5
      %v2595 = vor.u32 %v2591, %v2594
      %v2596 = vrot.slane %v2595, 4
      %v2598 = vshll.u32 %v436, 16
      %v2600 = vrot.slane %v2598, 5
      %v2601 = vsel %vm459, %v2596, %v2600
      %v2602 = vshrl.u32 %v436, 16
      %v2604 = vrot.slane %v2602, 4
      %v2605 = vor.u32 %v2604, %v2600
      %v2606 = vrot.slane %v2605, 4
      %v2608 = vshll.u32 %v437, 16
      %v2610 = vrot.slane %v2608, 5
      %v2611 = vsel %vm459, %v2606, %v2610
      %v2613 = vshrl.u32 %v438, 16
      %v2615 = vrot.slane %v2613, 4
      %v2616 = vshll.u32 %v438, 16
      %v2618 = vrot.slane %v2616, 5
      %v2619 = vor.u32 %v2615, %v2618
      %v2620 = vrot.slane %v2619, 4
      %v2622 = vshll.u32 %v439, 16
      %v2624 = vrot.slane %v2622, 5
      %v2625 = vsel %vm459, %v2620, %v2624
      %v2626 = vshrl.u32 %v439, 16
      %v2628 = vrot.slane %v2626, 4
      %v2629 = vor.u32 %v2628, %v2624
      %v2630 = vrot.slane %v2629, 4
      %v2632 = vshll.u32 %v440, 16
      %v2634 = vrot.slane %v2632, 5
      %v2635 = vsel %vm459, %v2630, %v2634
      %s2636 = scalar_lea.vmem %s3, 448
      %v2637 = vld [vmem:[%s2636] sm:$0xf]
      %v2638 = vld [vmem:[%s2636 + $0x4] sm:$0xf]
      %v2639 = vld [vmem:[%s2636 + $0x8] sm:$0xf]
      %v2640 = vld [vmem:[%s2636 + $0xc] sm:$0xf]
      %v2641 = vld [vmem:[%s2636 + $0x10] sm:$0xf]
      %v2642 = vld [vmem:[%s2636 + $0x14] sm:$0xf]
      %v2643 = vld [vmem:[%s2636 + $0x18] sm:$0xf]
      %v2644 = vld [vmem:[%s2636 + $0x1c] sm:$0xf]
      %v2645 = vld [vmem:[%s2636 + $0x20] sm:$0xf]
      %v2646 = vld [vmem:[%s2636 + $0x24] sm:$0xf]
      %v2647 = vld [vmem:[%s2636 + $0x28] sm:$0xf]
      %v2648 = vld [vmem:[%s2636 + $0x2c] sm:$0xf]
      %v2649 = vld [vmem:[%s2636 + $0x30] sm:$0xf]
      %v2650 = vld [vmem:[%s2636 + $0x34] sm:$0xf]
      %v2651 = vld [vmem:[%s2636 + $0x38] sm:$0xf]
      %v2652 = vld [vmem:[%s2636 + $0x3c] sm:$0xf]
      %v2653 = vunpack.c.l.b16 %v2457
      %v2654 = vunpack.c.l.b16 %v2467
      %v2655 = vunpack.c.l.b16 %v2481
      %v2656 = vunpack.c.l.b16 %v2491
      %v2657 = vunpack.c.l.b16 %v2505
      %v2658 = vunpack.c.l.b16 %v2515
      %v2659 = vunpack.c.l.b16 %v2529
      %v2660 = vunpack.c.l.b16 %v2539
      %v2661 = vunpack.c.l.b16 %v2553
      %v2662 = vunpack.c.l.b16 %v2563
      %v2663 = vunpack.c.l.b16 %v2577
      %v2664 = vunpack.c.l.b16 %v2587
      %v2665 = vunpack.c.l.b16 %v2601
      %v2666 = vunpack.c.l.b16 %v2611
      %v2667 = vunpack.c.l.b16 %v2625
      %v2668 = vunpack.c.l.b16 %v2635
      %v2669 = vpack.c.b16 %v2654, %v2653
      %v2670 = vpack.c.b16 %v2656, %v2655
      %v2671 = vpack.c.b16 %v2658, %v2657
      %v2672 = vpack.c.b16 %v2660, %v2659
      %v2673 = vpack.c.b16 %v2662, %v2661
      %v2674 = vpack.c.b16 %v2664, %v2663
      %v2675 = vpack.c.b16 %v2666, %v2665
      %v2676 = vpack.c.b16 %v2668, %v2667
      %v2701 = vunpack.c.l.b16 %v2637
      %v2702 = vunpack.c.l.b16 %v2638
      %v2703 = vunpack.c.l.b16 %v2639
      %v2704 = vunpack.c.l.b16 %v2640
      %v2705 = vunpack.c.l.b16 %v2641
      %v2706 = vunpack.c.l.b16 %v2642
      %v2707 = vunpack.c.l.b16 %v2643
      %v2708 = vunpack.c.l.b16 %v2644
      %v2709 = vunpack.c.l.b16 %v2645
      %v2710 = vunpack.c.l.b16 %v2646
      %v2711 = vunpack.c.l.b16 %v2647
      %v2712 = vunpack.c.l.b16 %v2648
      %v2713 = vunpack.c.l.b16 %v2649
      %v2714 = vunpack.c.l.b16 %v2650
      %v2715 = vunpack.c.l.b16 %v2651
      %v2716 = vunpack.c.l.b16 %v2652
      %v2717 = vpack.c.b16 %v2702, %v2701
      %v2718 = vpack.c.b16 %v2704, %v2703
      %v2719 = vpack.c.b16 %v2706, %v2705
      %v2720 = vpack.c.b16 %v2708, %v2707
      %v2721 = vpack.c.b16 %v2710, %v2709
      %v2722 = vpack.c.b16 %v2712, %v2711
      %v2723 = vpack.c.b16 %v2714, %v2713
      %v2724 = vpack.c.b16 %v2716, %v2715
      %2733 = vmatprep.subr.bf16.mxu0 0
      %2734 = vmatpush1.bf16.msra.mxu0 %v2717
      %2735 = vmatprep.subr.bf16.mxu0 0
      %2736 = vmatpush1.bf16.msra.mxu0 %v2718
      %2737 = vmatprep.subr.bf16.mxu0 0
      %2738 = vmatpush1.bf16.msra.mxu0 %v2719
      %2739 = vmatprep.subr.bf16.mxu0 0
      %2740 = vmatpush1.bf16.msra.mxu0 %v2720
      %2741 = vmatprep.subr.bf16.mxu0 0
      %2742 = vmatpush1.bf16.msra.mxu0 %v2721
      %2743 = vmatprep.subr.bf16.mxu0 0
      %2744 = vmatpush1.bf16.msra.mxu0 %v2722
      %2745 = vmatprep.subr.bf16.mxu0 0
      %2746 = vmatpush1.bf16.msra.mxu0 %v2723
      %2747 = vmatprep.subr.bf16.mxu0 0
      %2748 = vmatpush1.bf16.msra.mxu0 %v2724
      %2749 = vmatprep.subr.bf16.mxu0 0
      %2750 = vmatpush1.bf16.msra.mxu0 0
      %2751 = vmatprep.subr.bf16.mxu0 0
      %2752 = vmatpush1.bf16.msra.mxu0 0
      %2753 = vmatprep.subr.bf16.mxu0 0
      %2754 = vmatpush1.bf16.msra.mxu0 0
      %2755 = vmatprep.subr.bf16.mxu0 0
      %2756 = vmatpush1.bf16.msra.mxu0 0
      %2757 = vmatprep.subr.bf16.mxu0 0
      %2758 = vmatpush1.bf16.msra.mxu0 0
      %2759 = vmatprep.subr.bf16.mxu0 0
      %2760 = vmatpush1.bf16.msra.mxu0 0
      %2761 = vmatprep.subr.bf16.mxu0 0
      %2762 = vmatpush1.bf16.msra.mxu0 0
      %2763 = vmatprep.subr.bf16.mxu0 0
      %2764 = vmatpush1.bf16.msra.mxu0 0
      %2765 = vmatprep.mubr.bf16.mxu0 0
      %2766 = vmatmul.mubr.bf16.gmra.mrb[0].mxu0 %v2669
      %v2767 = vpop.f32.mrb[0].mxu0
      %v2768 = vadd.f32 0.0, %v2767
      %v2769 = vpop.f32.mrb[0].mxu0
      %v2770 = vpop.f32.mrb[0].mxu0
      %v2771 = vadd.f32 0.0, %v2770
      %v2772 = vpop.f32.mrb[0].mxu0
      %2773 = vmatprep.mubr.bf16.mxu0 0
      %2774 = vmatmul.mubr.bf16.gmra.mrb[0].mxu0 %v2670
      %v2775 = vpop.f32.mrb[0].mxu0
      %v2776 = vadd.f32 0.0, %v2775
      %v2777 = vpop.f32.mrb[0].mxu0
      %v2778 = vpop.f32.mrb[0].mxu0
      %v2779 = vadd.f32 0.0, %v2778
      %v2780 = vpop.f32.mrb[0].mxu0
      %2781 = vmatprep.mubr.bf16.mxu0 0
      %2782 = vmatmul.mubr.bf16.gmra.mrb[0].mxu0 %v2671
      %v2783 = vpop.f32.mrb[0].mxu0
      %v2784 = vadd.f32 0.0, %v2783
      %v2785 = vpop.f32.mrb[0].mxu0
      %v2786 = vpop.f32.mrb[0].mxu0
      %v2787 = vadd.f32 0.0, %v2786
      %v2788 = vpop.f32.mrb[0].mxu0
      %2789 = vmatprep.mubr.bf16.mxu0 0
      %2790 = vmatmul.mubr.bf16.gmra.mrb[0].mxu0 %v2672
      %v2791 = vpop.f32.mrb[0].mxu0
      %v2792 = vadd.f32 0.0, %v2791
      %v2793 = vpop.f32.mrb[0].mxu0
      %v2794 = vpop.f32.mrb[0].mxu0
      %v2795 = vadd.f32 0.0, %v2794
      %v2796 = vpop.f32.mrb[0].mxu0
      %2797 = vmatprep.mubr.bf16.mxu0 0
      %2798 = vmatmul.mubr.bf16.gmra.mrb[0].mxu0 %v2673
      %v2799 = vpop.f32.mrb[0].mxu0
      %v2800 = vadd.f32 0.0, %v2799
      %v2801 = vpop.f32.mrb[0].mxu0
      %v2802 = vpop.f32.mrb[0].mxu0
      %v2803 = vadd.f32 0.0, %v2802
      %v2804 = vpop.f32.mrb[0].mxu0
      %2805 = vmatprep.mubr.bf16.mxu0 0
      %2806 = vmatmul.mubr.bf16.gmra.mrb[0].mxu0 %v2674
      %v2807 = vpop.f32.mrb[0].mxu0
      %v2808 = vadd.f32 0.0, %v2807
      %v2809 = vpop.f32.mrb[0].mxu0
      %v2810 = vpop.f32.mrb[0].mxu0
      %v2811 = vadd.f32 0.0, %v2810
      %v2812 = vpop.f32.mrb[0].mxu0
      %2813 = vmatprep.mubr.bf16.mxu0 0
      %2814 = vmatmul.mubr.bf16.gmra.mrb[0].mxu0 %v2675
      %v2815 = vpop.f32.mrb[0].mxu0
      %v2816 = vadd.f32 0.0, %v2815
      %v2817 = vpop.f32.mrb[0].mxu0
      %v2818 = vpop.f32.mrb[0].mxu0
      %v2819 = vadd.f32 0.0, %v2818
      %v2820 = vpop.f32.mrb[0].mxu0
      %2821 = vmatprep.mubr.bf16.mxu0 0
      %2822 = vmatmul.mubr.bf16.gmra.mrb[0].mxu0 %v2676
      %v2823 = vpop.f32.mrb[0].mxu0
      %v2824 = vadd.f32 0.0, %v2823
      %v2825 = vpop.f32.mrb[0].mxu0
      %v2826 = vpop.f32.mrb[0].mxu0
      %v2827 = vadd.f32 0.0, %v2826
      %v2828 = vpop.f32.mrb[0].mxu0
      %2829 = vdwg.mxu0
      %v2830 = vadd.f32 %v2428, %v2768
      %v2831 = vadd.f32 %v2429, %v2771
      %v2832 = vadd.f32 %v2430, %v2776
      %v2833 = vadd.f32 %v2431, %v2779
      %v2834 = vadd.f32 %v2432, %v2784
      %v2835 = vadd.f32 %v2433, %v2787
      %v2836 = vadd.f32 %v2434, %v2792
      %v2837 = vadd.f32 %v2435, %v2795
      %v2838 = vadd.f32 %v2436, %v2800
      %v2839 = vadd.f32 %v2437, %v2803
      %v2840 = vadd.f32 %v2438, %v2808
      %v2841 = vadd.f32 %v2439, %v2811
      %v2842 = vadd.f32 %v2440, %v2816
      %v2843 = vadd.f32 %v2441, %v2819
      %v2844 = vadd.f32 %v2442, %v2824
      %v2845 = vadd.f32 %v2443, %v2827
      %v2854 = vrot.slane %v417, 5
      %v2855 = vrot.slane %v2854, 4
      %v2856 = vrot.slane %v418, 5
      %v2857 = vsel %vm1049, %v2855, %v2856
      %v2858 = vrot.slane %v2856, 4
      %v2859 = vrot.slane %v419, 5
      %v2860 = vsel %vm1049, %v2858, %v2859
      %v2861 = vrot.slane %v420, 5
      %v2862 = vrot.slane %v2861, 4
      %v2863 = vrot.slane %v421, 5
      %v2864 = vsel %vm1049, %v2862, %v2863
      %v2865 = vrot.slane %v2863, 4
      %v2866 = vrot.slane %v422, 5
      %v2867 = vsel %vm1049, %v2865, %v2866
      %v2868 = vrot.slane %v423, 5
      %v2869 = vrot.slane %v2868, 4
      %v2870 = vrot.slane %v424, 5
      %v2871 = vsel %vm1049, %v2869, %v2870
      %v2872 = vrot.slane %v2870, 4
      %v2873 = vrot.slane %v425, 5
      %v2874 = vsel %vm1049, %v2872, %v2873
      %v2875 = vrot.slane %v426, 5
      %v2876 = vrot.slane %v2875, 4
      %v2877 = vrot.slane %v427, 5
      %v2878 = vsel %vm1049, %v2876, %v2877
      %v2879 = vrot.slane %v2877, 4
      %v2880 = vrot.slane %v428, 5
      %v2881 = vsel %vm1049, %v2879, %v2880
      %v2882 = vrot.slane %v429, 5
      %v2883 = vrot.slane %v2882, 4
      %v2884 = vrot.slane %v430, 5
      %v2885 = vsel %vm1049, %v2883, %v2884
      %v2886 = vrot.slane %v2884, 4
      %v2887 = vrot.slane %v431, 5
      %v2888 = vsel %vm1049, %v2886, %v2887
      %v2889 = vrot.slane %v432, 5
      %v2890 = vrot.slane %v2889, 4
      %v2891 = vrot.slane %v433, 5
      %v2892 = vsel %vm1049, %v2890, %v2891
      %v2893 = vrot.slane %v2891, 4
      %v2894 = vrot.slane %v434, 5
      %v2895 = vsel %vm1049, %v2893, %v2894
      %v2896 = vrot.slane %v435, 5
      %v2897 = vrot.slane %v2896, 4
      %v2898 = vrot.slane %v436, 5
      %v2899 = vsel %vm1049, %v2897, %v2898
      %v2900 = vrot.slane %v2898, 4
      %v2901 = vrot.slane %v437, 5
      %v2902 = vsel %vm1049, %v2900, %v2901
      %v2903 = vrot.slane %v438, 5
      %v2904 = vrot.slane %v2903, 4
      %v2905 = vrot.slane %v439, 5
      %v2906 = vsel %vm1049, %v2904, %v2905
      %v2907 = vrot.slane %v2905, 4
      %v2908 = vrot.slane %v440, 5
      %v2909 = vsel %vm1049, %v2907, %v2908
      %s2910 = scalar_lea.vmem %s3, 512
      %v2911 = vld [vmem:[%s2910] sm:$0xf]
      %v2912 = vld [vmem:[%s2910 + $0x4] sm:$0xf]
      %v2913 = vld [vmem:[%s2910 + $0x8] sm:$0xf]
      %v2914 = vld [vmem:[%s2910 + $0xc] sm:$0xf]
      %v2915 = vld [vmem:[%s2910 + $0x10] sm:$0xf]
      %v2916 = vld [vmem:[%s2910 + $0x14] sm:$0xf]
      %v2917 = vld [vmem:[%s2910 + $0x18] sm:$0xf]
      %v2918 = vld [vmem:[%s2910 + $0x1c] sm:$0xf]
      %v2919 = vld [vmem:[%s2910 + $0x20] sm:$0xf]
      %v2920 = vld [vmem:[%s2910 + $0x24] sm:$0xf]
      %v2921 = vld [vmem:[%s2910 + $0x28] sm:$0xf]
      %v2922 = vld [vmem:[%s2910 + $0x2c] sm:$0xf]
      %v2923 = vld [vmem:[%s2910 + $0x30] sm:$0xf]
      %v2924 = vld [vmem:[%s2910 + $0x34] sm:$0xf]
      %v2925 = vld [vmem:[%s2910 + $0x38] sm:$0xf]
      %v2926 = vld [vmem:[%s2910 + $0x3c] sm:$0xf]
      %v2927 = vunpack.c.l.b16 %v2857
      %v2928 = vunpack.c.l.b16 %v2860
      %v2929 = vunpack.c.l.b16 %v2864
      %v2930 = vunpack.c.l.b16 %v2867
      %v2931 = vunpack.c.l.b16 %v2871
      %v2932 = vunpack.c.l.b16 %v2874
      %v2933 = vunpack.c.l.b16 %v2878
      %v2934 = vunpack.c.l.b16 %v2881
      %v2935 = vunpack.c.l.b16 %v2885
      %v2936 = vunpack.c.l.b16 %v2888
      %v2937 = vunpack.c.l.b16 %v2892
      %v2938 = vunpack.c.l.b16 %v2895
      %v2939 = vunpack.c.l.b16 %v2899
      %v2940 = vunpack.c.l.b16 %v2902
      %v2941 = vunpack.c.l.b16 %v2906
      %v2942 = vunpack.c.l.b16 %v2909
      %v2943 = vpack.c.b16 %v2928, %v2927
      %v2944 = vpack.c.b16 %v2930, %v2929
      %v2945 = vpack.c.b16 %v2932, %v2931
      %v2946 = vpack.c.b16 %v2934, %v2933
      %v2947 = vpack.c.b16 %v2936, %v2935
      %v2948 = vpack.c.b16 %v2938, %v2937
      %v2949 = vpack.c.b16 %v2940, %v2939
      %v2950 = vpack.c.b16 %v2942, %v2941
      %v2975 = vunpack.c.l.b16 %v2911
      %v2976 = vunpack.c.l.b16 %v2912
      %v2977 = vunpack.c.l.b16 %v2913
      %v2978 = vunpack.c.l.b16 %v2914
      %v2979 = vunpack.c.l.b16 %v2915
      %v2980 = vunpack.c.l.b16 %v2916
      %v2981 = vunpack.c.l.b16 %v2917
      %v2982 = vunpack.c.l.b16 %v2918
      %v2983 = vunpack.c.l.b16 %v2919
      %v2984 = vunpack.c.l.b16 %v2920
      %v2985 = vunpack.c.l.b16 %v2921
      %v2986 = vunpack.c.l.b16 %v2922
      %v2987 = vunpack.c.l.b16 %v2923
      %v2988 = vunpack.c.l.b16 %v2924
      %v2989 = vunpack.c.l.b16 %v2925
      %v2990 = vunpack.c.l.b16 %v2926
      %v2991 = vpack.c.b16 %v2976, %v2975
      %v2992 = vpack.c.b16 %v2978, %v2977
      %v2993 = vpack.c.b16 %v2980, %v2979
      %v2994 = vpack.c.b16 %v2982, %v2981
      %v2995 = vpack.c.b16 %v2984, %v2983
      %v2996 = vpack.c.b16 %v2986, %v2985
      %v2997 = vpack.c.b16 %v2988, %v2987
      %v2998 = vpack.c.b16 %v2990, %v2989
      %3007 = vmatprep.subr.bf16.mxu0 0
      %3008 = vmatpush1.bf16.msra.mxu0 %v2991
      %3009 = vmatprep.subr.bf16.mxu0 0
      %3010 = vmatpush1.bf16.msra.mxu0 %v2992
      %3011 = vmatprep.subr.bf16.mxu0 0
      %3012 = vmatpush1.bf16.msra.mxu0 %v2993
      %3013 = vmatprep.subr.bf16.mxu0 0
      %3014 = vmatpush1.bf16.msra.mxu0 %v2994
      %3015 = vmatprep.subr.bf16.mxu0 0
      %3016 = vmatpush1.bf16.msra.mxu0 %v2995
      %3017 = vmatprep.subr.bf16.mxu0 0
      %3018 = vmatpush1.bf16.msra.mxu0 %v2996
      %3019 = vmatprep.subr.bf16.mxu0 0
      %3020 = vmatpush1.bf16.msra.mxu0 %v2997
      %3021 = vmatprep.subr.bf16.mxu0 0
      %3022 = vmatpush1.bf16.msra.mxu0 %v2998
      %3023 = vmatprep.subr.bf16.mxu0 0
      %3024 = vmatpush1.bf16.msra.mxu0 0
      %3025 = vmatprep.subr.bf16.mxu0 0
      %3026 = vmatpush1.bf16.msra.mxu0 0
      %3027 = vmatprep.subr.bf16.mxu0 0
      %3028 = vmatpush1.bf16.msra.mxu0 0
      %3029 = vmatprep.subr.bf16.mxu0 0
      %3030 = vmatpush1.bf16.msra.mxu0 0
      %3031 = vmatprep.subr.bf16.mxu0 0
      %3032 = vmatpush1.bf16.msra.mxu0 0
      %3033 = vmatprep.subr.bf16.mxu0 0
      %3034 = vmatpush1.bf16.msra.mxu0 0
      %3035 = vmatprep.subr.bf16.mxu0 0
      %3036 = vmatpush1.bf16.msra.mxu0 0
      %3037 = vmatprep.subr.bf16.mxu0 0
      %3038 = vmatpush1.bf16.msra.mxu0 0
      %3039 = vmatprep.mubr.bf16.mxu0 0
      %3040 = vmatmul.mubr.bf16.gmra.mrb[0].mxu0 %v2943
      %v3041 = vpop.f32.mrb[0].mxu0
      %v3042 = vadd.f32 0.0, %v3041
      %v3043 = vpop.f32.mrb[0].mxu0
      %v3044 = vpop.f32.mrb[0].mxu0
      %v3045 = vadd.f32 0.0, %v3044
      %v3046 = vpop.f32.mrb[0].mxu0
      %3047 = vmatprep.mubr.bf16.mxu0 0
      %3048 = vmatmul.mubr.bf16.gmra.mrb[0].mxu0 %v2944
      %v3049 = vpop.f32.mrb[0].mxu0
      %v3050 = vadd.f32 0.0, %v3049
      %v3051 = vpop.f32.mrb[0].mxu0
      %v3052 = vpop.f32.mrb[0].mxu0
      %v3053 = vadd.f32 0.0, %v3052
      %v3054 = vpop.f32.mrb[0].mxu0
      %3055 = vmatprep.mubr.bf16.mxu0 0
      %3056 = vmatmul.mubr.bf16.gmra.mrb[0].mxu0 %v2945
      %v3057 = vpop.f32.mrb[0].mxu0
      %v3058 = vadd.f32 0.0, %v3057
      %v3059 = vpop.f32.mrb[0].mxu0
      %v3060 = vpop.f32.mrb[0].mxu0
      %v3061 = vadd.f32 0.0, %v3060
      %v3062 = vpop.f32.mrb[0].mxu0
      %3063 = vmatprep.mubr.bf16.mxu0 0
      %3064 = vmatmul.mubr.bf16.gmra.mrb[0].mxu0 %v2946
      %v3065 = vpop.f32.mrb[0].mxu0
      %v3066 = vadd.f32 0.0, %v3065
      %v3067 = vpop.f32.mrb[0].mxu0
      %v3068 = vpop.f32.mrb[0].mxu0
      %v3069 = vadd.f32 0.0, %v3068
      %v3070 = vpop.f32.mrb[0].mxu0
      %3071 = vmatprep.mubr.bf16.mxu0 0
      %3072 = vmatmul.mubr.bf16.gmra.mrb[0].mxu0 %v2947
      %v3073 = vpop.f32.mrb[0].mxu0
      %v3074 = vadd.f32 0.0, %v3073
      %v3075 = vpop.f32.mrb[0].mxu0
      %v3076 = vpop.f32.mrb[0].mxu0
      %v3077 = vadd.f32 0.0, %v3076
      %v3078 = vpop.f32.mrb[0].mxu0
      %3079 = vmatprep.mubr.bf16.mxu0 0
      %3080 = vmatmul.mubr.bf16.gmra.mrb[0].mxu0 %v2948
      %v3081 = vpop.f32.mrb[0].mxu0
      %v3082 = vadd.f32 0.0, %v3081
      %v3083 = vpop.f32.mrb[0].mxu0
      %v3084 = vpop.f32.mrb[0].mxu0
      %v3085 = vadd.f32 0.0, %v3084
      %v3086 = vpop.f32.mrb[0].mxu0
      %3087 = vmatprep.mubr.bf16.mxu0 0
      %3088 = vmatmul.mubr.bf16.gmra.mrb[0].mxu0 %v2949
      %v3089 = vpop.f32.mrb[0].mxu0
      %v3090 = vadd.f32 0.0, %v3089
      %v3091 = vpop.f32.mrb[0].mxu0
      %v3092 = vpop.f32.mrb[0].mxu0
      %v3093 = vadd.f32 0.0, %v3092
      %v3094 = vpop.f32.mrb[0].mxu0
      %3095 = vmatprep.mubr.bf16.mxu0 0
      %3096 = vmatmul.mubr.bf16.gmra.mrb[0].mxu0 %v2950
      %v3097 = vpop.f32.mrb[0].mxu0
      %v3098 = vadd.f32 0.0, %v3097
      %v3099 = vpop.f32.mrb[0].mxu0
      %v3100 = vpop.f32.mrb[0].mxu0
      %v3101 = vadd.f32 0.0, %v3100
      %v3102 = vpop.f32.mrb[0].mxu0
      %3103 = vdwg.mxu0
      %v3104 = vadd.f32 %v2830, %v3042
      %v3105 = vadd.f32 %v2831, %v3045
      %v3106 = vadd.f32 %v2832, %v3050
      %v3107 = vadd.f32 %v2833, %v3053
      %v3108 = vadd.f32 %v2834, %v3058
      %v3109 = vadd.f32 %v2835, %v3061
      %v3110 = vadd.f32 %v2836, %v3066
      %v3111 = vadd.f32 %v2837, %v3069
      %v3112 = vadd.f32 %v2838, %v3074
      %v3113 = vadd.f32 %v2839, %v3077
      %v3114 = vadd.f32 %v2840, %v3082
      %v3115 = vadd.f32 %v2841, %v3085
      %v3116 = vadd.f32 %v2842, %v3090
      %v3117 = vadd.f32 %v2843, %v3093
      %v3118 = vadd.f32 %v2844, %v3098
      %v3119 = vadd.f32 %v2845, %v3101
      %3120 = vst [vmem:[%s358] sm:$0xff] %v3104
      %3121 = vst [vmem:[%s358 + $0x8] sm:$0xff] %v3105
      %3122 = vst [vmem:[%s358 + $0x10] sm:$0xff] %v3106
      %3123 = vst [vmem:[%s358 + $0x18] sm:$0xff] %v3107
      %3124 = vst [vmem:[%s358 + $0x20] sm:$0xff] %v3108
      %3125 = vst [vmem:[%s358 + $0x28] sm:$0xff] %v3109
      %3126 = vst [vmem:[%s358 + $0x30] sm:$0xff] %v3110
      %3127 = vst [vmem:[%s358 + $0x38] sm:$0xff] %v3111
      %3128 = vst [vmem:[%s358 + $0x40] sm:$0xff] %v3112
      %3129 = vst [vmem:[%s358 + $0x48] sm:$0xff] %v3113
      %3130 = vst [vmem:[%s358 + $0x50] sm:$0xff] %v3114
      %3131 = vst [vmem:[%s358 + $0x58] sm:$0xff] %v3115
      %3132 = vst [vmem:[%s358 + $0x60] sm:$0xff] %v3116
      %3133 = vst [vmem:[%s358 + $0x68] sm:$0xff] %v3117
      %3134 = vst [vmem:[%s358 + $0x70] sm:$0xff] %v3118
      %3135 = vst [vmem:[%s358 + $0x78] sm:$0xff] %v3119
      %v3136 = vadd.f32 %v3104, %v3105
      %v3137 = vadd.f32 %v3136, %v3106
      %v3138 = vadd.f32 %v3137, %v3107
      %v3139 = vadd.f32 %v3138, %v3108
      %v3140 = vadd.f32 %v3139, %v3109
      %v3141 = vadd.f32 %v3140, %v3110
      %v3142 = vadd.f32 %v3141, %v3111
      %v3143 = vadd.f32 %v3142, %v3112
      %v3144 = vadd.f32 %v3143, %v3113
      %v3145 = vadd.f32 %v3144, %v3114
      %v3146 = vadd.f32 %v3145, %v3115
      %v3147 = vadd.f32 %v3146, %v3116
      %v3148 = vadd.f32 %v3147, %v3117
      %v3149 = vadd.f32 %v3148, %v3118
      %v3150 = vadd.f32 %v3149, %v3119
      %v3151 = vrot.slane %v3150, 4
      %v3152 = vadd.f32 %v3150, %v3151
      %v3153 = vrot.slane %v3152, 2
      %v3154 = vadd.f32 %v3152, %v3153
      %v3155 = vrot.slane %v3154, 1
      %v3156 = vadd.f32 %v3154, %v3155
      %3157 = vst [vmem:[%s367] sm:$0x1] %v3156
      %v3158 = vmul.f32 %v3104, %v3104
      %v3159 = vmul.f32 %v3105, %v3105
      %v3160 = vmul.f32 %v3106, %v3106
      %v3161 = vmul.f32 %v3107, %v3107
      %v3162 = vmul.f32 %v3108, %v3108
      %v3163 = vmul.f32 %v3109, %v3109
      %v3164 = vmul.f32 %v3110, %v3110
      %v3165 = vmul.f32 %v3111, %v3111
      %v3166 = vmul.f32 %v3112, %v3112
      %v3167 = vmul.f32 %v3113, %v3113
      %v3168 = vmul.f32 %v3114, %v3114
      %v3169 = vmul.f32 %v3115, %v3115
      %v3170 = vmul.f32 %v3116, %v3116
      %v3171 = vmul.f32 %v3117, %v3117
      %v3172 = vmul.f32 %v3118, %v3118
      %v3173 = vmul.f32 %v3119, %v3119
      %v3174 = vadd.f32 %v3158, %v3159
      %v3175 = vadd.f32 %v3174, %v3160
      %v3176 = vadd.f32 %v3175, %v3161
      %v3177 = vadd.f32 %v3176, %v3162
      %v3178 = vadd.f32 %v3177, %v3163
      %v3179 = vadd.f32 %v3178, %v3164
      %v3180 = vadd.f32 %v3179, %v3165
      %v3181 = vadd.f32 %v3180, %v3166
      %v3182 = vadd.f32 %v3181, %v3167
      %v3183 = vadd.f32 %v3182, %v3168
      %v3184 = vadd.f32 %v3183, %v3169
      %v3185 = vadd.f32 %v3184, %v3170
      %v3186 = vadd.f32 %v3185, %v3171
      %v3187 = vadd.f32 %v3186, %v3172
      %v3188 = vadd.f32 %v3187, %v3173
      %v3189 = vrot.slane %v3188, 4
      %v3190 = vadd.f32 %v3188, %v3189
      %v3191 = vrot.slane %v3190, 2
      %v3192 = vadd.f32 %v3190, %v3191
      %v3193 = vrot.slane %v3192, 1
      %v3194 = vadd.f32 %v3192, %v3193
      %3195 = vst [vmem:[%s367 + $0x1] sm:$0x1] %v3194
      %s3196 = smul.u32 8, %s22
      %p3197 = scmp.lt.s32.totalorder %s21, 1
      %s3198 = scalar_select %p3197, %s21, 1
      %p3199 = scmp.lt.s32.totalorder %s3196, 15
      %s3200 = scalar_select %p3199, %s3196, 15
      %s3201 = smul.addr %s3200, 2
      %s3202 = smul.addr %s3198, 32
      %s3203 = sadd.s32 %s3201, %s3202
      %s3204 = smul.addr %s3203, 8
      %s3205 = scalar_lea.vmem %s4, %s3204
      %p3206 = scmp.lt.s32.totalorder %s21, 1
      %s3207 = scalar_select %p3206, %s21, 1
      %p3208 = scmp.lt.s32.totalorder %s22, 1
      %s3209 = scalar_select %p3208, %s22, 1
      %s3210 = smul.addr %s3207, 2
      %s3211 = sadd.s32 %s3209, %s3210
      %s3212 = smul.addr %s3211, 2
      %s3213 = scalar_lea.vmem %s5, %s3212
      // Predicated region
      $region37: #{contracting_block_forward.3} parent=35 // pred_check
        %p3214 = pneg %p154
      $region38: #{contracting_block_forward.3} parent=35 // pred_check_branch
        %3216 = sbr.rel (%p3214) target = $region40
      $region39: #{contracting_block_forward.3} parent=35 // pred_region
        %s3217 = smul.u32 8, %s22
      $region40: #{contracting_block_forward.3} parent=35 // pred_fallthru
        _
      // Predicated region
      $region41: #{contracting_block_forward.3} parent=35 // pred_check
        %p3218 = pneg %p182
      $region42: #{contracting_block_forward.3} parent=35 // pred_check_branch
        %3220 = sbr.rel (%p3218) target = $region44
      $region43: #{contracting_block_forward.3} parent=35 // pred_region
        _
      $region44: #{contracting_block_forward.3} parent=35 // pred_fallthru
        _
    $region36: #{contracting_block_forward.3} parent=5 // pred_fallthru
      _
    %p3221 = scmp.le.s32.totalorder 2, %s12
    // Predicated region
    $region45: #{contracting_block_forward.3} parent=5 // pred_check
      %p3222 = pneg %p3221
    $region46: #{contracting_block_forward.3} parent=5 // pred_check_branch
      %3224 = sbr.rel (%p3222) target = $region48
    $region47: #{contracting_block_forward.3} parent=5 // pred_region
      %s3225 = ssub.s32 %s12, 2
      // Predicated region
      $region49: #{contracting_block_forward.3} parent=47 // pred_check
        %p3226 = pneg %p160
      $region50: #{contracting_block_forward.3} parent=47 // pred_check_branch
        %3228 = sbr.rel (%p3226) target = $region52
      $region51: #{contracting_block_forward.3} parent=47 // pred_region
        %s3229 = smul.u32 8, %s24
        %p3230 = scmp.lt.s32.totalorder %s23, 1
        %s3231 = scalar_select %p3230, %s23, 1
        %p3232 = scmp.lt.s32.totalorder %s3229, 15
        %s3233 = scalar_select %p3232, %s3229, 15
        %s3234 = smul.addr %s3233, 2
        %s3235 = smul.addr %s3231, 32
        %s3236 = sadd.s32 %s3234, %s3235
        %s3237 = smul.addr %s3236, 8
        %s3238 = scalar_lea.vmem %s4, %s3237
      $region52: #{contracting_block_forward.3} parent=47 // pred_fallthru
        _
      // Predicated region
      $region53: #{contracting_block_forward.3} parent=47 // pred_check
        %p3239 = pneg %p188
      $region54: #{contracting_block_forward.3} parent=47 // pred_check_branch
        %3241 = sbr.rel (%p3239) target = $region56
      $region55: #{contracting_block_forward.3} parent=47 // pred_region
        %p3242 = scmp.lt.s32.totalorder %s23, 1
        %s3243 = scalar_select %p3242, %s23, 1
        %p3244 = scmp.lt.s32.totalorder %s24, 1
        %s3245 = scalar_select %p3244, %s24, 1
        %s3246 = smul.addr %s3243, 2
        %s3247 = sadd.s32 %s3245, %s3246
        %s3248 = smul.addr %s3247, 2
        %s3249 = scalar_lea.vmem %s5, %s3248
      $region56: #{contracting_block_forward.3} parent=47 // pred_fallthru
        _
    $region48: #{contracting_block_forward.3} parent=5 // pred_fallthru
      _
  $region6: #{contracting_block_forward.3} parent=0 // loop_footer
    %s16 = sadd.s32 1, %s12
  $region7: #{contracting_block_forward.3} parent=0 // loop_footer_branch
    %11 = sbr.rel target = $region3
  $region8: #{contracting_block_forward.3} parent=0 // loop_exit
    _

</llo_original>
